<compile_context>
chip_gen: v6e
topology: v6e:2x2x1
jax: 0.10.0
libtpu: 0.0.40
codegen_flags: <defaults>
</compile_context>

<pallas_src>
import functools
import math

import jax
import jax.numpy as jnp
from jax import lax
from jax.experimental import pallas as pl
from jax.experimental.pallas import tpu as pltpu


def _gcn_ffn_kernel(x_ref, mask_ref, adjpat_ref, wt_ref, o_ref, y_ref, *, tc):
    # x_ref:      (1, N, TBT, F_in)   one batch element, TBT timesteps (compute dtype)
    # mask_ref:   (N*TC, N*TC) f32    0 on same-timestep pairs, -1e30 elsewhere
    # adjpat_ref: (N*TC, N*TC) f32    adj[n1, n2] on same-timestep pairs, 0 elsewhere
    # wt_ref:     (F_in, F_out)       Theta.weight.T / sqrt(F_in) (compute dtype)
    # o_ref:      (1, N, TBT, F_out)  output (compute dtype)
    # y_ref:      (N, TBT, F_in)      VMEM scratch: aggregated rows (compute dtype)
    n_v = x_ref.shape[1]
    tbt = x_ref.shape[2]
    f_in = x_ref.shape[3]
    f_out = o_ref.shape[3]
    cr = n_v * tc                      # rows per chunk (target: 128)
    n_chunks = tbt // tc
    inv_sqrt_f = 1.0 / math.sqrt(f_in)

    def chunk_body(c, carry):
        t0 = pl.multiple_of(c * tc, tc)
        # (N, TC, F) -> (N*TC, F): row r = n*TC + t_local.  Layout-free merge
        # (TC is a multiple of the 8-row sublane tile, minor dim unchanged).
        xc = x_ref[0, :, pl.ds(t0, tc), :].reshape(cr, f_in)

        # Scores in f32.  Only same-timestep pairs are valid; off-pattern
        # entries get -1e30 so they underflow to exactly 0 in the softmax.
        # mask/adjpat are re-read from VMEM inside the loop (vld slack) rather
        # than hoisted, to keep vreg pressure in the loop body low.
        s = lax.dot_general(xc, xc, (((1,), (1,)), ((), ())),
                            preferred_element_type=jnp.float32)
        s = s * inv_sqrt_f + mask_ref[...]                        # (CR, CR) f32
        m = jnp.max(s, axis=-1, keepdims=True)    # per-row max kept (robust exp)
        e = jnp.exp(s - m)                        # off-pattern -> exactly 0.0

        # Softmax denominator on the MXU: all-ones RHS with the same (CR, F_in)
        # shape as the aggregation matmul, so every result column holds the
        # row-sum and the reciprocal applies elementwise to y afterwards
        # (no (CR,1) lane-broadcast, no 128-lane XLU reduction).
        denom = jnp.dot(e, jnp.ones((cr, f_in), jnp.float32),
                        preferred_element_type=jnp.float32)        # (CR, F_in)

        # adj .mul(softmax) without materializing the normalized attention:
        # the normalization is reassociated past the (linear) aggregation.
        w = (e * adjpat_ref[...]).astype(x_ref.dtype)              # bf16 operand
        y = jnp.dot(w, xc, preferred_element_type=jnp.float32)     # (CR, F_in)
        y = y * pl.reciprocal(denom, approx=True)

        y_ref[:, pl.ds(t0, tc), :] = (
            y.reshape(n_v, tc, f_in).astype(y_ref.dtype))
        return carry

    lax.fori_loop(0, n_chunks, chunk_body, 0)

    # Batched Theta projection + ReLU + single store per grid step.
    # TODO(synk): F_out = 32 still means a 32-of-128-lane (masked) store; a
    # lane-dense (T/4, 4*F) output presentation needs an in-kernel
    # sublane->lane relayout, so it is left to a measured follow-up.
    y_all = y_ref[...].reshape(n_v * tbt, f_in)
    z = jnp.dot(y_all, wt_ref[...], preferred_element_type=jnp.float32)
    z = jnp.maximum(z, 0.0)
    # TODO(synk): dropout (inside SAt and on the output) is identity (eval).
    o_ref[0, :, :, :] = z.reshape(n_v, tbt, f_out).astype(o_ref.dtype)


def _choose_tiles(B, N, T, chunk_rows, max_t_per_block, min_grid_steps):
    """Pick (tc, tbt): tc timesteps per CR=N*tc chunk, tbt timesteps per grid step."""
    # tc: largest divisor of T with N*tc <= chunk_rows, preferring multiples of
    # 8 so the (N, tc, F) -> (N*tc, F) merge is sublane-tile aligned.
    # TODO(synk): for awkward T (no multiple-of-8 divisor) pad T instead.
    tc_cap = max(1, min(chunk_rows // max(N, 1), T))
    divisors = [d for d in range(1, tc_cap + 1) if T % d == 0]
    mult8 = [d for d in divisors if d % 8 == 0]
    tc = max(mult8) if mult8 else max(divisors)
    # tbt: largest multiple of tc dividing T under the cap, while keeping the
    # grid (B * T//tbt) at >= min_grid_steps steps (feed both v7x TCs).
    cands = [m * tc for m in range(1, T // tc + 1)
             if T % (m * tc) == 0 and m * tc <= max_t_per_block]
    good = [c for c in cands if B * (T // c) >= min_grid_steps]
    tbt = max(good) if good else max(cands)
    return tc, tbt


def gcn_ffn(x, adj, theta_w, *, compute_dtype=jnp.bfloat16,
            max_timesteps_per_block=1024, chunk_rows=128, min_grid_steps=8):
    """
    x:       (B, N, T, F_in)
    adj:     (N, N)            sym-normalized adjacency
    theta_w: (F_out, F_in)     nn.Linear weight layout (no bias)
    returns: (B, N, T, F_out)  in compute_dtype
    """
    B, N, T, F_in = x.shape
    F_out = theta_w.shape[0]
    cdt = jnp.dtype(compute_dtype)

    # Keep CR = N*tc at ~128 on every generation (don't chase the 256-wide
    # v6e/v7x MXU: masked-dense waste grows O(CR^2) vs O(CR) useful work).
    tc, tbt = _choose_tiles(B, N, T, chunk_rows, max_timesteps_per_block,
                            min_grid_steps)
    cr = N * tc

    # Precomputed chunk-pattern matrices (chunk row r = n*TC + t_local), kept
    # in f32 so the exp-underflow zeroing and adj values stay exact:
    #   mask   : additive, 0 where timesteps match, -1e30 elsewhere (pre-softmax)
    #   adjpat : adj[n1, n2] where timesteps match, 0 elsewhere      (post-softmax)
    r = jnp.arange(cr)
    n_idx = r // tc
    t_idx = r % tc
    same_t = t_idx[:, None] == t_idx[None, :]
    mask = jnp.where(same_t, 0.0, -1e30).astype(jnp.float32)
    adjpat = jnp.where(same_t, adj[n_idx[:, None], n_idx[None, :]], 0.0)
    adjpat = adjpat.astype(jnp.float32)
    # Fold the post-softmax 1/sqrt(F_in) into the Theta weights (linear op).
    wt = (theta_w.T / math.sqrt(F_in)).astype(cdt)
    # bf16 activations halve the HBM read/write traffic and feed the MXU with
    # bf16 operands; all accumulations stay f32 inside the kernel.
    x = x.astype(cdt)

    kernel = functools.partial(_gcn_ffn_kernel, tc=tc)
    return pl.pallas_call(
        kernel,
        out_shape=jax.ShapeDtypeStruct((B, N, T, F_out), cdt),
        grid_spec=pltpu.PrefetchScalarGridSpec(
            num_scalar_prefetch=0,
            grid=(B, T // tbt),
            in_specs=[
                pl.BlockSpec((1, N, tbt, F_in), lambda b, t: (b, 0, t, 0)),
                pl.BlockSpec((cr, cr), lambda b, t: (0, 0)),
                pl.BlockSpec((cr, cr), lambda b, t: (0, 0)),
                pl.BlockSpec((F_in, F_out), lambda b, t: (0, 0)),
            ],
            out_specs=pl.BlockSpec((1, N, tbt, F_out),
                                   lambda b, t: (b, 0, t, 0)),
            scratch_shapes=[pltpu.VMEM((N, tbt, F_in), cdt)],
        ),
        # Both grid axes are independent -> megacore-shardable (v7x 2 TCs).
        compiler_params=pltpu.CompilerParams(
            dimension_semantics=("parallel", "parallel")),
    )(x, mask, adjpat, wt)


def gcn_ffn_ref(x, adj, theta_w):
    """Pure-JAX f32 reference mirroring the PyTorch forward (dropout = identity)."""
    B, N, T, F_in = x.shape
    xt = jnp.transpose(x, (0, 2, 1, 3))                       # (B, T, N, F)
    score = jnp.einsum("btnf,btmf->btnm", xt, xt) / math.sqrt(F_in)
    attn = jax.nn.softmax(score, axis=-1) / math.sqrt(F_in)
    y = jnp.einsum("btnm,btmf->btnf", adj[None, None] * attn, xt)
    z = jnp.einsum("btnf,of->btno", y, theta_w)
    z = jnp.maximum(z, 0.0)
    return jnp.transpose(z, (0, 2, 1, 3))                     # (B, N, T, F_out)


if __name__ == "__main__":
    B, N, T, D = 2, 8, 256, 32   # batch, vertices, timesteps, d_model

    key = jax.random.PRNGKey(0)
    kx, ka, kw = jax.random.split(key, 3)

    x = jax.random.normal(kx, (B, N, T, D), dtype=jnp.float32)

    # deterministic symmetric-normalized adjacency: D^{-1/2} (A + I) D^{-1/2}
    a_raw = (jax.random.uniform(ka, (N, N)) > 0.5).astype(jnp.float32)
    a_sym = jnp.clip(a_raw + a_raw.T, 0.0, 1.0) + jnp.eye(N, dtype=jnp.float32)
    deg_inv_sqrt = 1.0 / jnp.sqrt(jnp.sum(a_sym, axis=-1))
    adj = a_sym * deg_inv_sqrt[:, None] * deg_inv_sqrt[None, :]

    # Theta: nn.Linear(d_model, d_model, bias=False) weight, shape (out, in)
    theta_w = jax.random.normal(kw, (D, D), dtype=jnp.float32) / math.sqrt(D)

    ref = gcn_ffn_ref(x, adj, theta_w)

    # --- f32 path: tight structural check (only the approx EUP reciprocal
    #     separates it from the pure-f32 reference).  128-timestep cap /
    #     min_grid_steps=4 -> grid (2, 2) with an 8-iteration chunk loop.
    fn32 = jax.jit(functools.partial(gcn_ffn, compute_dtype=jnp.float32,
                                     max_timesteps_per_block=128,
                                     min_grid_steps=4))
    out32 = jax.block_until_ready(fn32(x, adj, theta_w))
    assert out32.shape == (B, N, T, D), out32.shape
    assert out32.dtype == jnp.float32
    err32 = float(jnp.max(jnp.abs(out32 - ref)))
    assert jnp.allclose(out32, ref, atol=5e-3, rtol=5e-3), err32

    # --- bf16 path (default): bf16 MXU operands + bf16 activation traffic.
    #     Defaults pick grid (2, 4) with a 4-iteration chunk loop.  Compare
    #     against the reference evaluated on bf16-rounded inputs so the
    #     residual is only the bf16 attention / projection operand rounding.
    fn16 = jax.jit(gcn_ffn)
    out16 = jax.block_until_ready(fn16(x, adj, theta_w))
    assert out16.shape == (B, N, T, D), out16.shape
    assert out16.dtype == jnp.bfloat16
    ref16 = gcn_ffn_ref(x.astype(jnp.bfloat16).astype(jnp.float32), adj, theta_w)
    err16 = float(jnp.max(jnp.abs(out16.astype(jnp.float32) - ref16)))
    assert jnp.allclose(out16.astype(jnp.float32), ref16,
                        atol=1e-1, rtol=5e-2), err16

    print("KERNEL_OK")
</pallas_src>

<mosaic_0001>
module attributes {stable_mosaic.version = 11 : i64} {
  func.func @_gcn_ffn_kernel(%arg0: i32, %arg1: i32, %arg2: memref<1x8x128x32xf32, #tpu.memory_space<vmem>>, %arg3: memref<128x128xf32, #tpu.memory_space<vmem>>, %arg4: memref<128x128xf32, #tpu.memory_space<vmem>>, %arg5: memref<32x32xf32, #tpu.memory_space<vmem>>, %arg6: memref<1x8x128x32xf32, #tpu.memory_space<vmem>>, %arg7: memref<8x128x32xf32, #tpu.memory_space<vmem>>) attributes {dimension_semantics = [#tpu.dimension_semantics<parallel>, #tpu.dimension_semantics<parallel>], iteration_bounds = array<i64: 2, 2>, scalar_prefetch = 0 : i64, scratch_operands = 1 : i64, tpu.core_type = #tpu.core_type<tc>, window_params = [{transform_indices = @transform_0, window_bounds = array<i64: 1, 8, 128, 32>}, {pipeline_mode = #tpu.pipeline_mode<synchronous>, transform_indices = @transform_1, window_bounds = array<i64: 128, 128>}, {pipeline_mode = #tpu.pipeline_mode<synchronous>, transform_indices = @transform_2, window_bounds = array<i64: 128, 128>}, {pipeline_mode = #tpu.pipeline_mode<synchronous>, transform_indices = @transform_3, window_bounds = array<i64: 32, 32>}, {transform_indices = @transform_4, window_bounds = array<i64: 1, 8, 128, 32>}]} {
    %c0_i32 = arith.constant 0 : i32
    %c8_i32 = arith.constant 8 : i32
    %0 = arith.addi %c0_i32, %c8_i32 : i32
    %c1_i32 = arith.constant 1 : i32
    scf.for %arg8 = %c0_i32 to %0 step %c1_i32  : i32 {
      %c16_i32 = arith.constant 16 : i32
      %11 = arith.muli %arg8, %c16_i32 : i32
      %12 = tpu.assume_multiple %11, 16 : i32
      %c0_10 = arith.constant 0 : index
      %c0_11 = arith.constant 0 : index
      %13 = arith.index_cast %12 : i32 to index
      %c0_12 = arith.constant 0 : index
      %14 = vector.load %arg2[%c0_10, %c0_11, %13, %c0_12] : memref<1x8x128x32xf32, #tpu.memory_space<vmem>>, vector<1x8x16x32xf32>
      %15 = vector.shape_cast %14 : vector<1x8x16x32xf32> to vector<8x16x32xf32>
      %16 = vector.shape_cast %15 : vector<8x16x32xf32> to vector<128x32xf32>
      %cst_13 = arith.constant dense<0.000000e+00> : vector<128x128xf32>
      %17 = tpu.matmul %16, %16, %cst_13 {dimension_numbers = #tpu.dot_dimension_numbers<[1], [1], [0], [0], [0, 0, 1, 0], [], []>} : vector<128x32xf32>, vector<128x32xf32>, vector<128x128xf32> -> vector<128x128xf32>
      %cst_14 = arith.constant 0.176776692 : f32
      %18 = vector.broadcast %cst_14 : f32 to vector<128x128xf32>
      %19 = arith.mulf %17, %18 : vector<128x128xf32>
      %c0_15 = arith.constant 0 : index
      %c0_16 = arith.constant 0 : index
      %20 = vector.load %arg3[%c0_15, %c0_16] : memref<128x128xf32, #tpu.memory_space<vmem>>, vector<128x128xf32>
      %21 = arith.addf %19, %20 : vector<128x128xf32>
      %cst_17 = arith.constant dense<0xFF800000> : vector<128xf32>
      %22 = vector.multi_reduction <maximumf>, %21, %cst_17 [1] : vector<128x128xf32> to vector<128xf32>
      %23 = vector.shape_cast %22 : vector<128xf32> to vector<128x1xf32>
      %24 = vector.broadcast %23 : vector<128x1xf32> to vector<128x128xf32>
      %25 = arith.subf %21, %24 : vector<128x128xf32>
      %26 = math.exp %25 : vector<128x128xf32>
      %cst_18 = arith.constant 1.000000e+00 : f32
      %27 = vector.broadcast %cst_18 : f32 to vector<128x32xf32>
      %cst_19 = arith.constant dense<0.000000e+00> : vector<128x32xf32>
      %28 = tpu.matmul %26, %27, %cst_19 {dimension_numbers = #tpu.dot_dimension_numbers<[1], [0], [0], [1], [0, 0, 1, 1], [], []>} : vector<128x128xf32>, vector<128x32xf32>, vector<128x32xf32> -> vector<128x32xf32>
      %c0_20 = arith.constant 0 : index
      %c0_21 = arith.constant 0 : index
      %29 = vector.load %arg4[%c0_20, %c0_21] : memref<128x128xf32, #tpu.memory_space<vmem>>, vector<128x128xf32>
      %30 = arith.mulf %26, %29 : vector<128x128xf32>
      %cst_22 = arith.constant dense<0.000000e+00> : vector<128x32xf32>
      %31 = tpu.matmul %30, %16, %cst_22 {dimension_numbers = #tpu.dot_dimension_numbers<[1], [0], [0], [1], [0, 0, 1, 1], [], []>} : vector<128x128xf32>, vector<128x32xf32>, vector<128x32xf32> -> vector<128x32xf32>
      %32 = tpu.reciprocal %28 {approx = true} : vector<128x32xf32> -> vector<128x32xf32>
      %33 = arith.mulf %31, %32 : vector<128x32xf32>
      %34 = vector.shape_cast %33 : vector<128x32xf32> to vector<8x16x32xf32>
      %c0_23 = arith.constant 0 : index
      %35 = arith.index_cast %12 : i32 to index
      %c0_24 = arith.constant 0 : index
      %36 = vector.load %arg7[%c0_23, %35, %c0_24] : memref<8x128x32xf32, #tpu.memory_space<vmem>>, vector<8x16x32xf32>
      tpu.vector_store %arg7[%c0_23, %35, %c0_24], %34 {strides = array<i32>} : memref<8x128x32xf32, #tpu.memory_space<vmem>>, vector<8x16x32xf32>,
    }
    %c8_i32_0 = arith.constant 8 : i32
    %c0 = arith.constant 0 : index
    %c0_1 = arith.constant 0 : index
    %c0_2 = arith.constant 0 : index
    %1 = vector.load %arg7[%c0, %c0_1, %c0_2] : memref<8x128x32xf32, #tpu.memory_space<vmem>>, vector<8x128x32xf32>
    %2 = vector.shape_cast %1 : vector<8x128x32xf32> to vector<1024x32xf32>
    %c0_3 = arith.constant 0 : index
    %c0_4 = arith.constant 0 : index
    %3 = vector.load %arg5[%c0_3, %c0_4] : memref<32x32xf32, #tpu.memory_space<vmem>>, vector<32x32xf32>
    %cst = arith.constant dense<0.000000e+00> : vector<1024x32xf32>
    %4 = tpu.matmul %2, %3, %cst {dimension_numbers = #tpu.dot_dimension_numbers<[1], [0], [0], [1], [0, 0, 1, 1], [], []>} : vector<1024x32xf32>, vector<32x32xf32>, vector<1024x32xf32> -> vector<1024x32xf32>
    %cst_5 = arith.constant 0.000000e+00 : f32
    %5 = vector.broadcast %cst_5 : f32 to vector<1024x32xf32>
    %6 = arith.maximumf %4, %5 : vector<1024x32xf32>
    %7 = vector.shape_cast %6 : vector<1024x32xf32> to vector<8x128x32xf32>
    %c0_6 = arith.constant 0 : index
    %c0_7 = arith.constant 0 : index
    %c0_8 = arith.constant 0 : index
    %c0_9 = arith.constant 0 : index
    %8 = vector.load %arg6[%c0_6, %c0_7, %c0_8, %c0_9] : memref<1x8x128x32xf32, #tpu.memory_space<vmem>>, vector<1x8x128x32xf32>
    %9 = vector.shape_cast %8 : vector<1x8x128x32xf32> to vector<8x128x32xf32>
    %10 = vector.shape_cast %7 : vector<8x128x32xf32> to vector<1x8x128x32xf32>
    tpu.vector_store %arg6[%c0_6, %c0_7, %c0_8, %c0_9], %10 {strides = array<i32>} : memref<1x8x128x32xf32, #tpu.memory_space<vmem>>, vector<1x8x128x32xf32>,
    return
  }
  func.func @transform_0(%arg0: i32, %arg1: i32) -> (i32, i32, i32, i32) {
    %c0_i32 = arith.constant 0 : i32
    %c0_i32_0 = arith.constant 0 : i32
    %c0_i32_1 = arith.constant 0 : i32
    return %arg0, %c0_i32, %arg1, %c0_i32_0 : i32, i32, i32, i32
  }
  func.func @transform_1(%arg0: i32, %arg1: i32) -> (i32, i32) {
    %c0_i32 = arith.constant 0 : i32
    %c0_i32_0 = arith.constant 0 : i32
    %c0_i32_1 = arith.constant 0 : i32
    return %c0_i32, %c0_i32_0 : i32, i32
  }
  func.func @transform_2(%arg0: i32, %arg1: i32) -> (i32, i32) {
    %c0_i32 = arith.constant 0 : i32
    %c0_i32_0 = arith.constant 0 : i32
    %c0_i32_1 = arith.constant 0 : i32
    return %c0_i32, %c0_i32_0 : i32, i32
  }
  func.func @transform_3(%arg0: i32, %arg1: i32) -> (i32, i32) {
    %c0_i32 = arith.constant 0 : i32
    %c0_i32_0 = arith.constant 0 : i32
    %c0_i32_1 = arith.constant 0 : i32
    return %c0_i32, %c0_i32_0 : i32, i32
  }
  func.func @transform_4(%arg0: i32, %arg1: i32) -> (i32, i32, i32, i32) {
    %c0_i32 = arith.constant 0 : i32
    %c0_i32_0 = arith.constant 0 : i32
    %c0_i32_1 = arith.constant 0 : i32
    return %arg0, %c0_i32, %arg1, %c0_i32_0 : i32, i32, i32, i32
  }
}

</mosaic_0001>

<llo_original>
// kernel: gcn_ffn.1
$region0: #{gcn_ffn.1}
  #allocation0 [shape = 'u32[]', space=smem, size = 0x4, offset = 0x4, fixed_abs, tag = 'smem constant byte address 0x4 - core index']
  #allocation1 [shape = 'u32[144,128]{1,0:T(1,128)}', space=vmem, size = 0x12000, scoped, tag = 'internal scratch']
  #allocation2 [shape = 'f32[8,128,32]{2,1,0:T(8,128)}', space=vmem, size = 0x80000, scoped, tag = 'scratch operand']
  %s0 = inlined_call_operand.vmem [shape: f32[2,8,256,32], index: 0, kind: input, shape index: {}]
  %s1 = inlined_call_operand.vmem [shape: f32[128,128], index: 1, kind: input, shape index: {}]
  %s2 = inlined_call_operand.vmem [shape: f32[128,128], index: 2, kind: input, shape index: {}]
  %s3 = inlined_call_operand.vmem [shape: f32[32,32], index: 3, kind: input, shape index: {}]
  %s4 = inlined_call_operand.vmem [shape: f32[2,8,256,32], index: 4, kind: output, shape index: {}]
  %s5 = sld [smem:[#allocation0]]
  $region128: #{gcn_ffn.1} parent=0
    _
  %s7 = ssub.s32 1, %s5
  %s8 = scalar_select 0, %s7, %s5
  $region1: #{gcn_ffn.1} parent=0
    #allocation3 [shape = 'u8[1048576]{0}', space=vmem, size = 0x100000, scoped, tag = 'input window, operand 0']
    #allocation4 [shape = 'u8[1048576]{0}', space=vmem, size = 0x100000, scoped, tag = 'output window, operand 0']
    loop: start=0, step=1, limit=6
    $region2: #{gcn_ffn.1} parent=1 // loop_pre_header
      _
    $region3: #{gcn_ffn.1} parent=1 // loop_header
      %s10 = sphi 0, %s14
      %p11 = scmp.ge.s32.totalorder %s10, 6
      %s17 = sphi 0, %s29
      %s18 = sphi 0, %s25
      %s19 = sphi 0, %s17
      %s20 = sphi 0, %s18
      %s21 = sphi 0, %s19
      %s22 = sphi 0, %s20
      %s34 = sphi 0, %s36
      %s37 = sphi 0, %s34
      %s38 = sphi 0, %s37
      %s54 = sphi 0, %s38
      %s58 = sphi 0, %s58
      %s60 = sphi 0, %s58
      %s61 = sphi 0, %s60
      %s75 = sphi 0, %s61
      %s79 = sphi 0, %s79
      %s81 = sphi 0, %s79
      %s82 = sphi 0, %s81
      %s96 = sphi 0, %s82
      %s100 = sphi 0, %s100
      %s102 = sphi 0, %s100
      %s103 = sphi 0, %s102
      %s117 = sphi 0, %s103
      %s125 = sphi 0, %s127
      %s128 = sphi 0, %s125
      %s129 = sphi 0, %s128
      %s145 = sphi 0, %s129
    $region4: #{gcn_ffn.1} parent=1 // loop_header_branch
      %13 = sbr.rel (%p11) target = $region8
    $region5: #{gcn_ffn.1} parent=1 // loop_body
      %s15 = ssub.s32 %s10, 1
      %s16 = ssub.s32 %s10, 2
      %s23 = sadd.s32 1, %s18
      %p24 = scmp.ge.s32.totalorder %s23, 2
      %s25 = scalar_select %p24, 0, %s23
      %s26 = sadd.s32 1, %s17
      %s27 = scalar_select %p24, %s26, %s17
      %p28 = scmp.ge.s32.totalorder %s27, 2
      %s29 = scalar_select %p28, 0, %s27
      %s30 = ssub.s32 %s17, %s29
      %s31 = ssub.s32 %s18, %s25
      %s32 = sor.u32 %s30, %s31
      %p33 = scmp.eq.s32.totalorder %s32, 0
      %s35 = sadd.s32 %s34, 1
      %s36 = scalar_select %p33, %s34, %s35
      %p39 = pneg %p33
      %p40 = scmp.eq.s32.totalorder %s10, 3
      %p41 = por %p39, %p40
      %p42 = scmp.ne.s32.totalorder %s34, %s37
      %p43 = scmp.eq.s32.totalorder %s10, 0
      %p44 = por %p42, %p43
      %p45 = scmp.ne.s32.totalorder %s34, %s37
      %p46 = scmp.eq.s32.totalorder %s15, 3
      %p47 = por %p45, %p46
      %p48 = scmp.ne.s32.totalorder %s37, %s38
      %p49 = scmp.eq.s32.totalorder %s15, 0
      %p50 = por %p48, %p49
      %p51 = scmp.ne.s32.totalorder %s37, %s38
      %p52 = scmp.eq.s32.totalorder %s16, 3
      %p53 = por %p51, %p52
      %p55 = scmp.ne.s32.totalorder %s38, %s54
      %p56 = scmp.eq.s32.totalorder %s16, 0
      %p57 = por %p55, %p56
      %s59 = sadd.s32 %s58, 1
      %p62 = scmp.eq.s32.totalorder %s10, 3
      %p63 = scmp.ne.s32.totalorder %s58, %s60
      %p64 = scmp.eq.s32.totalorder %s10, 0
      %p65 = por %p63, %p64
      %p66 = scmp.ne.s32.totalorder %s58, %s60
      %p67 = scmp.eq.s32.totalorder %s15, 3
      %p68 = por %p66, %p67
      %p69 = scmp.ne.s32.totalorder %s60, %s61
      %p70 = scmp.eq.s32.totalorder %s15, 0
      %p71 = por %p69, %p70
      %p72 = scmp.ne.s32.totalorder %s60, %s61
      %p73 = scmp.eq.s32.totalorder %s16, 3
      %p74 = por %p72, %p73
      %p76 = scmp.ne.s32.totalorder %s61, %s75
      %p77 = scmp.eq.s32.totalorder %s16, 0
      %p78 = por %p76, %p77
      %s80 = sadd.s32 %s79, 1
      %p83 = scmp.eq.s32.totalorder %s10, 3
      %p84 = scmp.ne.s32.totalorder %s79, %s81
      %p85 = scmp.eq.s32.totalorder %s10, 0
      %p86 = por %p84, %p85
      %p87 = scmp.ne.s32.totalorder %s79, %s81
      %p88 = scmp.eq.s32.totalorder %s15, 3
      %p89 = por %p87, %p88
      %p90 = scmp.ne.s32.totalorder %s81, %s82
      %p91 = scmp.eq.s32.totalorder %s15, 0
      %p92 = por %p90, %p91
      %p93 = scmp.ne.s32.totalorder %s81, %s82
      %p94 = scmp.eq.s32.totalorder %s16, 3
      %p95 = por %p93, %p94
      %p97 = scmp.ne.s32.totalorder %s82, %s96
      %p98 = scmp.eq.s32.totalorder %s16, 0
      %p99 = por %p97, %p98
      %s101 = sadd.s32 %s100, 1
      %p104 = scmp.eq.s32.totalorder %s10, 3
      %p105 = scmp.ne.s32.totalorder %s100, %s102
      %p106 = scmp.eq.s32.totalorder %s10, 0
      %p107 = por %p105, %p106
      %p108 = scmp.ne.s32.totalorder %s100, %s102
      %p109 = scmp.eq.s32.totalorder %s15, 3
      %p110 = por %p108, %p109
      %p111 = scmp.ne.s32.totalorder %s102, %s103
      %p112 = scmp.eq.s32.totalorder %s15, 0
      %p113 = por %p111, %p112
      %p114 = scmp.ne.s32.totalorder %s102, %s103
      %p115 = scmp.eq.s32.totalorder %s16, 3
      %p116 = por %p114, %p115
      %p118 = scmp.ne.s32.totalorder %s103, %s117
      %p119 = scmp.eq.s32.totalorder %s16, 0
      %p120 = por %p118, %p119
      %s121 = ssub.s32 %s17, %s29
      %s122 = ssub.s32 %s18, %s25
      %s123 = sor.u32 %s121, %s122
      %p124 = scmp.eq.s32.totalorder %s123, 0
      %s126 = sadd.s32 %s125, 1
      %s127 = scalar_select %p124, %s125, %s126
      %p130 = pneg %p124
      %p131 = scmp.eq.s32.totalorder %s10, 3
      %p132 = por %p130, %p131
      %p133 = scmp.ne.s32.totalorder %s125, %s128
      %p134 = scmp.eq.s32.totalorder %s10, 0
      %p135 = por %p133, %p134
      %p136 = scmp.ne.s32.totalorder %s125, %s128
      %p137 = scmp.eq.s32.totalorder %s15, 3
      %p138 = por %p136, %p137
      %p139 = scmp.ne.s32.totalorder %s128, %s129
      %p140 = scmp.eq.s32.totalorder %s15, 0
      %p141 = por %p139, %p140
      %p142 = scmp.ne.s32.totalorder %s128, %s129
      %p143 = scmp.eq.s32.totalorder %s16, 3
      %p144 = por %p142, %p143
      %p146 = scmp.ne.s32.totalorder %s129, %s145
      %p147 = scmp.eq.s32.totalorder %s16, 0
      %p148 = por %p146, %p147
      %p149 = scmp.le.s32.totalorder 1, %s10
      %p150 = scmp.lt.s32.totalorder %s10, 5
      %p151 = pnand %p149, %p150
      %p152 = pneg %p151
      // Predicated region
      $region9: #{gcn_ffn.1} parent=5 // pred_check
        _
      $region10: #{gcn_ffn.1} parent=5 // pred_check_branch
        %154 = sbr.rel (%p151) target = $region12
      $region11: #{gcn_ffn.1} parent=5 // pred_region
        %s155 = ssub.s32 %s10, 1
        // Predicated region
        $region13: #{gcn_ffn.1} parent=11 // pred_check
          %p156 = pneg %p71
        $region14: #{gcn_ffn.1} parent=11 // pred_check_branch
          %158 = sbr.rel (%p156) target = $region16
        $region15: #{gcn_ffn.1} parent=11 // pred_region
          _
        $region16: #{gcn_ffn.1} parent=11 // pred_fallthru
          _
        // Predicated region
        $region17: #{gcn_ffn.1} parent=11 // pred_check
          %p159 = pneg %p92
        $region18: #{gcn_ffn.1} parent=11 // pred_check_branch
          %161 = sbr.rel (%p159) target = $region20
        $region19: #{gcn_ffn.1} parent=11 // pred_region
          _
        $region20: #{gcn_ffn.1} parent=11 // pred_fallthru
          _
        // Predicated region
        $region21: #{gcn_ffn.1} parent=11 // pred_check
          %p162 = pneg %p113
        $region22: #{gcn_ffn.1} parent=11 // pred_check_branch
          %164 = sbr.rel (%p162) target = $region24
        $region23: #{gcn_ffn.1} parent=11 // pred_region
          _
        $region24: #{gcn_ffn.1} parent=11 // pred_fallthru
          _
      $region12: #{gcn_ffn.1} parent=5 // pred_fallthru
        _
      %p165 = scmp.lt.s32.totalorder %s10, 4
      // Predicated region
      $region25: #{gcn_ffn.1} parent=5 // pred_check
        %p166 = pneg %p165
      $region26: #{gcn_ffn.1} parent=5 // pred_check_branch
        %168 = sbr.rel (%p166) target = $region28
      $region27: #{gcn_ffn.1} parent=5 // pred_region
        // Predicated region
        $region29: #{gcn_ffn.1} parent=27 // pred_check
          %p169 = pneg %p44
        $region30: #{gcn_ffn.1} parent=27 // pred_check_branch
          %171 = sbr.rel (%p169) target = $region32
        $region31: #{gcn_ffn.1} parent=27 // pred_region
          %s172 = sand.u32 %s34, 1
          %s173 = sand.u32 %s34, 1
          %s174 = smul.addr %s173, 1024
          %s175 = scalar_lea.vmem [#allocation3], %s174
          %s176 = smul.u32 16, %s18
          %s177 = smul.addr %s17, 256
          %s178 = sadd.s32 %s176, %s177
          %s179 = smul.addr %s178, 8
          %s180 = scalar_lea.vmem %s0, %s179
          // Predicated region
          $region33: #{gcn_ffn.1} parent=31 // pred_check
            _
          $region34: #{gcn_ffn.1} parent=31 // pred_check_branch
            %182 = sbr.rel (0) target = $region36
          $region35: #{gcn_ffn.1} parent=31 // pred_region
            // Predicated region
            $region37: #{gcn_ffn.1} parent=35 // pred_check
              _
            $region38: #{gcn_ffn.1} parent=35 // pred_check_branch
              %184 = sbr.rel (0) target = $region40
            $region39: #{gcn_ffn.1} parent=35 // pred_region
              // Predicated region
              $region52: #{gcn_ffn.1} parent=39 // pred_check
                _
              $region53: #{gcn_ffn.1} parent=39 // pred_check_branch
                %454 = sbr.rel (0) target = $region55
              $region54: #{gcn_ffn.1} parent=39 // pred_region
                loop: start=0, step=1, limit=1
                $region56: #{gcn_ffn.1} parent=54 // loop_pre_header
                  _
                $region57: #{gcn_ffn.1} parent=54 // loop_header
                  %s456 = sphi 0, %s460
                  %p457 = scmp.ge.s32.totalorder %s456, 1
                  %s461 = sphi %s180, %s180
                  %s462 = sphi %s175, %s175
                $region58: #{gcn_ffn.1} parent=54 // loop_header_branch
                  %459 = sbr.rel (%p457) target = $region62
                $region59: #{gcn_ffn.1} parent=54 // loop_body
                  %v463 = vld [vmem:[%s461] sm:$0xff]
                  %464 = vst [vmem:[%s462] sm:$0xff] %v463
                  %v465 = vld [vmem:[%s461 + $0x8] sm:$0xff]
                  %466 = vst [vmem:[%s462 + $0x8] sm:$0xff] %v465
                  %v467 = vld [vmem:[%s461 + $0x10] sm:$0xff]
                  %468 = vst [vmem:[%s462 + $0x10] sm:$0xff] %v467
                  %v469 = vld [vmem:[%s461 + $0x18] sm:$0xff]
                  %470 = vst [vmem:[%s462 + $0x18] sm:$0xff] %v469
                  %v471 = vld [vmem:[%s461 + $0x20] sm:$0xff]
                  %472 = vst [vmem:[%s462 + $0x20] sm:$0xff] %v471
                  %v473 = vld [vmem:[%s461 + $0x28] sm:$0xff]
                  %474 = vst [vmem:[%s462 + $0x28] sm:$0xff] %v473
                  %v475 = vld [vmem:[%s461 + $0x30] sm:$0xff]
                  %476 = vst [vmem:[%s462 + $0x30] sm:$0xff] %v475
                  %v477 = vld [vmem:[%s461 + $0x38] sm:$0xff]
                  %478 = vst [vmem:[%s462 + $0x38] sm:$0xff] %v477
                  %v479 = vld [vmem:[%s461 + $0x40] sm:$0xff]
                  %480 = vst [vmem:[%s462 + $0x40] sm:$0xff] %v479
                  %v481 = vld [vmem:[%s461 + $0x48] sm:$0xff]
                  %482 = vst [vmem:[%s462 + $0x48] sm:$0xff] %v481
                  %v483 = vld [vmem:[%s461 + $0x50] sm:$0xff]
                  %484 = vst [vmem:[%s462 + $0x50] sm:$0xff] %v483
                  %v485 = vld [vmem:[%s461 + $0x58] sm:$0xff]
                  %486 = vst [vmem:[%s462 + $0x58] sm:$0xff] %v485
                  %v487 = vld [vmem:[%s461 + $0x60] sm:$0xff]
                  %488 = vst [vmem:[%s462 + $0x60] sm:$0xff] %v487
                  %v489 = vld [vmem:[%s461 + $0x68] sm:$0xff]
                  %490 = vst [vmem:[%s462 + $0x68] sm:$0xff] %v489
                  %v491 = vld [vmem:[%s461 + $0x70] sm:$0xff]
                  %492 = vst [vmem:[%s462 + $0x70] sm:$0xff] %v491
                  %v493 = vld [vmem:[%s461 + $0x78] sm:$0xff]
                  %494 = vst [vmem:[%s462 + $0x78] sm:$0xff] %v493
                  %v495 = vld [vmem:[%s461 + $0x100] sm:$0xff]
                  %496 = vst [vmem:[%s462 + $0x80] sm:$0xff] %v495
                  %v497 = vld [vmem:[%s461 + $0x108] sm:$0xff]
                  %498 = vst [vmem:[%s462 + $0x88] sm:$0xff] %v497
                  %v499 = vld [vmem:[%s461 + $0x110] sm:$0xff]
                  %500 = vst [vmem:[%s462 + $0x90] sm:$0xff] %v499
                  %v501 = vld [vmem:[%s461 + $0x118] sm:$0xff]
                  %502 = vst [vmem:[%s462 + $0x98] sm:$0xff] %v501
                  %v503 = vld [vmem:[%s461 + $0x120] sm:$0xff]
                  %504 = vst [vmem:[%s462 + $0xa0] sm:$0xff] %v503
                  %v505 = vld [vmem:[%s461 + $0x128] sm:$0xff]
                  %506 = vst [vmem:[%s462 + $0xa8] sm:$0xff] %v505
                  %v507 = vld [vmem:[%s461 + $0x130] sm:$0xff]
                  %508 = vst [vmem:[%s462 + $0xb0] sm:$0xff] %v507
                  %v509 = vld [vmem:[%s461 + $0x138] sm:$0xff]
                  %510 = vst [vmem:[%s462 + $0xb8] sm:$0xff] %v509
                  %v511 = vld [vmem:[%s461 + $0x140] sm:$0xff]
                  %512 = vst [vmem:[%s462 + $0xc0] sm:$0xff] %v511
                  %v513 = vld [vmem:[%s461 + $0x148] sm:$0xff]
                  %514 = vst [vmem:[%s462 + $0xc8] sm:$0xff] %v513
                  %v515 = vld [vmem:[%s461 + $0x150] sm:$0xff]
                  %516 = vst [vmem:[%s462 + $0xd0] sm:$0xff] %v515
                  %v517 = vld [vmem:[%s461 + $0x158] sm:$0xff]
                  %518 = vst [vmem:[%s462 + $0xd8] sm:$0xff] %v517
                  %v519 = vld [vmem:[%s461 + $0x160] sm:$0xff]
                  %520 = vst [vmem:[%s462 + $0xe0] sm:$0xff] %v519
                  %v521 = vld [vmem:[%s461 + $0x168] sm:$0xff]
                  %522 = vst [vmem:[%s462 + $0xe8] sm:$0xff] %v521
                  %v523 = vld [vmem:[%s461 + $0x170] sm:$0xff]
                  %524 = vst [vmem:[%s462 + $0xf0] sm:$0xff] %v523
                  %v525 = vld [vmem:[%s461 + $0x178] sm:$0xff]
                  %526 = vst [vmem:[%s462 + $0xf8] sm:$0xff] %v525
                  %v527 = vld [vmem:[%s461 + $0x200] sm:$0xff]
                  %528 = vst [vmem:[%s462 + $0x100] sm:$0xff] %v527
                  %v529 = vld [vmem:[%s461 + $0x208] sm:$0xff]
                  %530 = vst [vmem:[%s462 + $0x108] sm:$0xff] %v529
                  %v531 = vld [vmem:[%s461 + $0x210] sm:$0xff]
                  %532 = vst [vmem:[%s462 + $0x110] sm:$0xff] %v531
                  %v533 = vld [vmem:[%s461 + $0x218] sm:$0xff]
                  %534 = vst [vmem:[%s462 + $0x118] sm:$0xff] %v533
                  %v535 = vld [vmem:[%s461 + $0x220] sm:$0xff]
                  %536 = vst [vmem:[%s462 + $0x120] sm:$0xff] %v535
                  %v537 = vld [vmem:[%s461 + $0x228] sm:$0xff]
                  %538 = vst [vmem:[%s462 + $0x128] sm:$0xff] %v537
                  %v539 = vld [vmem:[%s461 + $0x230] sm:$0xff]
                  %540 = vst [vmem:[%s462 + $0x130] sm:$0xff] %v539
                  %v541 = vld [vmem:[%s461 + $0x238] sm:$0xff]
                  %542 = vst [vmem:[%s462 + $0x138] sm:$0xff] %v541
                  %v543 = vld [vmem:[%s461 + $0x240] sm:$0xff]
                  %544 = vst [vmem:[%s462 + $0x140] sm:$0xff] %v543
                  %v545 = vld [vmem:[%s461 + $0x248] sm:$0xff]
                  %546 = vst [vmem:[%s462 + $0x148] sm:$0xff] %v545
                  %v547 = vld [vmem:[%s461 + $0x250] sm:$0xff]
                  %548 = vst [vmem:[%s462 + $0x150] sm:$0xff] %v547
                  %v549 = vld [vmem:[%s461 + $0x258] sm:$0xff]
                  %550 = vst [vmem:[%s462 + $0x158] sm:$0xff] %v549
                  %v551 = vld [vmem:[%s461 + $0x260] sm:$0xff]
                  %552 = vst [vmem:[%s462 + $0x160] sm:$0xff] %v551
                  %v553 = vld [vmem:[%s461 + $0x268] sm:$0xff]
                  %554 = vst [vmem:[%s462 + $0x168] sm:$0xff] %v553
                  %v555 = vld [vmem:[%s461 + $0x270] sm:$0xff]
                  %556 = vst [vmem:[%s462 + $0x170] sm:$0xff] %v555
                  %v557 = vld [vmem:[%s461 + $0x278] sm:$0xff]
                  %558 = vst [vmem:[%s462 + $0x178] sm:$0xff] %v557
                  %v559 = vld [vmem:[%s461 + $0x300] sm:$0xff]
                  %560 = vst [vmem:[%s462 + $0x180] sm:$0xff] %v559
                  %v561 = vld [vmem:[%s461 + $0x308] sm:$0xff]
                  %562 = vst [vmem:[%s462 + $0x188] sm:$0xff] %v561
                  %v563 = vld [vmem:[%s461 + $0x310] sm:$0xff]
                  %564 = vst [vmem:[%s462 + $0x190] sm:$0xff] %v563
                  %v565 = vld [vmem:[%s461 + $0x318] sm:$0xff]
                  %566 = vst [vmem:[%s462 + $0x198] sm:$0xff] %v565
                  %v567 = vld [vmem:[%s461 + $0x320] sm:$0xff]
                  %568 = vst [vmem:[%s462 + $0x1a0] sm:$0xff] %v567
                  %v569 = vld [vmem:[%s461 + $0x328] sm:$0xff]
                  %570 = vst [vmem:[%s462 + $0x1a8] sm:$0xff] %v569
                  %v571 = vld [vmem:[%s461 + $0x330] sm:$0xff]
                  %572 = vst [vmem:[%s462 + $0x1b0] sm:$0xff] %v571
                  %v573 = vld [vmem:[%s461 + $0x338] sm:$0xff]
                  %574 = vst [vmem:[%s462 + $0x1b8] sm:$0xff] %v573
                  %v575 = vld [vmem:[%s461 + $0x340] sm:$0xff]
                  %576 = vst [vmem:[%s462 + $0x1c0] sm:$0xff] %v575
                  %v577 = vld [vmem:[%s461 + $0x348] sm:$0xff]
                  %578 = vst [vmem:[%s462 + $0x1c8] sm:$0xff] %v577
                  %v579 = vld [vmem:[%s461 + $0x350] sm:$0xff]
                  %580 = vst [vmem:[%s462 + $0x1d0] sm:$0xff] %v579
                  %v581 = vld [vmem:[%s461 + $0x358] sm:$0xff]
                  %582 = vst [vmem:[%s462 + $0x1d8] sm:$0xff] %v581
                  %v583 = vld [vmem:[%s461 + $0x360] sm:$0xff]
                  %584 = vst [vmem:[%s462 + $0x1e0] sm:$0xff] %v583
                  %v585 = vld [vmem:[%s461 + $0x368] sm:$0xff]
                  %586 = vst [vmem:[%s462 + $0x1e8] sm:$0xff] %v585
                  %v587 = vld [vmem:[%s461 + $0x370] sm:$0xff]
                  %588 = vst [vmem:[%s462 + $0x1f0] sm:$0xff] %v587
                  %v589 = vld [vmem:[%s461 + $0x378] sm:$0xff]
                  %590 = vst [vmem:[%s462 + $0x1f8] sm:$0xff] %v589
                  %v591 = vld [vmem:[%s461 + $0x400] sm:$0xff]
                  %592 = vst [vmem:[%s462 + $0x200] sm:$0xff] %v591
                  %v593 = vld [vmem:[%s461 + $0x408] sm:$0xff]
                  %594 = vst [vmem:[%s462 + $0x208] sm:$0xff] %v593
                  %v595 = vld [vmem:[%s461 + $0x410] sm:$0xff]
                  %596 = vst [vmem:[%s462 + $0x210] sm:$0xff] %v595
                  %v597 = vld [vmem:[%s461 + $0x418] sm:$0xff]
                  %598 = vst [vmem:[%s462 + $0x218] sm:$0xff] %v597
                  %v599 = vld [vmem:[%s461 + $0x420] sm:$0xff]
                  %600 = vst [vmem:[%s462 + $0x220] sm:$0xff] %v599
                  %v601 = vld [vmem:[%s461 + $0x428] sm:$0xff]
                  %602 = vst [vmem:[%s462 + $0x228] sm:$0xff] %v601
                  %v603 = vld [vmem:[%s461 + $0x430] sm:$0xff]
                  %604 = vst [vmem:[%s462 + $0x230] sm:$0xff] %v603
                  %v605 = vld [vmem:[%s461 + $0x438] sm:$0xff]
                  %606 = vst [vmem:[%s462 + $0x238] sm:$0xff] %v605
                  %v607 = vld [vmem:[%s461 + $0x440] sm:$0xff]
                  %608 = vst [vmem:[%s462 + $0x240] sm:$0xff] %v607
                  %v609 = vld [vmem:[%s461 + $0x448] sm:$0xff]
                  %610 = vst [vmem:[%s462 + $0x248] sm:$0xff] %v609
                  %v611 = vld [vmem:[%s461 + $0x450] sm:$0xff]
                  %612 = vst [vmem:[%s462 + $0x250] sm:$0xff] %v611
                  %v613 = vld [vmem:[%s461 + $0x458] sm:$0xff]
                  %614 = vst [vmem:[%s462 + $0x258] sm:$0xff] %v613
                  %v615 = vld [vmem:[%s461 + $0x460] sm:$0xff]
                  %616 = vst [vmem:[%s462 + $0x260] sm:$0xff] %v615
                  %v617 = vld [vmem:[%s461 + $0x468] sm:$0xff]
                  %618 = vst [vmem:[%s462 + $0x268] sm:$0xff] %v617
                  %v619 = vld [vmem:[%s461 + $0x470] sm:$0xff]
                  %620 = vst [vmem:[%s462 + $0x270] sm:$0xff] %v619
                  %v621 = vld [vmem:[%s461 + $0x478] sm:$0xff]
                  %622 = vst [vmem:[%s462 + $0x278] sm:$0xff] %v621
                  %v623 = vld [vmem:[%s461 + $0x500] sm:$0xff]
                  %624 = vst [vmem:[%s462 + $0x280] sm:$0xff] %v623
                  %v625 = vld [vmem:[%s461 + $0x508] sm:$0xff]
                  %626 = vst [vmem:[%s462 + $0x288] sm:$0xff] %v625
                  %v627 = vld [vmem:[%s461 + $0x510] sm:$0xff]
                  %628 = vst [vmem:[%s462 + $0x290] sm:$0xff] %v627
                  %v629 = vld [vmem:[%s461 + $0x518] sm:$0xff]
                  %630 = vst [vmem:[%s462 + $0x298] sm:$0xff] %v629
                  %v631 = vld [vmem:[%s461 + $0x520] sm:$0xff]
                  %632 = vst [vmem:[%s462 + $0x2a0] sm:$0xff] %v631
                  %v633 = vld [vmem:[%s461 + $0x528] sm:$0xff]
                  %634 = vst [vmem:[%s462 + $0x2a8] sm:$0xff] %v633
                  %v635 = vld [vmem:[%s461 + $0x530] sm:$0xff]
                  %636 = vst [vmem:[%s462 + $0x2b0] sm:$0xff] %v635
                  %v637 = vld [vmem:[%s461 + $0x538] sm:$0xff]
                  %638 = vst [vmem:[%s462 + $0x2b8] sm:$0xff] %v637
                  %v639 = vld [vmem:[%s461 + $0x540] sm:$0xff]
                  %640 = vst [vmem:[%s462 + $0x2c0] sm:$0xff] %v639
                  %v641 = vld [vmem:[%s461 + $0x548] sm:$0xff]
                  %642 = vst [vmem:[%s462 + $0x2c8] sm:$0xff] %v641
                  %v643 = vld [vmem:[%s461 + $0x550] sm:$0xff]
                  %644 = vst [vmem:[%s462 + $0x2d0] sm:$0xff] %v643
                  %v645 = vld [vmem:[%s461 + $0x558] sm:$0xff]
                  %646 = vst [vmem:[%s462 + $0x2d8] sm:$0xff] %v645
                  %v647 = vld [vmem:[%s461 + $0x560] sm:$0xff]
                  %648 = vst [vmem:[%s462 + $0x2e0] sm:$0xff] %v647
                  %v649 = vld [vmem:[%s461 + $0x568] sm:$0xff]
                  %650 = vst [vmem:[%s462 + $0x2e8] sm:$0xff] %v649
                  %v651 = vld [vmem:[%s461 + $0x570] sm:$0xff]
                  %652 = vst [vmem:[%s462 + $0x2f0] sm:$0xff] %v651
                  %v653 = vld [vmem:[%s461 + $0x578] sm:$0xff]
                  %654 = vst [vmem:[%s462 + $0x2f8] sm:$0xff] %v653
                  %v655 = vld [vmem:[%s461 + $0x600] sm:$0xff]
                  %656 = vst [vmem:[%s462 + $0x300] sm:$0xff] %v655
                  %v657 = vld [vmem:[%s461 + $0x608] sm:$0xff]
                  %658 = vst [vmem:[%s462 + $0x308] sm:$0xff] %v657
                  %v659 = vld [vmem:[%s461 + $0x610] sm:$0xff]
                  %660 = vst [vmem:[%s462 + $0x310] sm:$0xff] %v659
                  %v661 = vld [vmem:[%s461 + $0x618] sm:$0xff]
                  %662 = vst [vmem:[%s462 + $0x318] sm:$0xff] %v661
                  %v663 = vld [vmem:[%s461 + $0x620] sm:$0xff]
                  %664 = vst [vmem:[%s462 + $0x320] sm:$0xff] %v663
                  %v665 = vld [vmem:[%s461 + $0x628] sm:$0xff]
                  %666 = vst [vmem:[%s462 + $0x328] sm:$0xff] %v665
                  %v667 = vld [vmem:[%s461 + $0x630] sm:$0xff]
                  %668 = vst [vmem:[%s462 + $0x330] sm:$0xff] %v667
                  %v669 = vld [vmem:[%s461 + $0x638] sm:$0xff]
                  %670 = vst [vmem:[%s462 + $0x338] sm:$0xff] %v669
                  %v671 = vld [vmem:[%s461 + $0x640] sm:$0xff]
                  %672 = vst [vmem:[%s462 + $0x340] sm:$0xff] %v671
                  %v673 = vld [vmem:[%s461 + $0x648] sm:$0xff]
                  %674 = vst [vmem:[%s462 + $0x348] sm:$0xff] %v673
                  %v675 = vld [vmem:[%s461 + $0x650] sm:$0xff]
                  %676 = vst [vmem:[%s462 + $0x350] sm:$0xff] %v675
                  %v677 = vld [vmem:[%s461 + $0x658] sm:$0xff]
                  %678 = vst [vmem:[%s462 + $0x358] sm:$0xff] %v677
                  %v679 = vld [vmem:[%s461 + $0x660] sm:$0xff]
                  %680 = vst [vmem:[%s462 + $0x360] sm:$0xff] %v679
                  %v681 = vld [vmem:[%s461 + $0x668] sm:$0xff]
                  %682 = vst [vmem:[%s462 + $0x368] sm:$0xff] %v681
                  %v683 = vld [vmem:[%s461 + $0x670] sm:$0xff]
                  %684 = vst [vmem:[%s462 + $0x370] sm:$0xff] %v683
                  %v685 = vld [vmem:[%s461 + $0x678] sm:$0xff]
                  %686 = vst [vmem:[%s462 + $0x378] sm:$0xff] %v685
                  %v687 = vld [vmem:[%s461 + $0x700] sm:$0xff]
                  %688 = vst [vmem:[%s462 + $0x380] sm:$0xff] %v687
                  %v689 = vld [vmem:[%s461 + $0x708] sm:$0xff]
                  %690 = vst [vmem:[%s462 + $0x388] sm:$0xff] %v689
                  %v691 = vld [vmem:[%s461 + $0x710] sm:$0xff]
                  %692 = vst [vmem:[%s462 + $0x390] sm:$0xff] %v691
                  %v693 = vld [vmem:[%s461 + $0x718] sm:$0xff]
                  %694 = vst [vmem:[%s462 + $0x398] sm:$0xff] %v693
                  %v695 = vld [vmem:[%s461 + $0x720] sm:$0xff]
                  %696 = vst [vmem:[%s462 + $0x3a0] sm:$0xff] %v695
                  %v697 = vld [vmem:[%s461 + $0x728] sm:$0xff]
                  %698 = vst [vmem:[%s462 + $0x3a8] sm:$0xff] %v697
                  %v699 = vld [vmem:[%s461 + $0x730] sm:$0xff]
                  %700 = vst [vmem:[%s462 + $0x3b0] sm:$0xff] %v699
                  %v701 = vld [vmem:[%s461 + $0x738] sm:$0xff]
                  %702 = vst [vmem:[%s462 + $0x3b8] sm:$0xff] %v701
                  %v703 = vld [vmem:[%s461 + $0x740] sm:$0xff]
                  %704 = vst [vmem:[%s462 + $0x3c0] sm:$0xff] %v703
                  %v705 = vld [vmem:[%s461 + $0x748] sm:$0xff]
                  %706 = vst [vmem:[%s462 + $0x3c8] sm:$0xff] %v705
                  %v707 = vld [vmem:[%s461 + $0x750] sm:$0xff]
                  %708 = vst [vmem:[%s462 + $0x3d0] sm:$0xff] %v707
                  %v709 = vld [vmem:[%s461 + $0x758] sm:$0xff]
                  %710 = vst [vmem:[%s462 + $0x3d8] sm:$0xff] %v709
                  %v711 = vld [vmem:[%s461 + $0x760] sm:$0xff]
                  %712 = vst [vmem:[%s462 + $0x3e0] sm:$0xff] %v711
                  %v713 = vld [vmem:[%s461 + $0x768] sm:$0xff]
                  %714 = vst [vmem:[%s462 + $0x3e8] sm:$0xff] %v713
                  %v715 = vld [vmem:[%s461 + $0x770] sm:$0xff]
                  %716 = vst [vmem:[%s462 + $0x3f0] sm:$0xff] %v715
                  %v717 = vld [vmem:[%s461 + $0x778] sm:$0xff]
                  %718 = vst [vmem:[%s462 + $0x3f8] sm:$0xff] %v717
                $region60: #{gcn_ffn.1} parent=54 // loop_footer
                  %s460 = sadd.s32 1, %s456
                $region61: #{gcn_ffn.1} parent=54 // loop_footer_branch
                  %455 = sbr.rel target = $region57
                $region62: #{gcn_ffn.1} parent=54 // loop_exit
                  _
              $region55: #{gcn_ffn.1} parent=39 // pred_fallthru
                _
              // Predicated region
              $region63: #{gcn_ffn.1} parent=39 // pred_check
                _
              $region64: #{gcn_ffn.1} parent=39 // pred_check_branch
                %720 = sbr.rel target = $region66
              $region65: #{gcn_ffn.1} parent=39 // pred_region
                _
              $region66: #{gcn_ffn.1} parent=39 // pred_fallthru
                _
            $region40: #{gcn_ffn.1} parent=35 // pred_fallthru
              _
            // Predicated region
            $region41: #{gcn_ffn.1} parent=35 // pred_check
              _
            $region42: #{gcn_ffn.1} parent=35 // pred_check_branch
              %186 = sbr.rel target = $region44
            $region43: #{gcn_ffn.1} parent=35 // pred_region
              %s188 = ssub.s32 256, 1
              loop: start=0, step=1, limit=1
              $region45: #{gcn_ffn.1} parent=43 // loop_pre_header
                _
              $region46: #{gcn_ffn.1} parent=43 // loop_header
                %s190 = sphi 0, %s194
                %p191 = scmp.ge.s32.totalorder %s190, 1
                %s195 = sphi %s180, %s180
                %s196 = sphi %s175, %s175
              $region47: #{gcn_ffn.1} parent=43 // loop_header_branch
                %193 = sbr.rel (%p191) target = $region51
              $region48: #{gcn_ffn.1} parent=43 // loop_body
                %v197 = vld [vmem:[%s195] sm:%s188]
                %198 = vst [vmem:[%s196] sm:%s188] %v197
                %v199 = vld [vmem:[%s195 + $0x8] sm:%s188]
                %200 = vst [vmem:[%s196 + $0x8] sm:%s188] %v199
                %v201 = vld [vmem:[%s195 + $0x10] sm:%s188]
                %202 = vst [vmem:[%s196 + $0x10] sm:%s188] %v201
                %v203 = vld [vmem:[%s195 + $0x18] sm:%s188]
                %204 = vst [vmem:[%s196 + $0x18] sm:%s188] %v203
                %v205 = vld [vmem:[%s195 + $0x20] sm:%s188]
                %206 = vst [vmem:[%s196 + $0x20] sm:%s188] %v205
                %v207 = vld [vmem:[%s195 + $0x28] sm:%s188]
                %208 = vst [vmem:[%s196 + $0x28] sm:%s188] %v207
                %v209 = vld [vmem:[%s195 + $0x30] sm:%s188]
                %210 = vst [vmem:[%s196 + $0x30] sm:%s188] %v209
                %v211 = vld [vmem:[%s195 + $0x38] sm:%s188]
                %212 = vst [vmem:[%s196 + $0x38] sm:%s188] %v211
                %v213 = vld [vmem:[%s195 + $0x40] sm:%s188]
                %214 = vst [vmem:[%s196 + $0x40] sm:%s188] %v213
                %v215 = vld [vmem:[%s195 + $0x48] sm:%s188]
                %216 = vst [vmem:[%s196 + $0x48] sm:%s188] %v215
                %v217 = vld [vmem:[%s195 + $0x50] sm:%s188]
                %218 = vst [vmem:[%s196 + $0x50] sm:%s188] %v217
                %v219 = vld [vmem:[%s195 + $0x58] sm:%s188]
                %220 = vst [vmem:[%s196 + $0x58] sm:%s188] %v219
                %v221 = vld [vmem:[%s195 + $0x60] sm:%s188]
                %222 = vst [vmem:[%s196 + $0x60] sm:%s188] %v221
                %v223 = vld [vmem:[%s195 + $0x68] sm:%s188]
                %224 = vst [vmem:[%s196 + $0x68] sm:%s188] %v223
                %v225 = vld [vmem:[%s195 + $0x70] sm:%s188]
                %226 = vst [vmem:[%s196 + $0x70] sm:%s188] %v225
                %v227 = vld [vmem:[%s195 + $0x78] sm:%s188]
                %228 = vst [vmem:[%s196 + $0x78] sm:%s188] %v227
                %v229 = vld [vmem:[%s195 + $0x100] sm:%s188]
                %230 = vst [vmem:[%s196 + $0x80] sm:%s188] %v229
                %v231 = vld [vmem:[%s195 + $0x108] sm:%s188]
                %232 = vst [vmem:[%s196 + $0x88] sm:%s188] %v231
                %v233 = vld [vmem:[%s195 + $0x110] sm:%s188]
                %234 = vst [vmem:[%s196 + $0x90] sm:%s188] %v233
                %v235 = vld [vmem:[%s195 + $0x118] sm:%s188]
                %236 = vst [vmem:[%s196 + $0x98] sm:%s188] %v235
                %v237 = vld [vmem:[%s195 + $0x120] sm:%s188]
                %238 = vst [vmem:[%s196 + $0xa0] sm:%s188] %v237
                %v239 = vld [vmem:[%s195 + $0x128] sm:%s188]
                %240 = vst [vmem:[%s196 + $0xa8] sm:%s188] %v239
                %v241 = vld [vmem:[%s195 + $0x130] sm:%s188]
                %242 = vst [vmem:[%s196 + $0xb0] sm:%s188] %v241
                %v243 = vld [vmem:[%s195 + $0x138] sm:%s188]
                %244 = vst [vmem:[%s196 + $0xb8] sm:%s188] %v243
                %v245 = vld [vmem:[%s195 + $0x140] sm:%s188]
                %246 = vst [vmem:[%s196 + $0xc0] sm:%s188] %v245
                %v247 = vld [vmem:[%s195 + $0x148] sm:%s188]
                %248 = vst [vmem:[%s196 + $0xc8] sm:%s188] %v247
                %v249 = vld [vmem:[%s195 + $0x150] sm:%s188]
                %250 = vst [vmem:[%s196 + $0xd0] sm:%s188] %v249
                %v251 = vld [vmem:[%s195 + $0x158] sm:%s188]
                %252 = vst [vmem:[%s196 + $0xd8] sm:%s188] %v251
                %v253 = vld [vmem:[%s195 + $0x160] sm:%s188]
                %254 = vst [vmem:[%s196 + $0xe0] sm:%s188] %v253
                %v255 = vld [vmem:[%s195 + $0x168] sm:%s188]
                %256 = vst [vmem:[%s196 + $0xe8] sm:%s188] %v255
                %v257 = vld [vmem:[%s195 + $0x170] sm:%s188]
                %258 = vst [vmem:[%s196 + $0xf0] sm:%s188] %v257
                %v259 = vld [vmem:[%s195 + $0x178] sm:%s188]
                %260 = vst [vmem:[%s196 + $0xf8] sm:%s188] %v259
                %v261 = vld [vmem:[%s195 + $0x200] sm:%s188]
                %262 = vst [vmem:[%s196 + $0x100] sm:%s188] %v261
                %v263 = vld [vmem:[%s195 + $0x208] sm:%s188]
                %264 = vst [vmem:[%s196 + $0x108] sm:%s188] %v263
                %v265 = vld [vmem:[%s195 + $0x210] sm:%s188]
                %266 = vst [vmem:[%s196 + $0x110] sm:%s188] %v265
                %v267 = vld [vmem:[%s195 + $0x218] sm:%s188]
                %268 = vst [vmem:[%s196 + $0x118] sm:%s188] %v267
                %v269 = vld [vmem:[%s195 + $0x220] sm:%s188]
                %270 = vst [vmem:[%s196 + $0x120] sm:%s188] %v269
                %v271 = vld [vmem:[%s195 + $0x228] sm:%s188]
                %272 = vst [vmem:[%s196 + $0x128] sm:%s188] %v271
                %v273 = vld [vmem:[%s195 + $0x230] sm:%s188]
                %274 = vst [vmem:[%s196 + $0x130] sm:%s188] %v273
                %v275 = vld [vmem:[%s195 + $0x238] sm:%s188]
                %276 = vst [vmem:[%s196 + $0x138] sm:%s188] %v275
                %v277 = vld [vmem:[%s195 + $0x240] sm:%s188]
                %278 = vst [vmem:[%s196 + $0x140] sm:%s188] %v277
                %v279 = vld [vmem:[%s195 + $0x248] sm:%s188]
                %280 = vst [vmem:[%s196 + $0x148] sm:%s188] %v279
                %v281 = vld [vmem:[%s195 + $0x250] sm:%s188]
                %282 = vst [vmem:[%s196 + $0x150] sm:%s188] %v281
                %v283 = vld [vmem:[%s195 + $0x258] sm:%s188]
                %284 = vst [vmem:[%s196 + $0x158] sm:%s188] %v283
                %v285 = vld [vmem:[%s195 + $0x260] sm:%s188]
                %286 = vst [vmem:[%s196 + $0x160] sm:%s188] %v285
                %v287 = vld [vmem:[%s195 + $0x268] sm:%s188]
                %288 = vst [vmem:[%s196 + $0x168] sm:%s188] %v287
                %v289 = vld [vmem:[%s195 + $0x270] sm:%s188]
                %290 = vst [vmem:[%s196 + $0x170] sm:%s188] %v289
                %v291 = vld [vmem:[%s195 + $0x278] sm:%s188]
                %292 = vst [vmem:[%s196 + $0x178] sm:%s188] %v291
                %v293 = vld [vmem:[%s195 + $0x300] sm:%s188]
                %294 = vst [vmem:[%s196 + $0x180] sm:%s188] %v293
                %v295 = vld [vmem:[%s195 + $0x308] sm:%s188]
                %296 = vst [vmem:[%s196 + $0x188] sm:%s188] %v295
                %v297 = vld [vmem:[%s195 + $0x310] sm:%s188]
                %298 = vst [vmem:[%s196 + $0x190] sm:%s188] %v297
                %v299 = vld [vmem:[%s195 + $0x318] sm:%s188]
                %300 = vst [vmem:[%s196 + $0x198] sm:%s188] %v299
                %v301 = vld [vmem:[%s195 + $0x320] sm:%s188]
                %302 = vst [vmem:[%s196 + $0x1a0] sm:%s188] %v301
                %v303 = vld [vmem:[%s195 + $0x328] sm:%s188]
                %304 = vst [vmem:[%s196 + $0x1a8] sm:%s188] %v303
                %v305 = vld [vmem:[%s195 + $0x330] sm:%s188]
                %306 = vst [vmem:[%s196 + $0x1b0] sm:%s188] %v305
                %v307 = vld [vmem:[%s195 + $0x338] sm:%s188]
                %308 = vst [vmem:[%s196 + $0x1b8] sm:%s188] %v307
                %v309 = vld [vmem:[%s195 + $0x340] sm:%s188]
                %310 = vst [vmem:[%s196 + $0x1c0] sm:%s188] %v309
                %v311 = vld [vmem:[%s195 + $0x348] sm:%s188]
                %312 = vst [vmem:[%s196 + $0x1c8] sm:%s188] %v311
                %v313 = vld [vmem:[%s195 + $0x350] sm:%s188]
                %314 = vst [vmem:[%s196 + $0x1d0] sm:%s188] %v313
                %v315 = vld [vmem:[%s195 + $0x358] sm:%s188]
                %316 = vst [vmem:[%s196 + $0x1d8] sm:%s188] %v315
                %v317 = vld [vmem:[%s195 + $0x360] sm:%s188]
                %318 = vst [vmem:[%s196 + $0x1e0] sm:%s188] %v317
                %v319 = vld [vmem:[%s195 + $0x368] sm:%s188]
                %320 = vst [vmem:[%s196 + $0x1e8] sm:%s188] %v319
                %v321 = vld [vmem:[%s195 + $0x370] sm:%s188]
                %322 = vst [vmem:[%s196 + $0x1f0] sm:%s188] %v321
                %v323 = vld [vmem:[%s195 + $0x378] sm:%s188]
                %324 = vst [vmem:[%s196 + $0x1f8] sm:%s188] %v323
                %v325 = vld [vmem:[%s195 + $0x400] sm:%s188]
                %326 = vst [vmem:[%s196 + $0x200] sm:%s188] %v325
                %v327 = vld [vmem:[%s195 + $0x408] sm:%s188]
                %328 = vst [vmem:[%s196 + $0x208] sm:%s188] %v327
                %v329 = vld [vmem:[%s195 + $0x410] sm:%s188]
                %330 = vst [vmem:[%s196 + $0x210] sm:%s188] %v329
                %v331 = vld [vmem:[%s195 + $0x418] sm:%s188]
                %332 = vst [vmem:[%s196 + $0x218] sm:%s188] %v331
                %v333 = vld [vmem:[%s195 + $0x420] sm:%s188]
                %334 = vst [vmem:[%s196 + $0x220] sm:%s188] %v333
                %v335 = vld [vmem:[%s195 + $0x428] sm:%s188]
                %336 = vst [vmem:[%s196 + $0x228] sm:%s188] %v335
                %v337 = vld [vmem:[%s195 + $0x430] sm:%s188]
                %338 = vst [vmem:[%s196 + $0x230] sm:%s188] %v337
                %v339 = vld [vmem:[%s195 + $0x438] sm:%s188]
                %340 = vst [vmem:[%s196 + $0x238] sm:%s188] %v339
                %v341 = vld [vmem:[%s195 + $0x440] sm:%s188]
                %342 = vst [vmem:[%s196 + $0x240] sm:%s188] %v341
                %v343 = vld [vmem:[%s195 + $0x448] sm:%s188]
                %344 = vst [vmem:[%s196 + $0x248] sm:%s188] %v343
                %v345 = vld [vmem:[%s195 + $0x450] sm:%s188]
                %346 = vst [vmem:[%s196 + $0x250] sm:%s188] %v345
                %v347 = vld [vmem:[%s195 + $0x458] sm:%s188]
                %348 = vst [vmem:[%s196 + $0x258] sm:%s188] %v347
                %v349 = vld [vmem:[%s195 + $0x460] sm:%s188]
                %350 = vst [vmem:[%s196 + $0x260] sm:%s188] %v349
                %v351 = vld [vmem:[%s195 + $0x468] sm:%s188]
                %352 = vst [vmem:[%s196 + $0x268] sm:%s188] %v351
                %v353 = vld [vmem:[%s195 + $0x470] sm:%s188]
                %354 = vst [vmem:[%s196 + $0x270] sm:%s188] %v353
                %v355 = vld [vmem:[%s195 + $0x478] sm:%s188]
                %356 = vst [vmem:[%s196 + $0x278] sm:%s188] %v355
                %v357 = vld [vmem:[%s195 + $0x500] sm:%s188]
                %358 = vst [vmem:[%s196 + $0x280] sm:%s188] %v357
                %v359 = vld [vmem:[%s195 + $0x508] sm:%s188]
                %360 = vst [vmem:[%s196 + $0x288] sm:%s188] %v359
                %v361 = vld [vmem:[%s195 + $0x510] sm:%s188]
                %362 = vst [vmem:[%s196 + $0x290] sm:%s188] %v361
                %v363 = vld [vmem:[%s195 + $0x518] sm:%s188]
                %364 = vst [vmem:[%s196 + $0x298] sm:%s188] %v363
                %v365 = vld [vmem:[%s195 + $0x520] sm:%s188]
                %366 = vst [vmem:[%s196 + $0x2a0] sm:%s188] %v365
                %v367 = vld [vmem:[%s195 + $0x528] sm:%s188]
                %368 = vst [vmem:[%s196 + $0x2a8] sm:%s188] %v367
                %v369 = vld [vmem:[%s195 + $0x530] sm:%s188]
                %370 = vst [vmem:[%s196 + $0x2b0] sm:%s188] %v369
                %v371 = vld [vmem:[%s195 + $0x538] sm:%s188]
                %372 = vst [vmem:[%s196 + $0x2b8] sm:%s188] %v371
                %v373 = vld [vmem:[%s195 + $0x540] sm:%s188]
                %374 = vst [vmem:[%s196 + $0x2c0] sm:%s188] %v373
                %v375 = vld [vmem:[%s195 + $0x548] sm:%s188]
                %376 = vst [vmem:[%s196 + $0x2c8] sm:%s188] %v375
                %v377 = vld [vmem:[%s195 + $0x550] sm:%s188]
                %378 = vst [vmem:[%s196 + $0x2d0] sm:%s188] %v377
                %v379 = vld [vmem:[%s195 + $0x558] sm:%s188]
                %380 = vst [vmem:[%s196 + $0x2d8] sm:%s188] %v379
                %v381 = vld [vmem:[%s195 + $0x560] sm:%s188]
                %382 = vst [vmem:[%s196 + $0x2e0] sm:%s188] %v381
                %v383 = vld [vmem:[%s195 + $0x568] sm:%s188]
                %384 = vst [vmem:[%s196 + $0x2e8] sm:%s188] %v383
                %v385 = vld [vmem:[%s195 + $0x570] sm:%s188]
                %386 = vst [vmem:[%s196 + $0x2f0] sm:%s188] %v385
                %v387 = vld [vmem:[%s195 + $0x578] sm:%s188]
                %388 = vst [vmem:[%s196 + $0x2f8] sm:%s188] %v387
                %v389 = vld [vmem:[%s195 + $0x600] sm:%s188]
                %390 = vst [vmem:[%s196 + $0x300] sm:%s188] %v389
                %v391 = vld [vmem:[%s195 + $0x608] sm:%s188]
                %392 = vst [vmem:[%s196 + $0x308] sm:%s188] %v391
                %v393 = vld [vmem:[%s195 + $0x610] sm:%s188]
                %394 = vst [vmem:[%s196 + $0x310] sm:%s188] %v393
                %v395 = vld [vmem:[%s195 + $0x618] sm:%s188]
                %396 = vst [vmem:[%s196 + $0x318] sm:%s188] %v395
                %v397 = vld [vmem:[%s195 + $0x620] sm:%s188]
                %398 = vst [vmem:[%s196 + $0x320] sm:%s188] %v397
                %v399 = vld [vmem:[%s195 + $0x628] sm:%s188]
                %400 = vst [vmem:[%s196 + $0x328] sm:%s188] %v399
                %v401 = vld [vmem:[%s195 + $0x630] sm:%s188]
                %402 = vst [vmem:[%s196 + $0x330] sm:%s188] %v401
                %v403 = vld [vmem:[%s195 + $0x638] sm:%s188]
                %404 = vst [vmem:[%s196 + $0x338] sm:%s188] %v403
                %v405 = vld [vmem:[%s195 + $0x640] sm:%s188]
                %406 = vst [vmem:[%s196 + $0x340] sm:%s188] %v405
                %v407 = vld [vmem:[%s195 + $0x648] sm:%s188]
                %408 = vst [vmem:[%s196 + $0x348] sm:%s188] %v407
                %v409 = vld [vmem:[%s195 + $0x650] sm:%s188]
                %410 = vst [vmem:[%s196 + $0x350] sm:%s188] %v409
                %v411 = vld [vmem:[%s195 + $0x658] sm:%s188]
                %412 = vst [vmem:[%s196 + $0x358] sm:%s188] %v411
                %v413 = vld [vmem:[%s195 + $0x660] sm:%s188]
                %414 = vst [vmem:[%s196 + $0x360] sm:%s188] %v413
                %v415 = vld [vmem:[%s195 + $0x668] sm:%s188]
                %416 = vst [vmem:[%s196 + $0x368] sm:%s188] %v415
                %v417 = vld [vmem:[%s195 + $0x670] sm:%s188]
                %418 = vst [vmem:[%s196 + $0x370] sm:%s188] %v417
                %v419 = vld [vmem:[%s195 + $0x678] sm:%s188]
                %420 = vst [vmem:[%s196 + $0x378] sm:%s188] %v419
                %v421 = vld [vmem:[%s195 + $0x700] sm:%s188]
                %422 = vst [vmem:[%s196 + $0x380] sm:%s188] %v421
                %v423 = vld [vmem:[%s195 + $0x708] sm:%s188]
                %424 = vst [vmem:[%s196 + $0x388] sm:%s188] %v423
                %v425 = vld [vmem:[%s195 + $0x710] sm:%s188]
                %426 = vst [vmem:[%s196 + $0x390] sm:%s188] %v425
                %v427 = vld [vmem:[%s195 + $0x718] sm:%s188]
                %428 = vst [vmem:[%s196 + $0x398] sm:%s188] %v427
                %v429 = vld [vmem:[%s195 + $0x720] sm:%s188]
                %430 = vst [vmem:[%s196 + $0x3a0] sm:%s188] %v429
                %v431 = vld [vmem:[%s195 + $0x728] sm:%s188]
                %432 = vst [vmem:[%s196 + $0x3a8] sm:%s188] %v431
                %v433 = vld [vmem:[%s195 + $0x730] sm:%s188]
                %434 = vst [vmem:[%s196 + $0x3b0] sm:%s188] %v433
                %v435 = vld [vmem:[%s195 + $0x738] sm:%s188]
                %436 = vst [vmem:[%s196 + $0x3b8] sm:%s188] %v435
                %v437 = vld [vmem:[%s195 + $0x740] sm:%s188]
                %438 = vst [vmem:[%s196 + $0x3c0] sm:%s188] %v437
                %v439 = vld [vmem:[%s195 + $0x748] sm:%s188]
                %440 = vst [vmem:[%s196 + $0x3c8] sm:%s188] %v439
                %v441 = vld [vmem:[%s195 + $0x750] sm:%s188]
                %442 = vst [vmem:[%s196 + $0x3d0] sm:%s188] %v441
                %v443 = vld [vmem:[%s195 + $0x758] sm:%s188]
                %444 = vst [vmem:[%s196 + $0x3d8] sm:%s188] %v443
                %v445 = vld [vmem:[%s195 + $0x760] sm:%s188]
                %446 = vst [vmem:[%s196 + $0x3e0] sm:%s188] %v445
                %v447 = vld [vmem:[%s195 + $0x768] sm:%s188]
                %448 = vst [vmem:[%s196 + $0x3e8] sm:%s188] %v447
                %v449 = vld [vmem:[%s195 + $0x770] sm:%s188]
                %450 = vst [vmem:[%s196 + $0x3f0] sm:%s188] %v449
                %v451 = vld [vmem:[%s195 + $0x778] sm:%s188]
                %452 = vst [vmem:[%s196 + $0x3f8] sm:%s188] %v451
              $region49: #{gcn_ffn.1} parent=43 // loop_footer
                %s194 = sadd.s32 1, %s190
              $region50: #{gcn_ffn.1} parent=43 // loop_footer_branch
                %189 = sbr.rel target = $region46
              $region51: #{gcn_ffn.1} parent=43 // loop_exit
                _
            $region44: #{gcn_ffn.1} parent=35 // pred_fallthru
              _
          $region36: #{gcn_ffn.1} parent=31 // pred_fallthru
            _
          %721 = vnop
        $region32: #{gcn_ffn.1} parent=27 // pred_fallthru
          _
      $region28: #{gcn_ffn.1} parent=5 // pred_fallthru
        _
      %p722 = scmp.le.s32.totalorder 1, %s10
      %p723 = scmp.lt.s32.totalorder %s10, 5
      %p724 = pnand %p722, %p723
      %p725 = pneg %p724
      // Predicated region
      $region67: #{gcn_ffn.1} parent=5 // pred_check
        _
      $region68: #{gcn_ffn.1} parent=5 // pred_check_branch
        %727 = sbr.rel (%p724) target = $region70
      $region69: #{gcn_ffn.1} parent=5 // pred_region
        %s728 = ssub.s32 %s10, 1
        %s729 = sand.u32 %s37, 1
        %s730 = sand.u32 %s37, 1
        %s731 = smul.addr %s730, 1024
        %s732 = scalar_lea.vmem [#allocation3], %s731
        // Predicated region
        $region71: #{gcn_ffn.1} parent=69 // pred_check
          %p733 = pneg %p50
        $region72: #{gcn_ffn.1} parent=69 // pred_check_branch
          %735 = sbr.rel (%p733) target = $region74
        $region73: #{gcn_ffn.1} parent=69 // pred_region
          _
        $region74: #{gcn_ffn.1} parent=69 // pred_fallthru
          _
        %s736 = sand.u32 %s37, 1
        %s737 = sand.u32 %s37, 1
        %s738 = smul.addr %s737, 1024
        %s739 = scalar_lea.vmem [#allocation3], %s738
        %p740 = pneg %p50
        %p741 = pneg %p47
        %p742 = pneg %p71
        %p743 = pneg %p68
        %p744 = pneg %p92
        %p745 = pneg %p89
        %p746 = pneg %p113
        %p747 = pneg %p110
        %p748 = pneg %p141
        %p749 = pneg %p138
        %s750 = sand.u32 %s128, 1
        %s751 = sand.u32 %s128, 1
        %s752 = smul.addr %s751, 1024
        %s753 = scalar_lea.vmem [#allocation4], %s752
        %s754 = smul.u32 16, %s20
        %s755 = smul.u32 16, %s20
        loop: start=0, step=1, limit=8
        $region75: #{gcn_ffn.1} parent=69 // loop_pre_header
          _
        $region76: #{gcn_ffn.1} parent=69 // loop_header
          %s757 = sphi 0, %s761
          %p758 = scmp.ge.s32.totalorder %s757, 8
        $region77: #{gcn_ffn.1} parent=69 // loop_header_branch
          %760 = sbr.rel (%p758) target = $region81
        $region78: #{gcn_ffn.1} parent=69 // loop_body
          %s762 = smul.u32 %s757, 16
          %s763 = scalar_lea.vmem %s732, %s762 [#allocation3]
          %v764 = vld [vmem:[%s763] sm:$0xff]
          %v765 = vld [vmem:[%s763 + $0x8] sm:$0xff]
          %v766 = vld [vmem:[%s763 + $0x80] sm:$0xff]
          %v767 = vld [vmem:[%s763 + $0x88] sm:$0xff]
          %v768 = vld [vmem:[%s763 + $0x100] sm:$0xff]
          %v769 = vld [vmem:[%s763 + $0x108] sm:$0xff]
          %v770 = vld [vmem:[%s763 + $0x180] sm:$0xff]
          %v771 = vld [vmem:[%s763 + $0x188] sm:$0xff]
          %v772 = vld [vmem:[%s763 + $0x200] sm:$0xff]
          %v773 = vld [vmem:[%s763 + $0x208] sm:$0xff]
          %v774 = vld [vmem:[%s763 + $0x280] sm:$0xff]
          %v775 = vld [vmem:[%s763 + $0x288] sm:$0xff]
          %v776 = vld [vmem:[%s763 + $0x300] sm:$0xff]
          %v777 = vld [vmem:[%s763 + $0x308] sm:$0xff]
          %v778 = vld [vmem:[%s763 + $0x380] sm:$0xff]
          %v779 = vld [vmem:[%s763 + $0x388] sm:$0xff]
          %vm780 = vcmask 261120
          %v782 = vsel %vm780, %v764, 0
          %v785 = vsel %vm780, %v765, 0
          %v788 = vsel %vm780, %v766, 0
          %v791 = vsel %vm780, %v767, 0
          %v794 = vsel %vm780, %v768, 0
          %v797 = vsel %vm780, %v769, 0
          %v800 = vsel %vm780, %v770, 0
          %v803 = vsel %vm780, %v771, 0
          %v806 = vsel %vm780, %v772, 0
          %v809 = vsel %vm780, %v773, 0
          %v812 = vsel %vm780, %v774, 0
          %v815 = vsel %vm780, %v775, 0
          %v818 = vsel %vm780, %v776, 0
          %v821 = vsel %vm780, %v777, 0
          %v824 = vsel %vm780, %v778, 0
          %v827 = vsel %vm780, %v779, 0
          %829 = vmatprep.subr.mxu0 0.0
          %830 = vmatpush1.xpose.msra.mxu0 %v827
          %831 = vmatprep.subr.mxu0 0.0
          %832 = vmatpush1.xpose.msra.mxu0 %v824
          %833 = vmatprep.subr.mxu0 0.0
          %834 = vmatpush1.xpose.msra.mxu0 %v821
          %835 = vmatprep.subr.mxu0 0.0
          %836 = vmatpush1.xpose.msra.mxu0 %v818
          %837 = vmatprep.subr.mxu0 0.0
          %838 = vmatpush1.xpose.msra.mxu0 %v815
          %839 = vmatprep.subr.mxu0 0.0
          %840 = vmatpush1.xpose.msra.mxu0 %v812
          %841 = vmatprep.subr.mxu0 0.0
          %842 = vmatpush1.xpose.msra.mxu0 %v809
          %843 = vmatprep.subr.mxu0 0.0
          %844 = vmatpush1.xpose.msra.mxu0 %v806
          %845 = vmatprep.subr.mxu0 0.0
          %846 = vmatpush1.xpose.msra.mxu0 %v803
          %847 = vmatprep.subr.mxu0 0.0
          %848 = vmatpush1.xpose.msra.mxu0 %v800
          %849 = vmatprep.subr.mxu0 0.0
          %850 = vmatpush1.xpose.msra.mxu0 %v797
          %851 = vmatprep.subr.mxu0 0.0
          %852 = vmatpush1.xpose.msra.mxu0 %v794
          %853 = vmatprep.subr.mxu0 0.0
          %854 = vmatpush1.xpose.msra.mxu0 %v791
          %855 = vmatprep.subr.mxu0 0.0
          %856 = vmatpush1.xpose.msra.mxu0 %v788
          %857 = vmatprep.subr.mxu0 0.0
          %858 = vmatpush1.xpose.msra.mxu0 %v785
          %859 = vmatprep.subr.mxu0 0.0
          %860 = vmatpush1.xpose.msra.mxu0 %v782
          %861 = vmatprep.subr.mxu0 0.0
          %862 = vmatpush2.xpose.msra.mxu0 0.0
          %863 = vmatprep.subr.mxu0 0.0
          %864 = vmatpush2.xpose.msra.mxu0 0.0
          %865 = vmatprep.subr.mxu0 0.0
          %866 = vmatpush2.xpose.msra.mxu0 0.0
          %867 = vmatprep.subr.mxu0 0.0
          %868 = vmatpush2.xpose.msra.mxu0 0.0
          %869 = vmatprep.subr.mxu0 0.0
          %870 = vmatpush2.xpose.msra.mxu0 0.0
          %871 = vmatprep.subr.mxu0 0.0
          %872 = vmatpush2.xpose.msra.mxu0 0.0
          %873 = vmatprep.subr.mxu0 0.0
          %874 = vmatpush2.xpose.msra.mxu0 0.0
          %875 = vmatprep.subr.mxu0 0.0
          %876 = vmatpush2.xpose.msra.mxu0 0.0
          %877 = vmatprep.subr.mxu0 0.0
          %878 = vmatpush2.xpose.msra.mxu0 0.0
          %879 = vmatprep.subr.mxu0 0.0
          %880 = vmatpush2.xpose.msra.mxu0 0.0
          %881 = vmatprep.subr.mxu0 0.0
          %882 = vmatpush2.xpose.msra.mxu0 0.0
          %883 = vmatprep.subr.mxu0 0.0
          %884 = vmatpush2.xpose.msra.mxu0 0.0
          %885 = vmatprep.subr.mxu0 0.0
          %886 = vmatpush2.xpose.msra.mxu0 0.0
          %887 = vmatprep.subr.mxu0 0.0
          %888 = vmatpush2.xpose.msra.mxu0 0.0
          %889 = vmatprep.subr.mxu0 0.0
          %890 = vmatpush2.xpose.msra.mxu0 0.0
          %891 = vmatprep.subr.mxu0 0.0
          %892 = vmatpush2.xpose.msra.mxu0 0.0
          %893 = vmatprep.mubr.f32.mxu0 0.0
          %894 = vmatmul.mubr.f32.gmra.mxu0 %v782
          %v895 = vpop.f32.mrf.mxu0
          %v896 = vadd.f32 0.0, %v895
          %v897 = vpop.f32.mrf.mxu0
          %898 = vmatprep.mubr.f32.mxu0 0.0
          %899 = vmatmul.mubr.f32.gmra.mxu0 %v785
          %v900 = vpop.f32.mrf.mxu0
          %v901 = vadd.f32 0.0, %v900
          %v902 = vpop.f32.mrf.mxu0
          %903 = vmatprep.mubr.f32.mxu0 0.0
          %904 = vmatmul.mubr.f32.gmra.mxu0 %v788
          %v905 = vpop.f32.mrf.mxu0
          %v906 = vadd.f32 0.0, %v905
          %v907 = vpop.f32.mrf.mxu0
          %908 = vmatprep.mubr.f32.mxu0 0.0
          %909 = vmatmul.mubr.f32.gmra.mxu0 %v791
          %v910 = vpop.f32.mrf.mxu0
          %v911 = vadd.f32 0.0, %v910
          %v912 = vpop.f32.mrf.mxu0
          %913 = vmatprep.mubr.f32.mxu0 0.0
          %914 = vmatmul.mubr.f32.gmra.mxu0 %v794
          %v915 = vpop.f32.mrf.mxu0
          %v916 = vadd.f32 0.0, %v915
          %v917 = vpop.f32.mrf.mxu0
          %918 = vmatprep.mubr.f32.mxu0 0.0
          %919 = vmatmul.mubr.f32.gmra.mxu0 %v797
          %v920 = vpop.f32.mrf.mxu0
          %v921 = vadd.f32 0.0, %v920
          %v922 = vpop.f32.mrf.mxu0
          %923 = vmatprep.mubr.f32.mxu0 0.0
          %924 = vmatmul.mubr.f32.gmra.mxu0 %v800
          %v925 = vpop.f32.mrf.mxu0
          %v926 = vadd.f32 0.0, %v925
          %v927 = vpop.f32.mrf.mxu0
          %928 = vmatprep.mubr.f32.mxu0 0.0
          %929 = vmatmul.mubr.f32.gmra.mxu0 %v803
          %v930 = vpop.f32.mrf.mxu0
          %v931 = vadd.f32 0.0, %v930
          %v932 = vpop.f32.mrf.mxu0
          %933 = vmatprep.mubr.f32.mxu0 0.0
          %934 = vmatmul.mubr.f32.gmra.mxu0 %v806
          %v935 = vpop.f32.mrf.mxu0
          %v936 = vadd.f32 0.0, %v935
          %v937 = vpop.f32.mrf.mxu0
          %938 = vmatprep.mubr.f32.mxu0 0.0
          %939 = vmatmul.mubr.f32.gmra.mxu0 %v809
          %v940 = vpop.f32.mrf.mxu0
          %v941 = vadd.f32 0.0, %v940
          %v942 = vpop.f32.mrf.mxu0
          %943 = vmatprep.mubr.f32.mxu0 0.0
          %944 = vmatmul.mubr.f32.gmra.mxu0 %v812
          %v945 = vpop.f32.mrf.mxu0
          %v946 = vadd.f32 0.0, %v945
          %v947 = vpop.f32.mrf.mxu0
          %948 = vmatprep.mubr.f32.mxu0 0.0
          %949 = vmatmul.mubr.f32.gmra.mxu0 %v815
          %v950 = vpop.f32.mrf.mxu0
          %v951 = vadd.f32 0.0, %v950
          %v952 = vpop.f32.mrf.mxu0
          %953 = vmatprep.mubr.f32.mxu0 0.0
          %954 = vmatmul.mubr.f32.gmra.mxu0 %v818
          %v955 = vpop.f32.mrf.mxu0
          %v956 = vadd.f32 0.0, %v955
          %v957 = vpop.f32.mrf.mxu0
          %958 = vmatprep.mubr.f32.mxu0 0.0
          %959 = vmatmul.mubr.f32.gmra.mxu0 %v821
          %v960 = vpop.f32.mrf.mxu0
          %v961 = vadd.f32 0.0, %v960
          %v962 = vpop.f32.mrf.mxu0
          %963 = vmatprep.mubr.f32.mxu0 0.0
          %964 = vmatmul.mubr.f32.gmra.mxu0 %v824
          %v965 = vpop.f32.mrf.mxu0
          %v966 = vadd.f32 0.0, %v965
          %v967 = vpop.f32.mrf.mxu0
          %968 = vmatprep.mubr.f32.mxu0 0.0
          %969 = vmatmul.mubr.f32.gmra.mxu0 %v827
          %v970 = vpop.f32.mrf.mxu0
          %v971 = vadd.f32 0.0, %v970
          %v972 = vpop.f32.mrf.mxu0
          %973 = vdwg.mxu0
          %v974 = vmul.f32 %v896, 0.17677669
          %v975 = vmul.f32 %v901, 0.17677669
          %v976 = vmul.f32 %v906, 0.17677669
          %v977 = vmul.f32 %v911, 0.17677669
          %v978 = vmul.f32 %v916, 0.17677669
          %v979 = vmul.f32 %v921, 0.17677669
          %v980 = vmul.f32 %v926, 0.17677669
          %v981 = vmul.f32 %v931, 0.17677669
          %v982 = vmul.f32 %v936, 0.17677669
          %v983 = vmul.f32 %v941, 0.17677669
          %v984 = vmul.f32 %v946, 0.17677669
          %v985 = vmul.f32 %v951, 0.17677669
          %v986 = vmul.f32 %v956, 0.17677669
          %v987 = vmul.f32 %v961, 0.17677669
          %v988 = vmul.f32 %v966, 0.17677669
          %v989 = vmul.f32 %v971, 0.17677669
          %v990 = vld [vmem:[%s1] sm:$0xff]
          %v991 = vld [vmem:[%s1 + $0x8] sm:$0xff]
          %v992 = vld [vmem:[%s1 + $0x10] sm:$0xff]
          %v993 = vld [vmem:[%s1 + $0x18] sm:$0xff]
          %v994 = vld [vmem:[%s1 + $0x20] sm:$0xff]
          %v995 = vld [vmem:[%s1 + $0x28] sm:$0xff]
          %v996 = vld [vmem:[%s1 + $0x30] sm:$0xff]
          %v997 = vld [vmem:[%s1 + $0x38] sm:$0xff]
          %v998 = vld [vmem:[%s1 + $0x40] sm:$0xff]
          %v999 = vld [vmem:[%s1 + $0x48] sm:$0xff]
          %v1000 = vld [vmem:[%s1 + $0x50] sm:$0xff]
          %v1001 = vld [vmem:[%s1 + $0x58] sm:$0xff]
          %v1002 = vld [vmem:[%s1 + $0x60] sm:$0xff]
          %v1003 = vld [vmem:[%s1 + $0x68] sm:$0xff]
          %v1004 = vld [vmem:[%s1 + $0x70] sm:$0xff]
          %v1005 = vld [vmem:[%s1 + $0x78] sm:$0xff]
          %v1006 = vadd.f32 %v974, %v990
          %v1007 = vadd.f32 %v975, %v991
          %v1008 = vadd.f32 %v976, %v992
          %v1009 = vadd.f32 %v977, %v993
          %v1010 = vadd.f32 %v978, %v994
          %v1011 = vadd.f32 %v979, %v995
          %v1012 = vadd.f32 %v980, %v996
          %v1013 = vadd.f32 %v981, %v997
          %v1014 = vadd.f32 %v982, %v998
          %v1015 = vadd.f32 %v983, %v999
          %v1016 = vadd.f32 %v984, %v1000
          %v1017 = vadd.f32 %v985, %v1001
          %v1018 = vadd.f32 %v986, %v1002
          %v1019 = vadd.f32 %v987, %v1003
          %v1020 = vadd.f32 %v988, %v1004
          %v1021 = vadd.f32 %v989, %v1005
          %1022 = vmax.xlane.f32.xlu0 %v1006
          %v1023 = vpop.xlane.xlu0 %1022
          %1024 = vmax.xlane.f32.xlu0 %v1007
          %v1025 = vpop.xlane.xlu0 %1024
          %1026 = vmax.xlane.f32.xlu0 %v1008
          %v1027 = vpop.xlane.xlu0 %1026
          %1028 = vmax.xlane.f32.xlu0 %v1009
          %v1029 = vpop.xlane.xlu0 %1028
          %1030 = vmax.xlane.f32.xlu0 %v1010
          %v1031 = vpop.xlane.xlu0 %1030
          %1032 = vmax.xlane.f32.xlu0 %v1011
          %v1033 = vpop.xlane.xlu0 %1032
          %1034 = vmax.xlane.f32.xlu0 %v1012
          %v1035 = vpop.xlane.xlu0 %1034
          %1036 = vmax.xlane.f32.xlu0 %v1013
          %v1037 = vpop.xlane.xlu0 %1036
          %1038 = vmax.xlane.f32.xlu0 %v1014
          %v1039 = vpop.xlane.xlu0 %1038
          %1040 = vmax.xlane.f32.xlu0 %v1015
          %v1041 = vpop.xlane.xlu0 %1040
          %1042 = vmax.xlane.f32.xlu0 %v1016
          %v1043 = vpop.xlane.xlu0 %1042
          %1044 = vmax.xlane.f32.xlu0 %v1017
          %v1045 = vpop.xlane.xlu0 %1044
          %1046 = vmax.xlane.f32.xlu0 %v1018
          %v1047 = vpop.xlane.xlu0 %1046
          %1048 = vmax.xlane.f32.xlu0 %v1019
          %v1049 = vpop.xlane.xlu0 %1048
          %1050 = vmax.xlane.f32.xlu0 %v1020
          %v1051 = vpop.xlane.xlu0 %1050
          %1052 = vmax.xlane.f32.xlu0 %v1021
          %v1053 = vpop.xlane.xlu0 %1052
          %v1054 = vsub.f32 %v1006, %v1023
          %v1055 = vsub.f32 %v1007, %v1025
          %v1056 = vsub.f32 %v1008, %v1027
          %v1057 = vsub.f32 %v1009, %v1029
          %v1058 = vsub.f32 %v1010, %v1031
          %v1059 = vsub.f32 %v1011, %v1033
          %v1060 = vsub.f32 %v1012, %v1035
          %v1061 = vsub.f32 %v1013, %v1037
          %v1062 = vsub.f32 %v1014, %v1039
          %v1063 = vsub.f32 %v1015, %v1041
          %v1064 = vsub.f32 %v1016, %v1043
          %v1065 = vsub.f32 %v1017, %v1045
          %v1066 = vsub.f32 %v1018, %v1047
          %v1067 = vsub.f32 %v1019, %v1049
          %v1068 = vsub.f32 %v1020, %v1051
          %v1069 = vsub.f32 %v1021, %v1053
          %v1070 = vmul.f32 %v1054, 1.442695
          %v1071 = vpow.pop %v1070
          %v1072 = vmul.f32 %v1055, 1.442695
          %v1073 = vpow.pop %v1072
          %v1074 = vmul.f32 %v1056, 1.442695
          %v1075 = vpow.pop %v1074
          %v1076 = vmul.f32 %v1057, 1.442695
          %v1077 = vpow.pop %v1076
          %v1078 = vmul.f32 %v1058, 1.442695
          %v1079 = vpow.pop %v1078
          %v1080 = vmul.f32 %v1059, 1.442695
          %v1081 = vpow.pop %v1080
          %v1082 = vmul.f32 %v1060, 1.442695
          %v1083 = vpow.pop %v1082
          %v1084 = vmul.f32 %v1061, 1.442695
          %v1085 = vpow.pop %v1084
          %v1086 = vmul.f32 %v1062, 1.442695
          %v1087 = vpow.pop %v1086
          %v1088 = vmul.f32 %v1063, 1.442695
          %v1089 = vpow.pop %v1088
          %v1090 = vmul.f32 %v1064, 1.442695
          %v1091 = vpow.pop %v1090
          %v1092 = vmul.f32 %v1065, 1.442695
          %v1093 = vpow.pop %v1092
          %v1094 = vmul.f32 %v1066, 1.442695
          %v1095 = vpow.pop %v1094
          %v1096 = vmul.f32 %v1067, 1.442695
          %v1097 = vpow.pop %v1096
          %v1098 = vmul.f32 %v1068, 1.442695
          %v1099 = vpow.pop %v1098
          %v1100 = vmul.f32 %v1069, 1.442695
          %v1101 = vpow.pop %v1100
          %1102 = vmatprep.subr.mxu0 0.0
          %1103 = vmatpush1.msra.mxu0 1.0
          %1104 = vmatprep.subr.mxu0 0.0
          %1105 = vmatpush1.msra.mxu0 1.0
          %1106 = vmatprep.subr.mxu0 0.0
          %1107 = vmatpush1.msra.mxu0 1.0
          %1108 = vmatprep.subr.mxu0 0.0
          %1109 = vmatpush1.msra.mxu0 1.0
          %1110 = vmatprep.subr.mxu0 0.0
          %1111 = vmatpush1.msra.mxu0 1.0
          %1112 = vmatprep.subr.mxu0 0.0
          %1113 = vmatpush1.msra.mxu0 1.0
          %1114 = vmatprep.subr.mxu0 0.0
          %1115 = vmatpush1.msra.mxu0 1.0
          %1116 = vmatprep.subr.mxu0 0.0
          %1117 = vmatpush1.msra.mxu0 1.0
          %1118 = vmatprep.subr.mxu0 0.0
          %1119 = vmatpush1.msra.mxu0 1.0
          %1120 = vmatprep.subr.mxu0 0.0
          %1121 = vmatpush1.msra.mxu0 1.0
          %1122 = vmatprep.subr.mxu0 0.0
          %1123 = vmatpush1.msra.mxu0 1.0
          %1124 = vmatprep.subr.mxu0 0.0
          %1125 = vmatpush1.msra.mxu0 1.0
          %1126 = vmatprep.subr.mxu0 0.0
          %1127 = vmatpush1.msra.mxu0 1.0
          %1128 = vmatprep.subr.mxu0 0.0
          %1129 = vmatpush1.msra.mxu0 1.0
          %1130 = vmatprep.subr.mxu0 0.0
          %1131 = vmatpush1.msra.mxu0 1.0
          %1132 = vmatprep.subr.mxu0 0.0
          %1133 = vmatpush1.msra.mxu0 1.0
          %1134 = vmatprep.subr.mxu0 0.0
          %1135 = vmatpush2.msra.mxu0 0.0
          %1136 = vmatprep.subr.mxu0 0.0
          %1137 = vmatpush2.msra.mxu0 0.0
          %1138 = vmatprep.subr.mxu0 0.0
          %1139 = vmatpush2.msra.mxu0 0.0
          %1140 = vmatprep.subr.mxu0 0.0
          %1141 = vmatpush2.msra.mxu0 0.0
          %1142 = vmatprep.subr.mxu0 0.0
          %1143 = vmatpush2.msra.mxu0 0.0
          %1144 = vmatprep.subr.mxu0 0.0
          %1145 = vmatpush2.msra.mxu0 0.0
          %1146 = vmatprep.subr.mxu0 0.0
          %1147 = vmatpush2.msra.mxu0 0.0
          %1148 = vmatprep.subr.mxu0 0.0
          %1149 = vmatpush2.msra.mxu0 0.0
          %1150 = vmatprep.subr.mxu0 0.0
          %1151 = vmatpush2.msra.mxu0 0.0
          %1152 = vmatprep.subr.mxu0 0.0
          %1153 = vmatpush2.msra.mxu0 0.0
          %1154 = vmatprep.subr.mxu0 0.0
          %1155 = vmatpush2.msra.mxu0 0.0
          %1156 = vmatprep.subr.mxu0 0.0
          %1157 = vmatpush2.msra.mxu0 0.0
          %1158 = vmatprep.subr.mxu0 0.0
          %1159 = vmatpush2.msra.mxu0 0.0
          %1160 = vmatprep.subr.mxu0 0.0
          %1161 = vmatpush2.msra.mxu0 0.0
          %1162 = vmatprep.subr.mxu0 0.0
          %1163 = vmatpush2.msra.mxu0 0.0
          %1164 = vmatprep.subr.mxu0 0.0
          %1165 = vmatpush2.msra.mxu0 0.0
          %1166 = vmatprep.mubr.f32.mxu0 0.0
          %1167 = vmatmul.mubr.f32.gmra.mxu0 %v1071
          %v1168 = vpop.f32.mrf.mxu0
          %v1169 = vadd.f32 0.0, %v1168
          %v1170 = vpop.f32.mrf.mxu0
          %1171 = vmatprep.mubr.f32.mxu0 0.0
          %1172 = vmatmul.mubr.f32.gmra.mxu0 %v1073
          %v1173 = vpop.f32.mrf.mxu0
          %v1174 = vadd.f32 0.0, %v1173
          %v1175 = vpop.f32.mrf.mxu0
          %1176 = vmatprep.mubr.f32.mxu0 0.0
          %1177 = vmatmul.mubr.f32.gmra.mxu0 %v1075
          %v1178 = vpop.f32.mrf.mxu0
          %v1179 = vadd.f32 0.0, %v1178
          %v1180 = vpop.f32.mrf.mxu0
          %1181 = vmatprep.mubr.f32.mxu0 0.0
          %1182 = vmatmul.mubr.f32.gmra.mxu0 %v1077
          %v1183 = vpop.f32.mrf.mxu0
          %v1184 = vadd.f32 0.0, %v1183
          %v1185 = vpop.f32.mrf.mxu0
          %1186 = vmatprep.mubr.f32.mxu0 0.0
          %1187 = vmatmul.mubr.f32.gmra.mxu0 %v1079
          %v1188 = vpop.f32.mrf.mxu0
          %v1189 = vadd.f32 0.0, %v1188
          %v1190 = vpop.f32.mrf.mxu0
          %1191 = vmatprep.mubr.f32.mxu0 0.0
          %1192 = vmatmul.mubr.f32.gmra.mxu0 %v1081
          %v1193 = vpop.f32.mrf.mxu0
          %v1194 = vadd.f32 0.0, %v1193
          %v1195 = vpop.f32.mrf.mxu0
          %1196 = vmatprep.mubr.f32.mxu0 0.0
          %1197 = vmatmul.mubr.f32.gmra.mxu0 %v1083
          %v1198 = vpop.f32.mrf.mxu0
          %v1199 = vadd.f32 0.0, %v1198
          %v1200 = vpop.f32.mrf.mxu0
          %1201 = vmatprep.mubr.f32.mxu0 0.0
          %1202 = vmatmul.mubr.f32.gmra.mxu0 %v1085
          %v1203 = vpop.f32.mrf.mxu0
          %v1204 = vadd.f32 0.0, %v1203
          %v1205 = vpop.f32.mrf.mxu0
          %1206 = vmatprep.mubr.f32.mxu0 0.0
          %1207 = vmatmul.mubr.f32.gmra.mxu0 %v1087
          %v1208 = vpop.f32.mrf.mxu0
          %v1209 = vadd.f32 0.0, %v1208
          %v1210 = vpop.f32.mrf.mxu0
          %1211 = vmatprep.mubr.f32.mxu0 0.0
          %1212 = vmatmul.mubr.f32.gmra.mxu0 %v1089
          %v1213 = vpop.f32.mrf.mxu0
          %v1214 = vadd.f32 0.0, %v1213
          %v1215 = vpop.f32.mrf.mxu0
          %1216 = vmatprep.mubr.f32.mxu0 0.0
          %1217 = vmatmul.mubr.f32.gmra.mxu0 %v1091
          %v1218 = vpop.f32.mrf.mxu0
          %v1219 = vadd.f32 0.0, %v1218
          %v1220 = vpop.f32.mrf.mxu0
          %1221 = vmatprep.mubr.f32.mxu0 0.0
          %1222 = vmatmul.mubr.f32.gmra.mxu0 %v1093
          %v1223 = vpop.f32.mrf.mxu0
          %v1224 = vadd.f32 0.0, %v1223
          %v1225 = vpop.f32.mrf.mxu0
          %1226 = vmatprep.mubr.f32.mxu0 0.0
          %1227 = vmatmul.mubr.f32.gmra.mxu0 %v1095
          %v1228 = vpop.f32.mrf.mxu0
          %v1229 = vadd.f32 0.0, %v1228
          %v1230 = vpop.f32.mrf.mxu0
          %1231 = vmatprep.mubr.f32.mxu0 0.0
          %1232 = vmatmul.mubr.f32.gmra.mxu0 %v1097
          %v1233 = vpop.f32.mrf.mxu0
          %v1234 = vadd.f32 0.0, %v1233
          %v1235 = vpop.f32.mrf.mxu0
          %1236 = vmatprep.mubr.f32.mxu0 0.0
          %1237 = vmatmul.mubr.f32.gmra.mxu0 %v1099
          %v1238 = vpop.f32.mrf.mxu0
          %v1239 = vadd.f32 0.0, %v1238
          %v1240 = vpop.f32.mrf.mxu0
          %1241 = vmatprep.mubr.f32.mxu0 0.0
          %1242 = vmatmul.mubr.f32.gmra.mxu0 %v1101
          %v1243 = vpop.f32.mrf.mxu0
          %v1244 = vadd.f32 0.0, %v1243
          %v1245 = vpop.f32.mrf.mxu0
          %1246 = vdwg.mxu0
          %v1247 = vld [vmem:[%s2] sm:$0xff]
          %v1248 = vld [vmem:[%s2 + $0x8] sm:$0xff]
          %v1249 = vld [vmem:[%s2 + $0x10] sm:$0xff]
          %v1250 = vld [vmem:[%s2 + $0x18] sm:$0xff]
          %v1251 = vld [vmem:[%s2 + $0x20] sm:$0xff]
          %v1252 = vld [vmem:[%s2 + $0x28] sm:$0xff]
          %v1253 = vld [vmem:[%s2 + $0x30] sm:$0xff]
          %v1254 = vld [vmem:[%s2 + $0x38] sm:$0xff]
          %v1255 = vld [vmem:[%s2 + $0x40] sm:$0xff]
          %v1256 = vld [vmem:[%s2 + $0x48] sm:$0xff]
          %v1257 = vld [vmem:[%s2 + $0x50] sm:$0xff]
          %v1258 = vld [vmem:[%s2 + $0x58] sm:$0xff]
          %v1259 = vld [vmem:[%s2 + $0x60] sm:$0xff]
          %v1260 = vld [vmem:[%s2 + $0x68] sm:$0xff]
          %v1261 = vld [vmem:[%s2 + $0x70] sm:$0xff]
          %v1262 = vld [vmem:[%s2 + $0x78] sm:$0xff]
          %v1263 = vmul.f32 %v1071, %v1247
          %v1264 = vmul.f32 %v1073, %v1248
          %v1265 = vmul.f32 %v1075, %v1249
          %v1266 = vmul.f32 %v1077, %v1250
          %v1267 = vmul.f32 %v1079, %v1251
          %v1268 = vmul.f32 %v1081, %v1252
          %v1269 = vmul.f32 %v1083, %v1253
          %v1270 = vmul.f32 %v1085, %v1254
          %v1271 = vmul.f32 %v1087, %v1255
          %v1272 = vmul.f32 %v1089, %v1256
          %v1273 = vmul.f32 %v1091, %v1257
          %v1274 = vmul.f32 %v1093, %v1258
          %v1275 = vmul.f32 %v1095, %v1259
          %v1276 = vmul.f32 %v1097, %v1260
          %v1277 = vmul.f32 %v1099, %v1261
          %v1278 = vmul.f32 %v1101, %v1262
          %1279 = vmatprep.subr.mxu0 0.0
          %1280 = vmatpush1.msra.mxu0 %v779
          %1281 = vmatprep.subr.mxu0 0.0
          %1282 = vmatpush1.msra.mxu0 %v778
          %1283 = vmatprep.subr.mxu0 0.0
          %1284 = vmatpush1.msra.mxu0 %v777
          %1285 = vmatprep.subr.mxu0 0.0
          %1286 = vmatpush1.msra.mxu0 %v776
          %1287 = vmatprep.subr.mxu0 0.0
          %1288 = vmatpush1.msra.mxu0 %v775
          %1289 = vmatprep.subr.mxu0 0.0
          %1290 = vmatpush1.msra.mxu0 %v774
          %1291 = vmatprep.subr.mxu0 0.0
          %1292 = vmatpush1.msra.mxu0 %v773
          %1293 = vmatprep.subr.mxu0 0.0
          %1294 = vmatpush1.msra.mxu0 %v772
          %1295 = vmatprep.subr.mxu0 0.0
          %1296 = vmatpush1.msra.mxu0 %v771
          %1297 = vmatprep.subr.mxu0 0.0
          %1298 = vmatpush1.msra.mxu0 %v770
          %1299 = vmatprep.subr.mxu0 0.0
          %1300 = vmatpush1.msra.mxu0 %v769
          %1301 = vmatprep.subr.mxu0 0.0
          %1302 = vmatpush1.msra.mxu0 %v768
          %1303 = vmatprep.subr.mxu0 0.0
          %1304 = vmatpush1.msra.mxu0 %v767
          %1305 = vmatprep.subr.mxu0 0.0
          %1306 = vmatpush1.msra.mxu0 %v766
          %1307 = vmatprep.subr.mxu0 0.0
          %1308 = vmatpush1.msra.mxu0 %v765
          %1309 = vmatprep.subr.mxu0 0.0
          %1310 = vmatpush1.msra.mxu0 %v764
          %1311 = vmatprep.subr.mxu0 0.0
          %1312 = vmatpush2.msra.mxu0 0.0
          %1313 = vmatprep.subr.mxu0 0.0
          %1314 = vmatpush2.msra.mxu0 0.0
          %1315 = vmatprep.subr.mxu0 0.0
          %1316 = vmatpush2.msra.mxu0 0.0
          %1317 = vmatprep.subr.mxu0 0.0
          %1318 = vmatpush2.msra.mxu0 0.0
          %1319 = vmatprep.subr.mxu0 0.0
          %1320 = vmatpush2.msra.mxu0 0.0
          %1321 = vmatprep.subr.mxu0 0.0
          %1322 = vmatpush2.msra.mxu0 0.0
          %1323 = vmatprep.subr.mxu0 0.0
          %1324 = vmatpush2.msra.mxu0 0.0
          %1325 = vmatprep.subr.mxu0 0.0
          %1326 = vmatpush2.msra.mxu0 0.0
          %1327 = vmatprep.subr.mxu0 0.0
          %1328 = vmatpush2.msra.mxu0 0.0
          %1329 = vmatprep.subr.mxu0 0.0
          %1330 = vmatpush2.msra.mxu0 0.0
          %1331 = vmatprep.subr.mxu0 0.0
          %1332 = vmatpush2.msra.mxu0 0.0
          %1333 = vmatprep.subr.mxu0 0.0
          %1334 = vmatpush2.msra.mxu0 0.0
          %1335 = vmatprep.subr.mxu0 0.0
          %1336 = vmatpush2.msra.mxu0 0.0
          %1337 = vmatprep.subr.mxu0 0.0
          %1338 = vmatpush2.msra.mxu0 0.0
          %1339 = vmatprep.subr.mxu0 0.0
          %1340 = vmatpush2.msra.mxu0 0.0
          %1341 = vmatprep.subr.mxu0 0.0
          %1342 = vmatpush2.msra.mxu0 0.0
          %1343 = vmatprep.mubr.f32.mxu0 0.0
          %1344 = vmatmul.mubr.f32.gmra.mxu0 %v1263
          %v1345 = vpop.f32.mrf.mxu0
          %v1346 = vadd.f32 0.0, %v1345
          %v1347 = vpop.f32.mrf.mxu0
          %1348 = vmatprep.mubr.f32.mxu0 0.0
          %1349 = vmatmul.mubr.f32.gmra.mxu0 %v1264
          %v1350 = vpop.f32.mrf.mxu0
          %v1351 = vadd.f32 0.0, %v1350
          %v1352 = vpop.f32.mrf.mxu0
          %1353 = vmatprep.mubr.f32.mxu0 0.0
          %1354 = vmatmul.mubr.f32.gmra.mxu0 %v1265
          %v1355 = vpop.f32.mrf.mxu0
          %v1356 = vadd.f32 0.0, %v1355
          %v1357 = vpop.f32.mrf.mxu0
          %1358 = vmatprep.mubr.f32.mxu0 0.0
          %1359 = vmatmul.mubr.f32.gmra.mxu0 %v1266
          %v1360 = vpop.f32.mrf.mxu0
          %v1361 = vadd.f32 0.0, %v1360
          %v1362 = vpop.f32.mrf.mxu0
          %1363 = vmatprep.mubr.f32.mxu0 0.0
          %1364 = vmatmul.mubr.f32.gmra.mxu0 %v1267
          %v1365 = vpop.f32.mrf.mxu0
          %v1366 = vadd.f32 0.0, %v1365
          %v1367 = vpop.f32.mrf.mxu0
          %1368 = vmatprep.mubr.f32.mxu0 0.0
          %1369 = vmatmul.mubr.f32.gmra.mxu0 %v1268
          %v1370 = vpop.f32.mrf.mxu0
          %v1371 = vadd.f32 0.0, %v1370
          %v1372 = vpop.f32.mrf.mxu0
          %1373 = vmatprep.mubr.f32.mxu0 0.0
          %1374 = vmatmul.mubr.f32.gmra.mxu0 %v1269
          %v1375 = vpop.f32.mrf.mxu0
          %v1376 = vadd.f32 0.0, %v1375
          %v1377 = vpop.f32.mrf.mxu0
          %1378 = vmatprep.mubr.f32.mxu0 0.0
          %1379 = vmatmul.mubr.f32.gmra.mxu0 %v1270
          %v1380 = vpop.f32.mrf.mxu0
          %v1381 = vadd.f32 0.0, %v1380
          %v1382 = vpop.f32.mrf.mxu0
          %1383 = vmatprep.mubr.f32.mxu0 0.0
          %1384 = vmatmul.mubr.f32.gmra.mxu0 %v1271
          %v1385 = vpop.f32.mrf.mxu0
          %v1386 = vadd.f32 0.0, %v1385
          %v1387 = vpop.f32.mrf.mxu0
          %1388 = vmatprep.mubr.f32.mxu0 0.0
          %1389 = vmatmul.mubr.f32.gmra.mxu0 %v1272
          %v1390 = vpop.f32.mrf.mxu0
          %v1391 = vadd.f32 0.0, %v1390
          %v1392 = vpop.f32.mrf.mxu0
          %1393 = vmatprep.mubr.f32.mxu0 0.0
          %1394 = vmatmul.mubr.f32.gmra.mxu0 %v1273
          %v1395 = vpop.f32.mrf.mxu0
          %v1396 = vadd.f32 0.0, %v1395
          %v1397 = vpop.f32.mrf.mxu0
          %1398 = vmatprep.mubr.f32.mxu0 0.0
          %1399 = vmatmul.mubr.f32.gmra.mxu0 %v1274
          %v1400 = vpop.f32.mrf.mxu0
          %v1401 = vadd.f32 0.0, %v1400
          %v1402 = vpop.f32.mrf.mxu0
          %1403 = vmatprep.mubr.f32.mxu0 0.0
          %1404 = vmatmul.mubr.f32.gmra.mxu0 %v1275
          %v1405 = vpop.f32.mrf.mxu0
          %v1406 = vadd.f32 0.0, %v1405
          %v1407 = vpop.f32.mrf.mxu0
          %1408 = vmatprep.mubr.f32.mxu0 0.0
          %1409 = vmatmul.mubr.f32.gmra.mxu0 %v1276
          %v1410 = vpop.f32.mrf.mxu0
          %v1411 = vadd.f32 0.0, %v1410
          %v1412 = vpop.f32.mrf.mxu0
          %1413 = vmatprep.mubr.f32.mxu0 0.0
          %1414 = vmatmul.mubr.f32.gmra.mxu0 %v1277
          %v1415 = vpop.f32.mrf.mxu0
          %v1416 = vadd.f32 0.0, %v1415
          %v1417 = vpop.f32.mrf.mxu0
          %1418 = vmatprep.mubr.f32.mxu0 0.0
          %1419 = vmatmul.mubr.f32.gmra.mxu0 %v1278
          %v1420 = vpop.f32.mrf.mxu0
          %v1421 = vadd.f32 0.0, %v1420
          %v1422 = vpop.f32.mrf.mxu0
          %1423 = vdwg.mxu0
          %v1424 = vrcp.pop %v1169
          %v1425 = vrcp.pop %v1174
          %v1426 = vrcp.pop %v1179
          %v1427 = vrcp.pop %v1184
          %v1428 = vrcp.pop %v1189
          %v1429 = vrcp.pop %v1194
          %v1430 = vrcp.pop %v1199
          %v1431 = vrcp.pop %v1204
          %v1432 = vrcp.pop %v1209
          %v1433 = vrcp.pop %v1214
          %v1434 = vrcp.pop %v1219
          %v1435 = vrcp.pop %v1224
          %v1436 = vrcp.pop %v1229
          %v1437 = vrcp.pop %v1234
          %v1438 = vrcp.pop %v1239
          %v1439 = vrcp.pop %v1244
          %v1440 = vmul.f32 %v1346, %v1424
          %v1441 = vmul.f32 %v1351, %v1425
          %v1442 = vmul.f32 %v1356, %v1426
          %v1443 = vmul.f32 %v1361, %v1427
          %v1444 = vmul.f32 %v1366, %v1428
          %v1445 = vmul.f32 %v1371, %v1429
          %v1446 = vmul.f32 %v1376, %v1430
          %v1447 = vmul.f32 %v1381, %v1431
          %v1448 = vmul.f32 %v1386, %v1432
          %v1449 = vmul.f32 %v1391, %v1433
          %v1450 = vmul.f32 %v1396, %v1434
          %v1451 = vmul.f32 %v1401, %v1435
          %v1452 = vmul.f32 %v1406, %v1436
          %v1453 = vmul.f32 %v1411, %v1437
          %v1454 = vmul.f32 %v1416, %v1438
          %v1455 = vmul.f32 %v1421, %v1439
          %s1456 = scalar_lea.vmem [#allocation2], %s762
          %1457 = vst.msk [vmem:[%s1456] sm:$0xff] %vm780, %v1440
          %1458 = vst.msk [vmem:[%s1456 + $0x8] sm:$0xff] %vm780, %v1441
          %1459 = vst.msk [vmem:[%s1456 + $0x80] sm:$0xff] %vm780, %v1442
          %1460 = vst.msk [vmem:[%s1456 + $0x88] sm:$0xff] %vm780, %v1443
          %1461 = vst.msk [vmem:[%s1456 + $0x100] sm:$0xff] %vm780, %v1444
          %1462 = vst.msk [vmem:[%s1456 + $0x108] sm:$0xff] %vm780, %v1445
          %1463 = vst.msk [vmem:[%s1456 + $0x180] sm:$0xff] %vm780, %v1446
          %1464 = vst.msk [vmem:[%s1456 + $0x188] sm:$0xff] %vm780, %v1447
          %1465 = vst.msk [vmem:[%s1456 + $0x200] sm:$0xff] %vm780, %v1448
          %1466 = vst.msk [vmem:[%s1456 + $0x208] sm:$0xff] %vm780, %v1449
          %1467 = vst.msk [vmem:[%s1456 + $0x280] sm:$0xff] %vm780, %v1450
          %1468 = vst.msk [vmem:[%s1456 + $0x288] sm:$0xff] %vm780, %v1451
          %1469 = vst.msk [vmem:[%s1456 + $0x300] sm:$0xff] %vm780, %v1452
          %1470 = vst.msk [vmem:[%s1456 + $0x308] sm:$0xff] %vm780, %v1453
          %1471 = vst.msk [vmem:[%s1456 + $0x380] sm:$0xff] %vm780, %v1454
          %1472 = vst.msk [vmem:[%s1456 + $0x388] sm:$0xff] %vm780, %v1455
        $region79: #{gcn_ffn.1} parent=69 // loop_footer
          %s761 = sadd.s32 1, %s757
        $region80: #{gcn_ffn.1} parent=69 // loop_footer_branch
          %756 = sbr.rel target = $region76
        $region81: #{gcn_ffn.1} parent=69 // loop_exit
          _
        %v1473 = vld [vmem:[#allocation2] sm:$0xff]
        %v1474 = vld [vmem:[#allocation2 + $0x8] sm:$0xff]
        %v1475 = vld [vmem:[#allocation2 + $0x10] sm:$0xff]
        %v1476 = vld [vmem:[#allocation2 + $0x18] sm:$0xff]
        %v1477 = vld [vmem:[#allocation2 + $0x20] sm:$0xff]
        %v1478 = vld [vmem:[#allocation2 + $0x28] sm:$0xff]
        %v1479 = vld [vmem:[#allocation2 + $0x30] sm:$0xff]
        %v1480 = vld [vmem:[#allocation2 + $0x38] sm:$0xff]
        %v1481 = vld [vmem:[#allocation2 + $0x40] sm:$0xff]
        %v1482 = vld [vmem:[#allocation2 + $0x48] sm:$0xff]
        %v1483 = vld [vmem:[#allocation2 + $0x50] sm:$0xff]
        %v1484 = vld [vmem:[#allocation2 + $0x58] sm:$0xff]
        %v1485 = vld [vmem:[#allocation2 + $0x60] sm:$0xff]
        %v1486 = vld [vmem:[#allocation2 + $0x68] sm:$0xff]
        %v1487 = vld [vmem:[#allocation2 + $0x70] sm:$0xff]
        %v1488 = vld [vmem:[#allocation2 + $0x78] sm:$0xff]
        %v1489 = vld [vmem:[#allocation2 + $0x80] sm:$0xff]
        %v1490 = vld [vmem:[#allocation2 + $0x88] sm:$0xff]
        %v1491 = vld [vmem:[#allocation2 + $0x90] sm:$0xff]
        %v1492 = vld [vmem:[#allocation2 + $0x98] sm:$0xff]
        %v1493 = vld [vmem:[#allocation2 + $0xa0] sm:$0xff]
        %v1494 = vld [vmem:[#allocation2 + $0xa8] sm:$0xff]
        %v1495 = vld [vmem:[#allocation2 + $0xb0] sm:$0xff]
        %v1496 = vld [vmem:[#allocation2 + $0xb8] sm:$0xff]
        %v1497 = vld [vmem:[#allocation2 + $0xc0] sm:$0xff]
        %v1498 = vld [vmem:[#allocation2 + $0xc8] sm:$0xff]
        %v1499 = vld [vmem:[#allocation2 + $0xd0] sm:$0xff]
        %v1500 = vld [vmem:[#allocation2 + $0xd8] sm:$0xff]
        %v1501 = vld [vmem:[#allocation2 + $0xe0] sm:$0xff]
        %v1502 = vld [vmem:[#allocation2 + $0xe8] sm:$0xff]
        %v1503 = vld [vmem:[#allocation2 + $0xf0] sm:$0xff]
        %v1504 = vld [vmem:[#allocation2 + $0xf8] sm:$0xff]
        %v1505 = vld [vmem:[#allocation2 + $0x100] sm:$0xff]
        %v1506 = vld [vmem:[#allocation2 + $0x108] sm:$0xff]
        %v1507 = vld [vmem:[#allocation2 + $0x110] sm:$0xff]
        %v1508 = vld [vmem:[#allocation2 + $0x118] sm:$0xff]
        %v1509 = vld [vmem:[#allocation2 + $0x120] sm:$0xff]
        %v1510 = vld [vmem:[#allocation2 + $0x128] sm:$0xff]
        %v1511 = vld [vmem:[#allocation2 + $0x130] sm:$0xff]
        %v1512 = vld [vmem:[#allocation2 + $0x138] sm:$0xff]
        %v1513 = vld [vmem:[#allocation2 + $0x140] sm:$0xff]
        %v1514 = vld [vmem:[#allocation2 + $0x148] sm:$0xff]
        %v1515 = vld [vmem:[#allocation2 + $0x150] sm:$0xff]
        %v1516 = vld [vmem:[#allocation2 + $0x158] sm:$0xff]
        %v1517 = vld [vmem:[#allocation2 + $0x160] sm:$0xff]
        %v1518 = vld [vmem:[#allocation2 + $0x168] sm:$0xff]
        %v1519 = vld [vmem:[#allocation2 + $0x170] sm:$0xff]
        %v1520 = vld [vmem:[#allocation2 + $0x178] sm:$0xff]
        %v1521 = vld [vmem:[#allocation2 + $0x180] sm:$0xff]
        %v1522 = vld [vmem:[#allocation2 + $0x188] sm:$0xff]
        %v1523 = vld [vmem:[#allocation2 + $0x190] sm:$0xff]
        %v1524 = vld [vmem:[#allocation2 + $0x198] sm:$0xff]
        %v1525 = vld [vmem:[#allocation2 + $0x1a0] sm:$0xff]
        %v1526 = vld [vmem:[#allocation2 + $0x1a8] sm:$0xff]
        %v1527 = vld [vmem:[#allocation2 + $0x1b0] sm:$0xff]
        %v1528 = vld [vmem:[#allocation2 + $0x1b8] sm:$0xff]
        %v1529 = vld [vmem:[#allocation2 + $0x1c0] sm:$0xff]
        %v1530 = vld [vmem:[#allocation2 + $0x1c8] sm:$0xff]
        %v1531 = vld [vmem:[#allocation2 + $0x1d0] sm:$0xff]
        %v1532 = vld [vmem:[#allocation2 + $0x1d8] sm:$0xff]
        %v1533 = vld [vmem:[#allocation2 + $0x1e0] sm:$0xff]
        %v1534 = vld [vmem:[#allocation2 + $0x1e8] sm:$0xff]
        %v1535 = vld [vmem:[#allocation2 + $0x1f0] sm:$0xff]
        %v1536 = vld [vmem:[#allocation2 + $0x1f8] sm:$0xff]
        %v1537 = vld [vmem:[#allocation2 + $0x200] sm:$0xff]
        %v1538 = vld [vmem:[#allocation2 + $0x208] sm:$0xff]
        %v1539 = vld [vmem:[#allocation2 + $0x210] sm:$0xff]
        %v1540 = vld [vmem:[#allocation2 + $0x218] sm:$0xff]
        %v1541 = vld [vmem:[#allocation2 + $0x220] sm:$0xff]
        %v1542 = vld [vmem:[#allocation2 + $0x228] sm:$0xff]
        %v1543 = vld [vmem:[#allocation2 + $0x230] sm:$0xff]
        %v1544 = vld [vmem:[#allocation2 + $0x238] sm:$0xff]
        %v1545 = vld [vmem:[#allocation2 + $0x240] sm:$0xff]
        %v1546 = vld [vmem:[#allocation2 + $0x248] sm:$0xff]
        %v1547 = vld [vmem:[#allocation2 + $0x250] sm:$0xff]
        %v1548 = vld [vmem:[#allocation2 + $0x258] sm:$0xff]
        %v1549 = vld [vmem:[#allocation2 + $0x260] sm:$0xff]
        %v1550 = vld [vmem:[#allocation2 + $0x268] sm:$0xff]
        %v1551 = vld [vmem:[#allocation2 + $0x270] sm:$0xff]
        %v1552 = vld [vmem:[#allocation2 + $0x278] sm:$0xff]
        %v1553 = vld [vmem:[#allocation2 + $0x280] sm:$0xff]
        %v1554 = vld [vmem:[#allocation2 + $0x288] sm:$0xff]
        %v1555 = vld [vmem:[#allocation2 + $0x290] sm:$0xff]
        %v1556 = vld [vmem:[#allocation2 + $0x298] sm:$0xff]
        %v1557 = vld [vmem:[#allocation2 + $0x2a0] sm:$0xff]
        %v1558 = vld [vmem:[#allocation2 + $0x2a8] sm:$0xff]
        %v1559 = vld [vmem:[#allocation2 + $0x2b0] sm:$0xff]
        %v1560 = vld [vmem:[#allocation2 + $0x2b8] sm:$0xff]
        %v1561 = vld [vmem:[#allocation2 + $0x2c0] sm:$0xff]
        %v1562 = vld [vmem:[#allocation2 + $0x2c8] sm:$0xff]
        %v1563 = vld [vmem:[#allocation2 + $0x2d0] sm:$0xff]
        %v1564 = vld [vmem:[#allocation2 + $0x2d8] sm:$0xff]
        %v1565 = vld [vmem:[#allocation2 + $0x2e0] sm:$0xff]
        %v1566 = vld [vmem:[#allocation2 + $0x2e8] sm:$0xff]
        %v1567 = vld [vmem:[#allocation2 + $0x2f0] sm:$0xff]
        %v1568 = vld [vmem:[#allocation2 + $0x2f8] sm:$0xff]
        %v1569 = vld [vmem:[#allocation2 + $0x300] sm:$0xff]
        %v1570 = vld [vmem:[#allocation2 + $0x308] sm:$0xff]
        %v1571 = vld [vmem:[#allocation2 + $0x310] sm:$0xff]
        %v1572 = vld [vmem:[#allocation2 + $0x318] sm:$0xff]
        %v1573 = vld [vmem:[#allocation2 + $0x320] sm:$0xff]
        %v1574 = vld [vmem:[#allocation2 + $0x328] sm:$0xff]
        %v1575 = vld [vmem:[#allocation2 + $0x330] sm:$0xff]
        %v1576 = vld [vmem:[#allocation2 + $0x338] sm:$0xff]
        %v1577 = vld [vmem:[#allocation2 + $0x340] sm:$0xff]
        %v1578 = vld [vmem:[#allocation2 + $0x348] sm:$0xff]
        %v1579 = vld [vmem:[#allocation2 + $0x350] sm:$0xff]
        %v1580 = vld [vmem:[#allocation2 + $0x358] sm:$0xff]
        %v1581 = vld [vmem:[#allocation2 + $0x360] sm:$0xff]
        %v1582 = vld [vmem:[#allocation2 + $0x368] sm:$0xff]
        %v1583 = vld [vmem:[#allocation2 + $0x370] sm:$0xff]
        %v1584 = vld [vmem:[#allocation2 + $0x378] sm:$0xff]
        %v1585 = vld [vmem:[#allocation2 + $0x380] sm:$0xff]
        %v1586 = vld [vmem:[#allocation2 + $0x388] sm:$0xff]
        %v1587 = vld [vmem:[#allocation2 + $0x390] sm:$0xff]
        %v1588 = vld [vmem:[#allocation2 + $0x398] sm:$0xff]
        %v1589 = vld [vmem:[#allocation2 + $0x3a0] sm:$0xff]
        %v1590 = vld [vmem:[#allocation2 + $0x3a8] sm:$0xff]
        %v1591 = vld [vmem:[#allocation2 + $0x3b0] sm:$0xff]
        %v1592 = vld [vmem:[#allocation2 + $0x3b8] sm:$0xff]
        %v1593 = vld [vmem:[#allocation2 + $0x3c0] sm:$0xff]
        %v1594 = vld [vmem:[#allocation2 + $0x3c8] sm:$0xff]
        %v1595 = vld [vmem:[#allocation2 + $0x3d0] sm:$0xff]
        %v1596 = vld [vmem:[#allocation2 + $0x3d8] sm:$0xff]
        %v1597 = vld [vmem:[#allocation2 + $0x3e0] sm:$0xff]
        %v1598 = vld [vmem:[#allocation2 + $0x3e8] sm:$0xff]
        %v1599 = vld [vmem:[#allocation2 + $0x3f0] sm:$0xff]
        %v1600 = vld [vmem:[#allocation2 + $0x3f8] sm:$0xff]
        %v1601 = vld [vmem:[%s3] sm:$0xff]
        %v1602 = vld [vmem:[%s3 + $0x8] sm:$0xff]
        %v1603 = vld [vmem:[%s3 + $0x10] sm:$0xff]
        %v1604 = vld [vmem:[%s3 + $0x18] sm:$0xff]
        %vm1605 = vcmask 261120
        %v1607 = vsel %vm1605, %v1473, 0
        %v1610 = vsel %vm1605, %v1474, 0
        %v1613 = vsel %vm1605, %v1475, 0
        %v1616 = vsel %vm1605, %v1476, 0
        %v1619 = vsel %vm1605, %v1477, 0
        %v1622 = vsel %vm1605, %v1478, 0
        %v1625 = vsel %vm1605, %v1479, 0
        %v1628 = vsel %vm1605, %v1480, 0
        %v1631 = vsel %vm1605, %v1481, 0
        %v1634 = vsel %vm1605, %v1482, 0
        %v1637 = vsel %vm1605, %v1483, 0
        %v1640 = vsel %vm1605, %v1484, 0
        %v1643 = vsel %vm1605, %v1485, 0
        %v1646 = vsel %vm1605, %v1486, 0
        %v1649 = vsel %vm1605, %v1487, 0
        %v1652 = vsel %vm1605, %v1488, 0
        %v1655 = vsel %vm1605, %v1489, 0
        %v1658 = vsel %vm1605, %v1490, 0
        %v1661 = vsel %vm1605, %v1491, 0
        %v1664 = vsel %vm1605, %v1492, 0
        %v1667 = vsel %vm1605, %v1493, 0
        %v1670 = vsel %vm1605, %v1494, 0
        %v1673 = vsel %vm1605, %v1495, 0
        %v1676 = vsel %vm1605, %v1496, 0
        %v1679 = vsel %vm1605, %v1497, 0
        %v1682 = vsel %vm1605, %v1498, 0
        %v1685 = vsel %vm1605, %v1499, 0
        %v1688 = vsel %vm1605, %v1500, 0
        %v1691 = vsel %vm1605, %v1501, 0
        %v1694 = vsel %vm1605, %v1502, 0
        %v1697 = vsel %vm1605, %v1503, 0
        %v1700 = vsel %vm1605, %v1504, 0
        %v1703 = vsel %vm1605, %v1505, 0
        %v1706 = vsel %vm1605, %v1506, 0
        %v1709 = vsel %vm1605, %v1507, 0
        %v1712 = vsel %vm1605, %v1508, 0
        %v1715 = vsel %vm1605, %v1509, 0
        %v1718 = vsel %vm1605, %v1510, 0
        %v1721 = vsel %vm1605, %v1511, 0
        %v1724 = vsel %vm1605, %v1512, 0
        %v1727 = vsel %vm1605, %v1513, 0
        %v1730 = vsel %vm1605, %v1514, 0
        %v1733 = vsel %vm1605, %v1515, 0
        %v1736 = vsel %vm1605, %v1516, 0
        %v1739 = vsel %vm1605, %v1517, 0
        %v1742 = vsel %vm1605, %v1518, 0
        %v1745 = vsel %vm1605, %v1519, 0
        %v1748 = vsel %vm1605, %v1520, 0
        %v1751 = vsel %vm1605, %v1521, 0
        %v1754 = vsel %vm1605, %v1522, 0
        %v1757 = vsel %vm1605, %v1523, 0
        %v1760 = vsel %vm1605, %v1524, 0
        %v1763 = vsel %vm1605, %v1525, 0
        %v1766 = vsel %vm1605, %v1526, 0
        %v1769 = vsel %vm1605, %v1527, 0
        %v1772 = vsel %vm1605, %v1528, 0
        %v1775 = vsel %vm1605, %v1529, 0
        %v1778 = vsel %vm1605, %v1530, 0
        %v1781 = vsel %vm1605, %v1531, 0
        %v1784 = vsel %vm1605, %v1532, 0
        %v1787 = vsel %vm1605, %v1533, 0
        %v1790 = vsel %vm1605, %v1534, 0
        %v1793 = vsel %vm1605, %v1535, 0
        %v1796 = vsel %vm1605, %v1536, 0
        %v1799 = vsel %vm1605, %v1537, 0
        %v1802 = vsel %vm1605, %v1538, 0
        %v1805 = vsel %vm1605, %v1539, 0
        %v1808 = vsel %vm1605, %v1540, 0
        %v1811 = vsel %vm1605, %v1541, 0
        %v1814 = vsel %vm1605, %v1542, 0
        %v1817 = vsel %vm1605, %v1543, 0
        %v1820 = vsel %vm1605, %v1544, 0
        %v1823 = vsel %vm1605, %v1545, 0
        %v1826 = vsel %vm1605, %v1546, 0
        %v1829 = vsel %vm1605, %v1547, 0
        %v1832 = vsel %vm1605, %v1548, 0
        %v1835 = vsel %vm1605, %v1549, 0
        %v1838 = vsel %vm1605, %v1550, 0
        %v1841 = vsel %vm1605, %v1551, 0
        %v1844 = vsel %vm1605, %v1552, 0
        %v1847 = vsel %vm1605, %v1553, 0
        %v1850 = vsel %vm1605, %v1554, 0
        %v1853 = vsel %vm1605, %v1555, 0
        %v1856 = vsel %vm1605, %v1556, 0
        %v1859 = vsel %vm1605, %v1557, 0
        %v1862 = vsel %vm1605, %v1558, 0
        %v1865 = vsel %vm1605, %v1559, 0
        %v1868 = vsel %vm1605, %v1560, 0
        %v1871 = vsel %vm1605, %v1561, 0
        %v1874 = vsel %vm1605, %v1562, 0
        %v1877 = vsel %vm1605, %v1563, 0
        %v1880 = vsel %vm1605, %v1564, 0
        %v1883 = vsel %vm1605, %v1565, 0
        %v1886 = vsel %vm1605, %v1566, 0
        %v1889 = vsel %vm1605, %v1567, 0
        %v1892 = vsel %vm1605, %v1568, 0
        %v1895 = vsel %vm1605, %v1569, 0
        %v1898 = vsel %vm1605, %v1570, 0
        %v1901 = vsel %vm1605, %v1571, 0
        %v1904 = vsel %vm1605, %v1572, 0
        %v1907 = vsel %vm1605, %v1573, 0
        %v1910 = vsel %vm1605, %v1574, 0
        %v1913 = vsel %vm1605, %v1575, 0
        %v1916 = vsel %vm1605, %v1576, 0
        %v1919 = vsel %vm1605, %v1577, 0
        %v1922 = vsel %vm1605, %v1578, 0
        %v1925 = vsel %vm1605, %v1579, 0
        %v1928 = vsel %vm1605, %v1580, 0
        %v1931 = vsel %vm1605, %v1581, 0
        %v1934 = vsel %vm1605, %v1582, 0
        %v1937 = vsel %vm1605, %v1583, 0
        %v1940 = vsel %vm1605, %v1584, 0
        %v1943 = vsel %vm1605, %v1585, 0
        %v1946 = vsel %vm1605, %v1586, 0
        %v1949 = vsel %vm1605, %v1587, 0
        %v1952 = vsel %vm1605, %v1588, 0
        %v1955 = vsel %vm1605, %v1589, 0
        %v1958 = vsel %vm1605, %v1590, 0
        %v1961 = vsel %vm1605, %v1591, 0
        %v1964 = vsel %vm1605, %v1592, 0
        %v1967 = vsel %vm1605, %v1593, 0
        %v1970 = vsel %vm1605, %v1594, 0
        %v1973 = vsel %vm1605, %v1595, 0
        %v1976 = vsel %vm1605, %v1596, 0
        %v1979 = vsel %vm1605, %v1597, 0
        %v1982 = vsel %vm1605, %v1598, 0
        %v1985 = vsel %vm1605, %v1599, 0
        %v1988 = vsel %vm1605, %v1600, 0
        %1990 = vmatprep.subr.mxu0 0.0
        %1991 = vmatpush1.msra.mxu0 0.0
        %1992 = vmatprep.subr.mxu0 0.0
        %1993 = vmatpush1.msra.mxu0 0.0
        %1994 = vmatprep.subr.mxu0 0.0
        %1995 = vmatpush1.msra.mxu0 0.0
        %1996 = vmatprep.subr.mxu0 0.0
        %1997 = vmatpush1.msra.mxu0 0.0
        %1998 = vmatprep.subr.mxu0 0.0
        %1999 = vmatpush1.msra.mxu0 0.0
        %2000 = vmatprep.subr.mxu0 0.0
        %2001 = vmatpush1.msra.mxu0 0.0
        %2002 = vmatprep.subr.mxu0 0.0
        %2003 = vmatpush1.msra.mxu0 0.0
        %2004 = vmatprep.subr.mxu0 0.0
        %2005 = vmatpush1.msra.mxu0 0.0
        %2006 = vmatprep.subr.mxu0 0.0
        %2007 = vmatpush1.msra.mxu0 0.0
        %2008 = vmatprep.subr.mxu0 0.0
        %2009 = vmatpush1.msra.mxu0 0.0
        %2010 = vmatprep.subr.mxu0 0.0
        %2011 = vmatpush1.msra.mxu0 0.0
        %2012 = vmatprep.subr.mxu0 0.0
        %2013 = vmatpush1.msra.mxu0 0.0
        %2014 = vmatprep.subr.mxu0 0.0
        %2015 = vmatpush1.msra.mxu0 %v1604
        %2016 = vmatprep.subr.mxu0 0.0
        %2017 = vmatpush1.msra.mxu0 %v1603
        %2018 = vmatprep.subr.mxu0 0.0
        %2019 = vmatpush1.msra.mxu0 %v1602
        %2020 = vmatprep.subr.mxu0 0.0
        %2021 = vmatpush1.msra.mxu0 %v1601
        %2022 = vmatprep.subr.mxu0 0.0
        %2023 = vmatpush2.msra.mxu0 0.0
        %2024 = vmatprep.subr.mxu0 0.0
        %2025 = vmatpush2.msra.mxu0 0.0
        %2026 = vmatprep.subr.mxu0 0.0
        %2027 = vmatpush2.msra.mxu0 0.0
        %2028 = vmatprep.subr.mxu0 0.0
        %2029 = vmatpush2.msra.mxu0 0.0
        %2030 = vmatprep.subr.mxu0 0.0
        %2031 = vmatpush2.msra.mxu0 0.0
        %2032 = vmatprep.subr.mxu0 0.0
        %2033 = vmatpush2.msra.mxu0 0.0
        %2034 = vmatprep.subr.mxu0 0.0
        %2035 = vmatpush2.msra.mxu0 0.0
        %2036 = vmatprep.subr.mxu0 0.0
        %2037 = vmatpush2.msra.mxu0 0.0
        %2038 = vmatprep.subr.mxu0 0.0
        %2039 = vmatpush2.msra.mxu0 0.0
        %2040 = vmatprep.subr.mxu0 0.0
        %2041 = vmatpush2.msra.mxu0 0.0
        %2042 = vmatprep.subr.mxu0 0.0
        %2043 = vmatpush2.msra.mxu0 0.0
        %2044 = vmatprep.subr.mxu0 0.0
        %2045 = vmatpush2.msra.mxu0 0.0
        %2046 = vmatprep.subr.mxu0 0.0
        %2047 = vmatpush2.msra.mxu0 0.0
        %2048 = vmatprep.subr.mxu0 0.0
        %2049 = vmatpush2.msra.mxu0 0.0
        %2050 = vmatprep.subr.mxu0 0.0
        %2051 = vmatpush2.msra.mxu0 0.0
        %2052 = vmatprep.subr.mxu0 0.0
        %2053 = vmatpush2.msra.mxu0 0.0
        %2054 = vmatprep.mubr.f32.mxu0 0.0
        %2055 = vmatmul.mubr.f32.gmra.mxu0 %v1607
        %v2056 = vpop.f32.mrf.mxu0
        %v2057 = vadd.f32 0.0, %v2056
        %v2058 = vpop.f32.mrf.mxu0
        %2059 = vmatprep.mubr.f32.mxu0 0.0
        %2060 = vmatmul.mubr.f32.gmra.mxu0 %v1610
        %v2061 = vpop.f32.mrf.mxu0
        %v2062 = vadd.f32 0.0, %v2061
        %v2063 = vpop.f32.mrf.mxu0
        %2064 = vmatprep.mubr.f32.mxu0 0.0
        %2065 = vmatmul.mubr.f32.gmra.mxu0 %v1613
        %v2066 = vpop.f32.mrf.mxu0
        %v2067 = vadd.f32 0.0, %v2066
        %v2068 = vpop.f32.mrf.mxu0
        %2069 = vmatprep.mubr.f32.mxu0 0.0
        %2070 = vmatmul.mubr.f32.gmra.mxu0 %v1616
        %v2071 = vpop.f32.mrf.mxu0
        %v2072 = vadd.f32 0.0, %v2071
        %v2073 = vpop.f32.mrf.mxu0
        %2074 = vmatprep.mubr.f32.mxu0 0.0
        %2075 = vmatmul.mubr.f32.gmra.mxu0 %v1619
        %v2076 = vpop.f32.mrf.mxu0
        %v2077 = vadd.f32 0.0, %v2076
        %v2078 = vpop.f32.mrf.mxu0
        %2079 = vmatprep.mubr.f32.mxu0 0.0
        %2080 = vmatmul.mubr.f32.gmra.mxu0 %v1622
        %v2081 = vpop.f32.mrf.mxu0
        %v2082 = vadd.f32 0.0, %v2081
        %v2083 = vpop.f32.mrf.mxu0
        %2084 = vmatprep.mubr.f32.mxu0 0.0
        %2085 = vmatmul.mubr.f32.gmra.mxu0 %v1625
        %v2086 = vpop.f32.mrf.mxu0
        %v2087 = vadd.f32 0.0, %v2086
        %v2088 = vpop.f32.mrf.mxu0
        %2089 = vmatprep.mubr.f32.mxu0 0.0
        %2090 = vmatmul.mubr.f32.gmra.mxu0 %v1628
        %v2091 = vpop.f32.mrf.mxu0
        %v2092 = vadd.f32 0.0, %v2091
        %v2093 = vpop.f32.mrf.mxu0
        %2094 = vmatprep.mubr.f32.mxu0 0.0
        %2095 = vmatmul.mubr.f32.gmra.mxu0 %v1631
        %v2096 = vpop.f32.mrf.mxu0
        %v2097 = vadd.f32 0.0, %v2096
        %v2098 = vpop.f32.mrf.mxu0
        %2099 = vmatprep.mubr.f32.mxu0 0.0
        %2100 = vmatmul.mubr.f32.gmra.mxu0 %v1634
        %v2101 = vpop.f32.mrf.mxu0
        %v2102 = vadd.f32 0.0, %v2101
        %v2103 = vpop.f32.mrf.mxu0
        %2104 = vmatprep.mubr.f32.mxu0 0.0
        %2105 = vmatmul.mubr.f32.gmra.mxu0 %v1637
        %v2106 = vpop.f32.mrf.mxu0
        %v2107 = vadd.f32 0.0, %v2106
        %v2108 = vpop.f32.mrf.mxu0
        %2109 = vmatprep.mubr.f32.mxu0 0.0
        %2110 = vmatmul.mubr.f32.gmra.mxu0 %v1640
        %v2111 = vpop.f32.mrf.mxu0
        %v2112 = vadd.f32 0.0, %v2111
        %v2113 = vpop.f32.mrf.mxu0
        %2114 = vmatprep.mubr.f32.mxu0 0.0
        %2115 = vmatmul.mubr.f32.gmra.mxu0 %v1643
        %v2116 = vpop.f32.mrf.mxu0
        %v2117 = vadd.f32 0.0, %v2116
        %v2118 = vpop.f32.mrf.mxu0
        %2119 = vmatprep.mubr.f32.mxu0 0.0
        %2120 = vmatmul.mubr.f32.gmra.mxu0 %v1646
        %v2121 = vpop.f32.mrf.mxu0
        %v2122 = vadd.f32 0.0, %v2121
        %v2123 = vpop.f32.mrf.mxu0
        %2124 = vmatprep.mubr.f32.mxu0 0.0
        %2125 = vmatmul.mubr.f32.gmra.mxu0 %v1649
        %v2126 = vpop.f32.mrf.mxu0
        %v2127 = vadd.f32 0.0, %v2126
        %v2128 = vpop.f32.mrf.mxu0
        %2129 = vmatprep.mubr.f32.mxu0 0.0
        %2130 = vmatmul.mubr.f32.gmra.mxu0 %v1652
        %v2131 = vpop.f32.mrf.mxu0
        %v2132 = vadd.f32 0.0, %v2131
        %v2133 = vpop.f32.mrf.mxu0
        %2134 = vmatprep.mubr.f32.mxu0 0.0
        %2135 = vmatmul.mubr.f32.gmra.mxu0 %v1655
        %v2136 = vpop.f32.mrf.mxu0
        %v2137 = vadd.f32 0.0, %v2136
        %v2138 = vpop.f32.mrf.mxu0
        %2139 = vmatprep.mubr.f32.mxu0 0.0
        %2140 = vmatmul.mubr.f32.gmra.mxu0 %v1658
        %v2141 = vpop.f32.mrf.mxu0
        %v2142 = vadd.f32 0.0, %v2141
        %v2143 = vpop.f32.mrf.mxu0
        %2144 = vmatprep.mubr.f32.mxu0 0.0
        %2145 = vmatmul.mubr.f32.gmra.mxu0 %v1661
        %v2146 = vpop.f32.mrf.mxu0
        %v2147 = vadd.f32 0.0, %v2146
        %v2148 = vpop.f32.mrf.mxu0
        %2149 = vmatprep.mubr.f32.mxu0 0.0
        %2150 = vmatmul.mubr.f32.gmra.mxu0 %v1664
        %v2151 = vpop.f32.mrf.mxu0
        %v2152 = vadd.f32 0.0, %v2151
        %v2153 = vpop.f32.mrf.mxu0
        %2154 = vmatprep.mubr.f32.mxu0 0.0
        %2155 = vmatmul.mubr.f32.gmra.mxu0 %v1667
        %v2156 = vpop.f32.mrf.mxu0
        %v2157 = vadd.f32 0.0, %v2156
        %v2158 = vpop.f32.mrf.mxu0
        %2159 = vmatprep.mubr.f32.mxu0 0.0
        %2160 = vmatmul.mubr.f32.gmra.mxu0 %v1670
        %v2161 = vpop.f32.mrf.mxu0
        %v2162 = vadd.f32 0.0, %v2161
        %v2163 = vpop.f32.mrf.mxu0
        %2164 = vmatprep.mubr.f32.mxu0 0.0
        %2165 = vmatmul.mubr.f32.gmra.mxu0 %v1673
        %v2166 = vpop.f32.mrf.mxu0
        %v2167 = vadd.f32 0.0, %v2166
        %v2168 = vpop.f32.mrf.mxu0
        %2169 = vmatprep.mubr.f32.mxu0 0.0
        %2170 = vmatmul.mubr.f32.gmra.mxu0 %v1676
        %v2171 = vpop.f32.mrf.mxu0
        %v2172 = vadd.f32 0.0, %v2171
        %v2173 = vpop.f32.mrf.mxu0
        %2174 = vmatprep.mubr.f32.mxu0 0.0
        %2175 = vmatmul.mubr.f32.gmra.mxu0 %v1679
        %v2176 = vpop.f32.mrf.mxu0
        %v2177 = vadd.f32 0.0, %v2176
        %v2178 = vpop.f32.mrf.mxu0
        %2179 = vmatprep.mubr.f32.mxu0 0.0
        %2180 = vmatmul.mubr.f32.gmra.mxu0 %v1682
        %v2181 = vpop.f32.mrf.mxu0
        %v2182 = vadd.f32 0.0, %v2181
        %v2183 = vpop.f32.mrf.mxu0
        %2184 = vmatprep.mubr.f32.mxu0 0.0
        %2185 = vmatmul.mubr.f32.gmra.mxu0 %v1685
        %v2186 = vpop.f32.mrf.mxu0
        %v2187 = vadd.f32 0.0, %v2186
        %v2188 = vpop.f32.mrf.mxu0
        %2189 = vmatprep.mubr.f32.mxu0 0.0
        %2190 = vmatmul.mubr.f32.gmra.mxu0 %v1688
        %v2191 = vpop.f32.mrf.mxu0
        %v2192 = vadd.f32 0.0, %v2191
        %v2193 = vpop.f32.mrf.mxu0
        %2194 = vmatprep.mubr.f32.mxu0 0.0
        %2195 = vmatmul.mubr.f32.gmra.mxu0 %v1691
        %v2196 = vpop.f32.mrf.mxu0
        %v2197 = vadd.f32 0.0, %v2196
        %v2198 = vpop.f32.mrf.mxu0
        %2199 = vmatprep.mubr.f32.mxu0 0.0
        %2200 = vmatmul.mubr.f32.gmra.mxu0 %v1694
        %v2201 = vpop.f32.mrf.mxu0
        %v2202 = vadd.f32 0.0, %v2201
        %v2203 = vpop.f32.mrf.mxu0
        %2204 = vmatprep.mubr.f32.mxu0 0.0
        %2205 = vmatmul.mubr.f32.gmra.mxu0 %v1697
        %v2206 = vpop.f32.mrf.mxu0
        %v2207 = vadd.f32 0.0, %v2206
        %v2208 = vpop.f32.mrf.mxu0
        %2209 = vmatprep.mubr.f32.mxu0 0.0
        %2210 = vmatmul.mubr.f32.gmra.mxu0 %v1700
        %v2211 = vpop.f32.mrf.mxu0
        %v2212 = vadd.f32 0.0, %v2211
        %v2213 = vpop.f32.mrf.mxu0
        %2214 = vmatprep.mubr.f32.mxu0 0.0
        %2215 = vmatmul.mubr.f32.gmra.mxu0 %v1703
        %v2216 = vpop.f32.mrf.mxu0
        %v2217 = vadd.f32 0.0, %v2216
        %v2218 = vpop.f32.mrf.mxu0
        %2219 = vmatprep.mubr.f32.mxu0 0.0
        %2220 = vmatmul.mubr.f32.gmra.mxu0 %v1706
        %v2221 = vpop.f32.mrf.mxu0
        %v2222 = vadd.f32 0.0, %v2221
        %v2223 = vpop.f32.mrf.mxu0
        %2224 = vmatprep.mubr.f32.mxu0 0.0
        %2225 = vmatmul.mubr.f32.gmra.mxu0 %v1709
        %v2226 = vpop.f32.mrf.mxu0
        %v2227 = vadd.f32 0.0, %v2226
        %v2228 = vpop.f32.mrf.mxu0
        %2229 = vmatprep.mubr.f32.mxu0 0.0
        %2230 = vmatmul.mubr.f32.gmra.mxu0 %v1712
        %v2231 = vpop.f32.mrf.mxu0
        %v2232 = vadd.f32 0.0, %v2231
        %v2233 = vpop.f32.mrf.mxu0
        %2234 = vmatprep.mubr.f32.mxu0 0.0
        %2235 = vmatmul.mubr.f32.gmra.mxu0 %v1715
        %v2236 = vpop.f32.mrf.mxu0
        %v2237 = vadd.f32 0.0, %v2236
        %v2238 = vpop.f32.mrf.mxu0
        %2239 = vmatprep.mubr.f32.mxu0 0.0
        %2240 = vmatmul.mubr.f32.gmra.mxu0 %v1718
        %v2241 = vpop.f32.mrf.mxu0
        %v2242 = vadd.f32 0.0, %v2241
        %v2243 = vpop.f32.mrf.mxu0
        %2244 = vmatprep.mubr.f32.mxu0 0.0
        %2245 = vmatmul.mubr.f32.gmra.mxu0 %v1721
        %v2246 = vpop.f32.mrf.mxu0
        %v2247 = vadd.f32 0.0, %v2246
        %v2248 = vpop.f32.mrf.mxu0
        %2249 = vmatprep.mubr.f32.mxu0 0.0
        %2250 = vmatmul.mubr.f32.gmra.mxu0 %v1724
        %v2251 = vpop.f32.mrf.mxu0
        %v2252 = vadd.f32 0.0, %v2251
        %v2253 = vpop.f32.mrf.mxu0
        %2254 = vmatprep.mubr.f32.mxu0 0.0
        %2255 = vmatmul.mubr.f32.gmra.mxu0 %v1727
        %v2256 = vpop.f32.mrf.mxu0
        %v2257 = vadd.f32 0.0, %v2256
        %v2258 = vpop.f32.mrf.mxu0
        %2259 = vmatprep.mubr.f32.mxu0 0.0
        %2260 = vmatmul.mubr.f32.gmra.mxu0 %v1730
        %v2261 = vpop.f32.mrf.mxu0
        %v2262 = vadd.f32 0.0, %v2261
        %v2263 = vpop.f32.mrf.mxu0
        %2264 = vmatprep.mubr.f32.mxu0 0.0
        %2265 = vmatmul.mubr.f32.gmra.mxu0 %v1733
        %v2266 = vpop.f32.mrf.mxu0
        %v2267 = vadd.f32 0.0, %v2266
        %v2268 = vpop.f32.mrf.mxu0
        %2269 = vmatprep.mubr.f32.mxu0 0.0
        %2270 = vmatmul.mubr.f32.gmra.mxu0 %v1736
        %v2271 = vpop.f32.mrf.mxu0
        %v2272 = vadd.f32 0.0, %v2271
        %v2273 = vpop.f32.mrf.mxu0
        %2274 = vmatprep.mubr.f32.mxu0 0.0
        %2275 = vmatmul.mubr.f32.gmra.mxu0 %v1739
        %v2276 = vpop.f32.mrf.mxu0
        %v2277 = vadd.f32 0.0, %v2276
        %v2278 = vpop.f32.mrf.mxu0
        %2279 = vmatprep.mubr.f32.mxu0 0.0
        %2280 = vmatmul.mubr.f32.gmra.mxu0 %v1742
        %v2281 = vpop.f32.mrf.mxu0
        %v2282 = vadd.f32 0.0, %v2281
        %v2283 = vpop.f32.mrf.mxu0
        %2284 = vmatprep.mubr.f32.mxu0 0.0
        %2285 = vmatmul.mubr.f32.gmra.mxu0 %v1745
        %v2286 = vpop.f32.mrf.mxu0
        %v2287 = vadd.f32 0.0, %v2286
        %v2288 = vpop.f32.mrf.mxu0
        %2289 = vmatprep.mubr.f32.mxu0 0.0
        %2290 = vmatmul.mubr.f32.gmra.mxu0 %v1748
        %v2291 = vpop.f32.mrf.mxu0
        %v2292 = vadd.f32 0.0, %v2291
        %v2293 = vpop.f32.mrf.mxu0
        %2294 = vmatprep.mubr.f32.mxu0 0.0
        %2295 = vmatmul.mubr.f32.gmra.mxu0 %v1751
        %v2296 = vpop.f32.mrf.mxu0
        %v2297 = vadd.f32 0.0, %v2296
        %v2298 = vpop.f32.mrf.mxu0
        %2299 = vmatprep.mubr.f32.mxu0 0.0
        %2300 = vmatmul.mubr.f32.gmra.mxu0 %v1754
        %v2301 = vpop.f32.mrf.mxu0
        %v2302 = vadd.f32 0.0, %v2301
        %v2303 = vpop.f32.mrf.mxu0
        %2304 = vmatprep.mubr.f32.mxu0 0.0
        %2305 = vmatmul.mubr.f32.gmra.mxu0 %v1757
        %v2306 = vpop.f32.mrf.mxu0
        %v2307 = vadd.f32 0.0, %v2306
        %v2308 = vpop.f32.mrf.mxu0
        %2309 = vmatprep.mubr.f32.mxu0 0.0
        %2310 = vmatmul.mubr.f32.gmra.mxu0 %v1760
        %v2311 = vpop.f32.mrf.mxu0
        %v2312 = vadd.f32 0.0, %v2311
        %v2313 = vpop.f32.mrf.mxu0
        %2314 = vmatprep.mubr.f32.mxu0 0.0
        %2315 = vmatmul.mubr.f32.gmra.mxu0 %v1763
        %v2316 = vpop.f32.mrf.mxu0
        %v2317 = vadd.f32 0.0, %v2316
        %v2318 = vpop.f32.mrf.mxu0
        %2319 = vmatprep.mubr.f32.mxu0 0.0
        %2320 = vmatmul.mubr.f32.gmra.mxu0 %v1766
        %v2321 = vpop.f32.mrf.mxu0
        %v2322 = vadd.f32 0.0, %v2321
        %v2323 = vpop.f32.mrf.mxu0
        %2324 = vmatprep.mubr.f32.mxu0 0.0
        %2325 = vmatmul.mubr.f32.gmra.mxu0 %v1769
        %v2326 = vpop.f32.mrf.mxu0
        %v2327 = vadd.f32 0.0, %v2326
        %v2328 = vpop.f32.mrf.mxu0
        %2329 = vmatprep.mubr.f32.mxu0 0.0
        %2330 = vmatmul.mubr.f32.gmra.mxu0 %v1772
        %v2331 = vpop.f32.mrf.mxu0
        %v2332 = vadd.f32 0.0, %v2331
        %v2333 = vpop.f32.mrf.mxu0
        %2334 = vmatprep.mubr.f32.mxu0 0.0
        %2335 = vmatmul.mubr.f32.gmra.mxu0 %v1775
        %v2336 = vpop.f32.mrf.mxu0
        %v2337 = vadd.f32 0.0, %v2336
        %v2338 = vpop.f32.mrf.mxu0
        %2339 = vmatprep.mubr.f32.mxu0 0.0
        %2340 = vmatmul.mubr.f32.gmra.mxu0 %v1778
        %v2341 = vpop.f32.mrf.mxu0
        %v2342 = vadd.f32 0.0, %v2341
        %v2343 = vpop.f32.mrf.mxu0
        %2344 = vmatprep.mubr.f32.mxu0 0.0
        %2345 = vmatmul.mubr.f32.gmra.mxu0 %v1781
        %v2346 = vpop.f32.mrf.mxu0
        %v2347 = vadd.f32 0.0, %v2346
        %v2348 = vpop.f32.mrf.mxu0
        %2349 = vmatprep.mubr.f32.mxu0 0.0
        %2350 = vmatmul.mubr.f32.gmra.mxu0 %v1784
        %v2351 = vpop.f32.mrf.mxu0
        %v2352 = vadd.f32 0.0, %v2351
        %v2353 = vpop.f32.mrf.mxu0
        %2354 = vmatprep.mubr.f32.mxu0 0.0
        %2355 = vmatmul.mubr.f32.gmra.mxu0 %v1787
        %v2356 = vpop.f32.mrf.mxu0
        %v2357 = vadd.f32 0.0, %v2356
        %v2358 = vpop.f32.mrf.mxu0
        %2359 = vmatprep.mubr.f32.mxu0 0.0
        %2360 = vmatmul.mubr.f32.gmra.mxu0 %v1790
        %v2361 = vpop.f32.mrf.mxu0
        %v2362 = vadd.f32 0.0, %v2361
        %v2363 = vpop.f32.mrf.mxu0
        %2364 = vmatprep.mubr.f32.mxu0 0.0
        %2365 = vmatmul.mubr.f32.gmra.mxu0 %v1793
        %v2366 = vpop.f32.mrf.mxu0
        %v2367 = vadd.f32 0.0, %v2366
        %v2368 = vpop.f32.mrf.mxu0
        %2369 = vmatprep.mubr.f32.mxu0 0.0
        %2370 = vmatmul.mubr.f32.gmra.mxu0 %v1796
        %v2371 = vpop.f32.mrf.mxu0
        %v2372 = vadd.f32 0.0, %v2371
        %v2373 = vpop.f32.mrf.mxu0
        %2374 = vmatprep.mubr.f32.mxu0 0.0
        %2375 = vmatmul.mubr.f32.gmra.mxu0 %v1799
        %v2376 = vpop.f32.mrf.mxu0
        %v2377 = vadd.f32 0.0, %v2376
        %v2378 = vpop.f32.mrf.mxu0
        %2379 = vmatprep.mubr.f32.mxu0 0.0
        %2380 = vmatmul.mubr.f32.gmra.mxu0 %v1802
        %v2381 = vpop.f32.mrf.mxu0
        %v2382 = vadd.f32 0.0, %v2381
        %v2383 = vpop.f32.mrf.mxu0
        %2384 = vmatprep.mubr.f32.mxu0 0.0
        %2385 = vmatmul.mubr.f32.gmra.mxu0 %v1805
        %v2386 = vpop.f32.mrf.mxu0
        %v2387 = vadd.f32 0.0, %v2386
        %v2388 = vpop.f32.mrf.mxu0
        %2389 = vmatprep.mubr.f32.mxu0 0.0
        %2390 = vmatmul.mubr.f32.gmra.mxu0 %v1808
        %v2391 = vpop.f32.mrf.mxu0
        %v2392 = vadd.f32 0.0, %v2391
        %v2393 = vpop.f32.mrf.mxu0
        %2394 = vmatprep.mubr.f32.mxu0 0.0
        %2395 = vmatmul.mubr.f32.gmra.mxu0 %v1811
        %v2396 = vpop.f32.mrf.mxu0
        %v2397 = vadd.f32 0.0, %v2396
        %v2398 = vpop.f32.mrf.mxu0
        %2399 = vmatprep.mubr.f32.mxu0 0.0
        %2400 = vmatmul.mubr.f32.gmra.mxu0 %v1814
        %v2401 = vpop.f32.mrf.mxu0
        %v2402 = vadd.f32 0.0, %v2401
        %v2403 = vpop.f32.mrf.mxu0
        %2404 = vmatprep.mubr.f32.mxu0 0.0
        %2405 = vmatmul.mubr.f32.gmra.mxu0 %v1817
        %v2406 = vpop.f32.mrf.mxu0
        %v2407 = vadd.f32 0.0, %v2406
        %v2408 = vpop.f32.mrf.mxu0
        %2409 = vmatprep.mubr.f32.mxu0 0.0
        %2410 = vmatmul.mubr.f32.gmra.mxu0 %v1820
        %v2411 = vpop.f32.mrf.mxu0
        %v2412 = vadd.f32 0.0, %v2411
        %v2413 = vpop.f32.mrf.mxu0
        %2414 = vmatprep.mubr.f32.mxu0 0.0
        %2415 = vmatmul.mubr.f32.gmra.mxu0 %v1823
        %v2416 = vpop.f32.mrf.mxu0
        %v2417 = vadd.f32 0.0, %v2416
        %v2418 = vpop.f32.mrf.mxu0
        %2419 = vmatprep.mubr.f32.mxu0 0.0
        %2420 = vmatmul.mubr.f32.gmra.mxu0 %v1826
        %v2421 = vpop.f32.mrf.mxu0
        %v2422 = vadd.f32 0.0, %v2421
        %v2423 = vpop.f32.mrf.mxu0
        %2424 = vmatprep.mubr.f32.mxu0 0.0
        %2425 = vmatmul.mubr.f32.gmra.mxu0 %v1829
        %v2426 = vpop.f32.mrf.mxu0
        %v2427 = vadd.f32 0.0, %v2426
        %v2428 = vpop.f32.mrf.mxu0
        %2429 = vmatprep.mubr.f32.mxu0 0.0
        %2430 = vmatmul.mubr.f32.gmra.mxu0 %v1832
        %v2431 = vpop.f32.mrf.mxu0
        %v2432 = vadd.f32 0.0, %v2431
        %v2433 = vpop.f32.mrf.mxu0
        %2434 = vmatprep.mubr.f32.mxu0 0.0
        %2435 = vmatmul.mubr.f32.gmra.mxu0 %v1835
        %v2436 = vpop.f32.mrf.mxu0
        %v2437 = vadd.f32 0.0, %v2436
        %v2438 = vpop.f32.mrf.mxu0
        %2439 = vmatprep.mubr.f32.mxu0 0.0
        %2440 = vmatmul.mubr.f32.gmra.mxu0 %v1838
        %v2441 = vpop.f32.mrf.mxu0
        %v2442 = vadd.f32 0.0, %v2441
        %v2443 = vpop.f32.mrf.mxu0
        %2444 = vmatprep.mubr.f32.mxu0 0.0
        %2445 = vmatmul.mubr.f32.gmra.mxu0 %v1841
        %v2446 = vpop.f32.mrf.mxu0
        %v2447 = vadd.f32 0.0, %v2446
        %v2448 = vpop.f32.mrf.mxu0
        %2449 = vmatprep.mubr.f32.mxu0 0.0
        %2450 = vmatmul.mubr.f32.gmra.mxu0 %v1844
        %v2451 = vpop.f32.mrf.mxu0
        %v2452 = vadd.f32 0.0, %v2451
        %v2453 = vpop.f32.mrf.mxu0
        %2454 = vmatprep.mubr.f32.mxu0 0.0
        %2455 = vmatmul.mubr.f32.gmra.mxu0 %v1847
        %v2456 = vpop.f32.mrf.mxu0
        %v2457 = vadd.f32 0.0, %v2456
        %v2458 = vpop.f32.mrf.mxu0
        %2459 = vmatprep.mubr.f32.mxu0 0.0
        %2460 = vmatmul.mubr.f32.gmra.mxu0 %v1850
        %v2461 = vpop.f32.mrf.mxu0
        %v2462 = vadd.f32 0.0, %v2461
        %v2463 = vpop.f32.mrf.mxu0
        %2464 = vmatprep.mubr.f32.mxu0 0.0
        %2465 = vmatmul.mubr.f32.gmra.mxu0 %v1853
        %v2466 = vpop.f32.mrf.mxu0
        %v2467 = vadd.f32 0.0, %v2466
        %v2468 = vpop.f32.mrf.mxu0
        %2469 = vmatprep.mubr.f32.mxu0 0.0
        %2470 = vmatmul.mubr.f32.gmra.mxu0 %v1856
        %v2471 = vpop.f32.mrf.mxu0
        %v2472 = vadd.f32 0.0, %v2471
        %v2473 = vpop.f32.mrf.mxu0
        %2474 = vmatprep.mubr.f32.mxu0 0.0
        %2475 = vmatmul.mubr.f32.gmra.mxu0 %v1859
        %v2476 = vpop.f32.mrf.mxu0
        %v2477 = vadd.f32 0.0, %v2476
        %v2478 = vpop.f32.mrf.mxu0
        %2479 = vmatprep.mubr.f32.mxu0 0.0
        %2480 = vmatmul.mubr.f32.gmra.mxu0 %v1862
        %v2481 = vpop.f32.mrf.mxu0
        %v2482 = vadd.f32 0.0, %v2481
        %v2483 = vpop.f32.mrf.mxu0
        %2484 = vmatprep.mubr.f32.mxu0 0.0
        %2485 = vmatmul.mubr.f32.gmra.mxu0 %v1865
        %v2486 = vpop.f32.mrf.mxu0
        %v2487 = vadd.f32 0.0, %v2486
        %v2488 = vpop.f32.mrf.mxu0
        %2489 = vmatprep.mubr.f32.mxu0 0.0
        %2490 = vmatmul.mubr.f32.gmra.mxu0 %v1868
        %v2491 = vpop.f32.mrf.mxu0
        %v2492 = vadd.f32 0.0, %v2491
        %v2493 = vpop.f32.mrf.mxu0
        %2494 = vmatprep.mubr.f32.mxu0 0.0
        %2495 = vmatmul.mubr.f32.gmra.mxu0 %v1871
        %v2496 = vpop.f32.mrf.mxu0
        %v2497 = vadd.f32 0.0, %v2496
        %v2498 = vpop.f32.mrf.mxu0
        %2499 = vmatprep.mubr.f32.mxu0 0.0
        %2500 = vmatmul.mubr.f32.gmra.mxu0 %v1874
        %v2501 = vpop.f32.mrf.mxu0
        %v2502 = vadd.f32 0.0, %v2501
        %v2503 = vpop.f32.mrf.mxu0
        %2504 = vmatprep.mubr.f32.mxu0 0.0
        %2505 = vmatmul.mubr.f32.gmra.mxu0 %v1877
        %v2506 = vpop.f32.mrf.mxu0
        %v2507 = vadd.f32 0.0, %v2506
        %v2508 = vpop.f32.mrf.mxu0
        %2509 = vmatprep.mubr.f32.mxu0 0.0
        %2510 = vmatmul.mubr.f32.gmra.mxu0 %v1880
        %v2511 = vpop.f32.mrf.mxu0
        %v2512 = vadd.f32 0.0, %v2511
        %v2513 = vpop.f32.mrf.mxu0
        %2514 = vmatprep.mubr.f32.mxu0 0.0
        %2515 = vmatmul.mubr.f32.gmra.mxu0 %v1883
        %v2516 = vpop.f32.mrf.mxu0
        %v2517 = vadd.f32 0.0, %v2516
        %v2518 = vpop.f32.mrf.mxu0
        %2519 = vmatprep.mubr.f32.mxu0 0.0
        %2520 = vmatmul.mubr.f32.gmra.mxu0 %v1886
        %v2521 = vpop.f32.mrf.mxu0
        %v2522 = vadd.f32 0.0, %v2521
        %v2523 = vpop.f32.mrf.mxu0
        %2524 = vmatprep.mubr.f32.mxu0 0.0
        %2525 = vmatmul.mubr.f32.gmra.mxu0 %v1889
        %v2526 = vpop.f32.mrf.mxu0
        %v2527 = vadd.f32 0.0, %v2526
        %v2528 = vpop.f32.mrf.mxu0
        %2529 = vmatprep.mubr.f32.mxu0 0.0
        %2530 = vmatmul.mubr.f32.gmra.mxu0 %v1892
        %v2531 = vpop.f32.mrf.mxu0
        %v2532 = vadd.f32 0.0, %v2531
        %v2533 = vpop.f32.mrf.mxu0
        %2534 = vmatprep.mubr.f32.mxu0 0.0
        %2535 = vmatmul.mubr.f32.gmra.mxu0 %v1895
        %v2536 = vpop.f32.mrf.mxu0
        %v2537 = vadd.f32 0.0, %v2536
        %v2538 = vpop.f32.mrf.mxu0
        %2539 = vmatprep.mubr.f32.mxu0 0.0
        %2540 = vmatmul.mubr.f32.gmra.mxu0 %v1898
        %v2541 = vpop.f32.mrf.mxu0
        %v2542 = vadd.f32 0.0, %v2541
        %v2543 = vpop.f32.mrf.mxu0
        %2544 = vmatprep.mubr.f32.mxu0 0.0
        %2545 = vmatmul.mubr.f32.gmra.mxu0 %v1901
        %v2546 = vpop.f32.mrf.mxu0
        %v2547 = vadd.f32 0.0, %v2546
        %v2548 = vpop.f32.mrf.mxu0
        %2549 = vmatprep.mubr.f32.mxu0 0.0
        %2550 = vmatmul.mubr.f32.gmra.mxu0 %v1904
        %v2551 = vpop.f32.mrf.mxu0
        %v2552 = vadd.f32 0.0, %v2551
        %v2553 = vpop.f32.mrf.mxu0
        %2554 = vmatprep.mubr.f32.mxu0 0.0
        %2555 = vmatmul.mubr.f32.gmra.mxu0 %v1907
        %v2556 = vpop.f32.mrf.mxu0
        %v2557 = vadd.f32 0.0, %v2556
        %v2558 = vpop.f32.mrf.mxu0
        %2559 = vmatprep.mubr.f32.mxu0 0.0
        %2560 = vmatmul.mubr.f32.gmra.mxu0 %v1910
        %v2561 = vpop.f32.mrf.mxu0
        %v2562 = vadd.f32 0.0, %v2561
        %v2563 = vpop.f32.mrf.mxu0
        %2564 = vmatprep.mubr.f32.mxu0 0.0
        %2565 = vmatmul.mubr.f32.gmra.mxu0 %v1913
        %v2566 = vpop.f32.mrf.mxu0
        %v2567 = vadd.f32 0.0, %v2566
        %v2568 = vpop.f32.mrf.mxu0
        %2569 = vmatprep.mubr.f32.mxu0 0.0
        %2570 = vmatmul.mubr.f32.gmra.mxu0 %v1916
        %v2571 = vpop.f32.mrf.mxu0
        %v2572 = vadd.f32 0.0, %v2571
        %v2573 = vpop.f32.mrf.mxu0
        %2574 = vmatprep.mubr.f32.mxu0 0.0
        %2575 = vmatmul.mubr.f32.gmra.mxu0 %v1919
        %v2576 = vpop.f32.mrf.mxu0
        %v2577 = vadd.f32 0.0, %v2576
        %v2578 = vpop.f32.mrf.mxu0
        %2579 = vmatprep.mubr.f32.mxu0 0.0
        %2580 = vmatmul.mubr.f32.gmra.mxu0 %v1922
        %v2581 = vpop.f32.mrf.mxu0
        %v2582 = vadd.f32 0.0, %v2581
        %v2583 = vpop.f32.mrf.mxu0
        %2584 = vmatprep.mubr.f32.mxu0 0.0
        %2585 = vmatmul.mubr.f32.gmra.mxu0 %v1925
        %v2586 = vpop.f32.mrf.mxu0
        %v2587 = vadd.f32 0.0, %v2586
        %v2588 = vpop.f32.mrf.mxu0
        %2589 = vmatprep.mubr.f32.mxu0 0.0
        %2590 = vmatmul.mubr.f32.gmra.mxu0 %v1928
        %v2591 = vpop.f32.mrf.mxu0
        %v2592 = vadd.f32 0.0, %v2591
        %v2593 = vpop.f32.mrf.mxu0
        %2594 = vmatprep.mubr.f32.mxu0 0.0
        %2595 = vmatmul.mubr.f32.gmra.mxu0 %v1931
        %v2596 = vpop.f32.mrf.mxu0
        %v2597 = vadd.f32 0.0, %v2596
        %v2598 = vpop.f32.mrf.mxu0
        %2599 = vmatprep.mubr.f32.mxu0 0.0
        %2600 = vmatmul.mubr.f32.gmra.mxu0 %v1934
        %v2601 = vpop.f32.mrf.mxu0
        %v2602 = vadd.f32 0.0, %v2601
        %v2603 = vpop.f32.mrf.mxu0
        %2604 = vmatprep.mubr.f32.mxu0 0.0
        %2605 = vmatmul.mubr.f32.gmra.mxu0 %v1937
        %v2606 = vpop.f32.mrf.mxu0
        %v2607 = vadd.f32 0.0, %v2606
        %v2608 = vpop.f32.mrf.mxu0
        %2609 = vmatprep.mubr.f32.mxu0 0.0
        %2610 = vmatmul.mubr.f32.gmra.mxu0 %v1940
        %v2611 = vpop.f32.mrf.mxu0
        %v2612 = vadd.f32 0.0, %v2611
        %v2613 = vpop.f32.mrf.mxu0
        %2614 = vmatprep.mubr.f32.mxu0 0.0
        %2615 = vmatmul.mubr.f32.gmra.mxu0 %v1943
        %v2616 = vpop.f32.mrf.mxu0
        %v2617 = vadd.f32 0.0, %v2616
        %v2618 = vpop.f32.mrf.mxu0
        %2619 = vmatprep.mubr.f32.mxu0 0.0
        %2620 = vmatmul.mubr.f32.gmra.mxu0 %v1946
        %v2621 = vpop.f32.mrf.mxu0
        %v2622 = vadd.f32 0.0, %v2621
        %v2623 = vpop.f32.mrf.mxu0
        %2624 = vmatprep.mubr.f32.mxu0 0.0
        %2625 = vmatmul.mubr.f32.gmra.mxu0 %v1949
        %v2626 = vpop.f32.mrf.mxu0
        %v2627 = vadd.f32 0.0, %v2626
        %v2628 = vpop.f32.mrf.mxu0
        %2629 = vmatprep.mubr.f32.mxu0 0.0
        %2630 = vmatmul.mubr.f32.gmra.mxu0 %v1952
        %v2631 = vpop.f32.mrf.mxu0
        %v2632 = vadd.f32 0.0, %v2631
        %v2633 = vpop.f32.mrf.mxu0
        %2634 = vmatprep.mubr.f32.mxu0 0.0
        %2635 = vmatmul.mubr.f32.gmra.mxu0 %v1955
        %v2636 = vpop.f32.mrf.mxu0
        %v2637 = vadd.f32 0.0, %v2636
        %v2638 = vpop.f32.mrf.mxu0
        %2639 = vmatprep.mubr.f32.mxu0 0.0
        %2640 = vmatmul.mubr.f32.gmra.mxu0 %v1958
        %v2641 = vpop.f32.mrf.mxu0
        %v2642 = vadd.f32 0.0, %v2641
        %v2643 = vpop.f32.mrf.mxu0
        %2644 = vmatprep.mubr.f32.mxu0 0.0
        %2645 = vmatmul.mubr.f32.gmra.mxu0 %v1961
        %v2646 = vpop.f32.mrf.mxu0
        %v2647 = vadd.f32 0.0, %v2646
        %v2648 = vpop.f32.mrf.mxu0
        %2649 = vmatprep.mubr.f32.mxu0 0.0
        %2650 = vmatmul.mubr.f32.gmra.mxu0 %v1964
        %v2651 = vpop.f32.mrf.mxu0
        %v2652 = vadd.f32 0.0, %v2651
        %v2653 = vpop.f32.mrf.mxu0
        %2654 = vmatprep.mubr.f32.mxu0 0.0
        %2655 = vmatmul.mubr.f32.gmra.mxu0 %v1967
        %v2656 = vpop.f32.mrf.mxu0
        %v2657 = vadd.f32 0.0, %v2656
        %v2658 = vpop.f32.mrf.mxu0
        %2659 = vmatprep.mubr.f32.mxu0 0.0
        %2660 = vmatmul.mubr.f32.gmra.mxu0 %v1970
        %v2661 = vpop.f32.mrf.mxu0
        %v2662 = vadd.f32 0.0, %v2661
        %v2663 = vpop.f32.mrf.mxu0
        %2664 = vmatprep.mubr.f32.mxu0 0.0
        %2665 = vmatmul.mubr.f32.gmra.mxu0 %v1973
        %v2666 = vpop.f32.mrf.mxu0
        %v2667 = vadd.f32 0.0, %v2666
        %v2668 = vpop.f32.mrf.mxu0
        %2669 = vmatprep.mubr.f32.mxu0 0.0
        %2670 = vmatmul.mubr.f32.gmra.mxu0 %v1976
        %v2671 = vpop.f32.mrf.mxu0
        %v2672 = vadd.f32 0.0, %v2671
        %v2673 = vpop.f32.mrf.mxu0
        %2674 = vmatprep.mubr.f32.mxu0 0.0
        %2675 = vmatmul.mubr.f32.gmra.mxu0 %v1979
        %v2676 = vpop.f32.mrf.mxu0
        %v2677 = vadd.f32 0.0, %v2676
        %v2678 = vpop.f32.mrf.mxu0
        %2679 = vmatprep.mubr.f32.mxu0 0.0
        %2680 = vmatmul.mubr.f32.gmra.mxu0 %v1982
        %v2681 = vpop.f32.mrf.mxu0
        %v2682 = vadd.f32 0.0, %v2681
        %v2683 = vpop.f32.mrf.mxu0
        %2684 = vmatprep.mubr.f32.mxu0 0.0
        %2685 = vmatmul.mubr.f32.gmra.mxu0 %v1985
        %v2686 = vpop.f32.mrf.mxu0
        %v2687 = vadd.f32 0.0, %v2686
        %v2688 = vpop.f32.mrf.mxu0
        %2689 = vmatprep.mubr.f32.mxu0 0.0
        %2690 = vmatmul.mubr.f32.gmra.mxu0 %v1988
        %v2691 = vpop.f32.mrf.mxu0
        %v2692 = vadd.f32 0.0, %v2691
        %v2693 = vpop.f32.mrf.mxu0
        %2694 = vdwg.mxu0
        %v2695 = vmax.f32 %v2057, 0.0
        %v2696 = vmax.f32 %v2062, 0.0
        %v2697 = vmax.f32 %v2067, 0.0
        %v2698 = vmax.f32 %v2072, 0.0
        %v2699 = vmax.f32 %v2077, 0.0
        %v2700 = vmax.f32 %v2082, 0.0
        %v2701 = vmax.f32 %v2087, 0.0
        %v2702 = vmax.f32 %v2092, 0.0
        %v2703 = vmax.f32 %v2097, 0.0
        %v2704 = vmax.f32 %v2102, 0.0
        %v2705 = vmax.f32 %v2107, 0.0
        %v2706 = vmax.f32 %v2112, 0.0
        %v2707 = vmax.f32 %v2117, 0.0
        %v2708 = vmax.f32 %v2122, 0.0
        %v2709 = vmax.f32 %v2127, 0.0
        %v2710 = vmax.f32 %v2132, 0.0
        %v2711 = vmax.f32 %v2137, 0.0
        %v2712 = vmax.f32 %v2142, 0.0
        %v2713 = vmax.f32 %v2147, 0.0
        %v2714 = vmax.f32 %v2152, 0.0
        %v2715 = vmax.f32 %v2157, 0.0
        %v2716 = vmax.f32 %v2162, 0.0
        %v2717 = vmax.f32 %v2167, 0.0
        %v2718 = vmax.f32 %v2172, 0.0
        %v2719 = vmax.f32 %v2177, 0.0
        %v2720 = vmax.f32 %v2182, 0.0
        %v2721 = vmax.f32 %v2187, 0.0
        %v2722 = vmax.f32 %v2192, 0.0
        %v2723 = vmax.f32 %v2197, 0.0
        %v2724 = vmax.f32 %v2202, 0.0
        %v2725 = vmax.f32 %v2207, 0.0
        %v2726 = vmax.f32 %v2212, 0.0
        %v2727 = vmax.f32 %v2217, 0.0
        %v2728 = vmax.f32 %v2222, 0.0
        %v2729 = vmax.f32 %v2227, 0.0
        %v2730 = vmax.f32 %v2232, 0.0
        %v2731 = vmax.f32 %v2237, 0.0
        %v2732 = vmax.f32 %v2242, 0.0
        %v2733 = vmax.f32 %v2247, 0.0
        %v2734 = vmax.f32 %v2252, 0.0
        %v2735 = vmax.f32 %v2257, 0.0
        %v2736 = vmax.f32 %v2262, 0.0
        %v2737 = vmax.f32 %v2267, 0.0
        %v2738 = vmax.f32 %v2272, 0.0
        %v2739 = vmax.f32 %v2277, 0.0
        %v2740 = vmax.f32 %v2282, 0.0
        %v2741 = vmax.f32 %v2287, 0.0
        %v2742 = vmax.f32 %v2292, 0.0
        %v2743 = vmax.f32 %v2297, 0.0
        %v2744 = vmax.f32 %v2302, 0.0
        %v2745 = vmax.f32 %v2307, 0.0
        %v2746 = vmax.f32 %v2312, 0.0
        %v2747 = vmax.f32 %v2317, 0.0
        %v2748 = vmax.f32 %v2322, 0.0
        %v2749 = vmax.f32 %v2327, 0.0
        %v2750 = vmax.f32 %v2332, 0.0
        %v2751 = vmax.f32 %v2337, 0.0
        %v2752 = vmax.f32 %v2342, 0.0
        %v2753 = vmax.f32 %v2347, 0.0
        %v2754 = vmax.f32 %v2352, 0.0
        %v2755 = vmax.f32 %v2357, 0.0
        %v2756 = vmax.f32 %v2362, 0.0
        %v2757 = vmax.f32 %v2367, 0.0
        %v2758 = vmax.f32 %v2372, 0.0
        %v2759 = vmax.f32 %v2377, 0.0
        %v2760 = vmax.f32 %v2382, 0.0
        %v2761 = vmax.f32 %v2387, 0.0
        %v2762 = vmax.f32 %v2392, 0.0
        %v2763 = vmax.f32 %v2397, 0.0
        %v2764 = vmax.f32 %v2402, 0.0
        %v2765 = vmax.f32 %v2407, 0.0
        %v2766 = vmax.f32 %v2412, 0.0
        %v2767 = vmax.f32 %v2417, 0.0
        %v2768 = vmax.f32 %v2422, 0.0
        %v2769 = vmax.f32 %v2427, 0.0
        %v2770 = vmax.f32 %v2432, 0.0
        %v2771 = vmax.f32 %v2437, 0.0
        %v2772 = vmax.f32 %v2442, 0.0
        %v2773 = vmax.f32 %v2447, 0.0
        %v2774 = vmax.f32 %v2452, 0.0
        %v2775 = vmax.f32 %v2457, 0.0
        %v2776 = vmax.f32 %v2462, 0.0
        %v2777 = vmax.f32 %v2467, 0.0
        %v2778 = vmax.f32 %v2472, 0.0
        %v2779 = vmax.f32 %v2477, 0.0
        %v2780 = vmax.f32 %v2482, 0.0
        %v2781 = vmax.f32 %v2487, 0.0
        %v2782 = vmax.f32 %v2492, 0.0
        %v2783 = vmax.f32 %v2497, 0.0
        %v2784 = vmax.f32 %v2502, 0.0
        %v2785 = vmax.f32 %v2507, 0.0
        %v2786 = vmax.f32 %v2512, 0.0
        %v2787 = vmax.f32 %v2517, 0.0
        %v2788 = vmax.f32 %v2522, 0.0
        %v2789 = vmax.f32 %v2527, 0.0
        %v2790 = vmax.f32 %v2532, 0.0
        %v2791 = vmax.f32 %v2537, 0.0
        %v2792 = vmax.f32 %v2542, 0.0
        %v2793 = vmax.f32 %v2547, 0.0
        %v2794 = vmax.f32 %v2552, 0.0
        %v2795 = vmax.f32 %v2557, 0.0
        %v2796 = vmax.f32 %v2562, 0.0
        %v2797 = vmax.f32 %v2567, 0.0
        %v2798 = vmax.f32 %v2572, 0.0
        %v2799 = vmax.f32 %v2577, 0.0
        %v2800 = vmax.f32 %v2582, 0.0
        %v2801 = vmax.f32 %v2587, 0.0
        %v2802 = vmax.f32 %v2592, 0.0
        %v2803 = vmax.f32 %v2597, 0.0
        %v2804 = vmax.f32 %v2602, 0.0
        %v2805 = vmax.f32 %v2607, 0.0
        %v2806 = vmax.f32 %v2612, 0.0
        %v2807 = vmax.f32 %v2617, 0.0
        %v2808 = vmax.f32 %v2622, 0.0
        %v2809 = vmax.f32 %v2627, 0.0
        %v2810 = vmax.f32 %v2632, 0.0
        %v2811 = vmax.f32 %v2637, 0.0
        %v2812 = vmax.f32 %v2642, 0.0
        %v2813 = vmax.f32 %v2647, 0.0
        %v2814 = vmax.f32 %v2652, 0.0
        %v2815 = vmax.f32 %v2657, 0.0
        %v2816 = vmax.f32 %v2662, 0.0
        %v2817 = vmax.f32 %v2667, 0.0
        %v2818 = vmax.f32 %v2672, 0.0
        %v2819 = vmax.f32 %v2677, 0.0
        %v2820 = vmax.f32 %v2682, 0.0
        %v2821 = vmax.f32 %v2687, 0.0
        %v2822 = vmax.f32 %v2692, 0.0
        %2823 = vst.msk [vmem:[%s753] sm:$0xff] %vm1605, %v2695
        %2824 = vst.msk [vmem:[%s753 + $0x8] sm:$0xff] %vm1605, %v2696
        %2825 = vst.msk [vmem:[%s753 + $0x10] sm:$0xff] %vm1605, %v2697
        %2826 = vst.msk [vmem:[%s753 + $0x18] sm:$0xff] %vm1605, %v2698
        %2827 = vst.msk [vmem:[%s753 + $0x20] sm:$0xff] %vm1605, %v2699
        %2828 = vst.msk [vmem:[%s753 + $0x28] sm:$0xff] %vm1605, %v2700
        %2829 = vst.msk [vmem:[%s753 + $0x30] sm:$0xff] %vm1605, %v2701
        %2830 = vst.msk [vmem:[%s753 + $0x38] sm:$0xff] %vm1605, %v2702
        %2831 = vst.msk [vmem:[%s753 + $0x40] sm:$0xff] %vm1605, %v2703
        %2832 = vst.msk [vmem:[%s753 + $0x48] sm:$0xff] %vm1605, %v2704
        %2833 = vst.msk [vmem:[%s753 + $0x50] sm:$0xff] %vm1605, %v2705
        %2834 = vst.msk [vmem:[%s753 + $0x58] sm:$0xff] %vm1605, %v2706
        %2835 = vst.msk [vmem:[%s753 + $0x60] sm:$0xff] %vm1605, %v2707
        %2836 = vst.msk [vmem:[%s753 + $0x68] sm:$0xff] %vm1605, %v2708
        %2837 = vst.msk [vmem:[%s753 + $0x70] sm:$0xff] %vm1605, %v2709
        %2838 = vst.msk [vmem:[%s753 + $0x78] sm:$0xff] %vm1605, %v2710
        %2839 = vst.msk [vmem:[%s753 + $0x80] sm:$0xff] %vm1605, %v2711
        %2840 = vst.msk [vmem:[%s753 + $0x88] sm:$0xff] %vm1605, %v2712
        %2841 = vst.msk [vmem:[%s753 + $0x90] sm:$0xff] %vm1605, %v2713
        %2842 = vst.msk [vmem:[%s753 + $0x98] sm:$0xff] %vm1605, %v2714
        %2843 = vst.msk [vmem:[%s753 + $0xa0] sm:$0xff] %vm1605, %v2715
        %2844 = vst.msk [vmem:[%s753 + $0xa8] sm:$0xff] %vm1605, %v2716
        %2845 = vst.msk [vmem:[%s753 + $0xb0] sm:$0xff] %vm1605, %v2717
        %2846 = vst.msk [vmem:[%s753 + $0xb8] sm:$0xff] %vm1605, %v2718
        %2847 = vst.msk [vmem:[%s753 + $0xc0] sm:$0xff] %vm1605, %v2719
        %2848 = vst.msk [vmem:[%s753 + $0xc8] sm:$0xff] %vm1605, %v2720
        %2849 = vst.msk [vmem:[%s753 + $0xd0] sm:$0xff] %vm1605, %v2721
        %2850 = vst.msk [vmem:[%s753 + $0xd8] sm:$0xff] %vm1605, %v2722
        %2851 = vst.msk [vmem:[%s753 + $0xe0] sm:$0xff] %vm1605, %v2723
        %2852 = vst.msk [vmem:[%s753 + $0xe8] sm:$0xff] %vm1605, %v2724
        %2853 = vst.msk [vmem:[%s753 + $0xf0] sm:$0xff] %vm1605, %v2725
        %2854 = vst.msk [vmem:[%s753 + $0xf8] sm:$0xff] %vm1605, %v2726
        %2855 = vst.msk [vmem:[%s753 + $0x100] sm:$0xff] %vm1605, %v2727
        %2856 = vst.msk [vmem:[%s753 + $0x108] sm:$0xff] %vm1605, %v2728
        %2857 = vst.msk [vmem:[%s753 + $0x110] sm:$0xff] %vm1605, %v2729
        %2858 = vst.msk [vmem:[%s753 + $0x118] sm:$0xff] %vm1605, %v2730
        %2859 = vst.msk [vmem:[%s753 + $0x120] sm:$0xff] %vm1605, %v2731
        %2860 = vst.msk [vmem:[%s753 + $0x128] sm:$0xff] %vm1605, %v2732
        %2861 = vst.msk [vmem:[%s753 + $0x130] sm:$0xff] %vm1605, %v2733
        %2862 = vst.msk [vmem:[%s753 + $0x138] sm:$0xff] %vm1605, %v2734
        %2863 = vst.msk [vmem:[%s753 + $0x140] sm:$0xff] %vm1605, %v2735
        %2864 = vst.msk [vmem:[%s753 + $0x148] sm:$0xff] %vm1605, %v2736
        %2865 = vst.msk [vmem:[%s753 + $0x150] sm:$0xff] %vm1605, %v2737
        %2866 = vst.msk [vmem:[%s753 + $0x158] sm:$0xff] %vm1605, %v2738
        %2867 = vst.msk [vmem:[%s753 + $0x160] sm:$0xff] %vm1605, %v2739
        %2868 = vst.msk [vmem:[%s753 + $0x168] sm:$0xff] %vm1605, %v2740
        %2869 = vst.msk [vmem:[%s753 + $0x170] sm:$0xff] %vm1605, %v2741
        %2870 = vst.msk [vmem:[%s753 + $0x178] sm:$0xff] %vm1605, %v2742
        %2871 = vst.msk [vmem:[%s753 + $0x180] sm:$0xff] %vm1605, %v2743
        %2872 = vst.msk [vmem:[%s753 + $0x188] sm:$0xff] %vm1605, %v2744
        %2873 = vst.msk [vmem:[%s753 + $0x190] sm:$0xff] %vm1605, %v2745
        %2874 = vst.msk [vmem:[%s753 + $0x198] sm:$0xff] %vm1605, %v2746
        %2875 = vst.msk [vmem:[%s753 + $0x1a0] sm:$0xff] %vm1605, %v2747
        %2876 = vst.msk [vmem:[%s753 + $0x1a8] sm:$0xff] %vm1605, %v2748
        %2877 = vst.msk [vmem:[%s753 + $0x1b0] sm:$0xff] %vm1605, %v2749
        %2878 = vst.msk [vmem:[%s753 + $0x1b8] sm:$0xff] %vm1605, %v2750
        %2879 = vst.msk [vmem:[%s753 + $0x1c0] sm:$0xff] %vm1605, %v2751
        %2880 = vst.msk [vmem:[%s753 + $0x1c8] sm:$0xff] %vm1605, %v2752
        %2881 = vst.msk [vmem:[%s753 + $0x1d0] sm:$0xff] %vm1605, %v2753
        %2882 = vst.msk [vmem:[%s753 + $0x1d8] sm:$0xff] %vm1605, %v2754
        %2883 = vst.msk [vmem:[%s753 + $0x1e0] sm:$0xff] %vm1605, %v2755
        %2884 = vst.msk [vmem:[%s753 + $0x1e8] sm:$0xff] %vm1605, %v2756
        %2885 = vst.msk [vmem:[%s753 + $0x1f0] sm:$0xff] %vm1605, %v2757
        %2886 = vst.msk [vmem:[%s753 + $0x1f8] sm:$0xff] %vm1605, %v2758
        %2887 = vst.msk [vmem:[%s753 + $0x200] sm:$0xff] %vm1605, %v2759
        %2888 = vst.msk [vmem:[%s753 + $0x208] sm:$0xff] %vm1605, %v2760
        %2889 = vst.msk [vmem:[%s753 + $0x210] sm:$0xff] %vm1605, %v2761
        %2890 = vst.msk [vmem:[%s753 + $0x218] sm:$0xff] %vm1605, %v2762
        %2891 = vst.msk [vmem:[%s753 + $0x220] sm:$0xff] %vm1605, %v2763
        %2892 = vst.msk [vmem:[%s753 + $0x228] sm:$0xff] %vm1605, %v2764
        %2893 = vst.msk [vmem:[%s753 + $0x230] sm:$0xff] %vm1605, %v2765
        %2894 = vst.msk [vmem:[%s753 + $0x238] sm:$0xff] %vm1605, %v2766
        %2895 = vst.msk [vmem:[%s753 + $0x240] sm:$0xff] %vm1605, %v2767
        %2896 = vst.msk [vmem:[%s753 + $0x248] sm:$0xff] %vm1605, %v2768
        %2897 = vst.msk [vmem:[%s753 + $0x250] sm:$0xff] %vm1605, %v2769
        %2898 = vst.msk [vmem:[%s753 + $0x258] sm:$0xff] %vm1605, %v2770
        %2899 = vst.msk [vmem:[%s753 + $0x260] sm:$0xff] %vm1605, %v2771
        %2900 = vst.msk [vmem:[%s753 + $0x268] sm:$0xff] %vm1605, %v2772
        %2901 = vst.msk [vmem:[%s753 + $0x270] sm:$0xff] %vm1605, %v2773
        %2902 = vst.msk [vmem:[%s753 + $0x278] sm:$0xff] %vm1605, %v2774
        %2903 = vst.msk [vmem:[%s753 + $0x280] sm:$0xff] %vm1605, %v2775
        %2904 = vst.msk [vmem:[%s753 + $0x288] sm:$0xff] %vm1605, %v2776
        %2905 = vst.msk [vmem:[%s753 + $0x290] sm:$0xff] %vm1605, %v2777
        %2906 = vst.msk [vmem:[%s753 + $0x298] sm:$0xff] %vm1605, %v2778
        %2907 = vst.msk [vmem:[%s753 + $0x2a0] sm:$0xff] %vm1605, %v2779
        %2908 = vst.msk [vmem:[%s753 + $0x2a8] sm:$0xff] %vm1605, %v2780
        %2909 = vst.msk [vmem:[%s753 + $0x2b0] sm:$0xff] %vm1605, %v2781
        %2910 = vst.msk [vmem:[%s753 + $0x2b8] sm:$0xff] %vm1605, %v2782
        %2911 = vst.msk [vmem:[%s753 + $0x2c0] sm:$0xff] %vm1605, %v2783
        %2912 = vst.msk [vmem:[%s753 + $0x2c8] sm:$0xff] %vm1605, %v2784
        %2913 = vst.msk [vmem:[%s753 + $0x2d0] sm:$0xff] %vm1605, %v2785
        %2914 = vst.msk [vmem:[%s753 + $0x2d8] sm:$0xff] %vm1605, %v2786
        %2915 = vst.msk [vmem:[%s753 + $0x2e0] sm:$0xff] %vm1605, %v2787
        %2916 = vst.msk [vmem:[%s753 + $0x2e8] sm:$0xff] %vm1605, %v2788
        %2917 = vst.msk [vmem:[%s753 + $0x2f0] sm:$0xff] %vm1605, %v2789
        %2918 = vst.msk [vmem:[%s753 + $0x2f8] sm:$0xff] %vm1605, %v2790
        %2919 = vst.msk [vmem:[%s753 + $0x300] sm:$0xff] %vm1605, %v2791
        %2920 = vst.msk [vmem:[%s753 + $0x308] sm:$0xff] %vm1605, %v2792
        %2921 = vst.msk [vmem:[%s753 + $0x310] sm:$0xff] %vm1605, %v2793
        %2922 = vst.msk [vmem:[%s753 + $0x318] sm:$0xff] %vm1605, %v2794
        %2923 = vst.msk [vmem:[%s753 + $0x320] sm:$0xff] %vm1605, %v2795
        %2924 = vst.msk [vmem:[%s753 + $0x328] sm:$0xff] %vm1605, %v2796
        %2925 = vst.msk [vmem:[%s753 + $0x330] sm:$0xff] %vm1605, %v2797
        %2926 = vst.msk [vmem:[%s753 + $0x338] sm:$0xff] %vm1605, %v2798
        %2927 = vst.msk [vmem:[%s753 + $0x340] sm:$0xff] %vm1605, %v2799
        %2928 = vst.msk [vmem:[%s753 + $0x348] sm:$0xff] %vm1605, %v2800
        %2929 = vst.msk [vmem:[%s753 + $0x350] sm:$0xff] %vm1605, %v2801
        %2930 = vst.msk [vmem:[%s753 + $0x358] sm:$0xff] %vm1605, %v2802
        %2931 = vst.msk [vmem:[%s753 + $0x360] sm:$0xff] %vm1605, %v2803
        %2932 = vst.msk [vmem:[%s753 + $0x368] sm:$0xff] %vm1605, %v2804
        %2933 = vst.msk [vmem:[%s753 + $0x370] sm:$0xff] %vm1605, %v2805
        %2934 = vst.msk [vmem:[%s753 + $0x378] sm:$0xff] %vm1605, %v2806
        %2935 = vst.msk [vmem:[%s753 + $0x380] sm:$0xff] %vm1605, %v2807
        %2936 = vst.msk [vmem:[%s753 + $0x388] sm:$0xff] %vm1605, %v2808
        %2937 = vst.msk [vmem:[%s753 + $0x390] sm:$0xff] %vm1605, %v2809
        %2938 = vst.msk [vmem:[%s753 + $0x398] sm:$0xff] %vm1605, %v2810
        %2939 = vst.msk [vmem:[%s753 + $0x3a0] sm:$0xff] %vm1605, %v2811
        %2940 = vst.msk [vmem:[%s753 + $0x3a8] sm:$0xff] %vm1605, %v2812
        %2941 = vst.msk [vmem:[%s753 + $0x3b0] sm:$0xff] %vm1605, %v2813
        %2942 = vst.msk [vmem:[%s753 + $0x3b8] sm:$0xff] %vm1605, %v2814
        %2943 = vst.msk [vmem:[%s753 + $0x3c0] sm:$0xff] %vm1605, %v2815
        %2944 = vst.msk [vmem:[%s753 + $0x3c8] sm:$0xff] %vm1605, %v2816
        %2945 = vst.msk [vmem:[%s753 + $0x3d0] sm:$0xff] %vm1605, %v2817
        %2946 = vst.msk [vmem:[%s753 + $0x3d8] sm:$0xff] %vm1605, %v2818
        %2947 = vst.msk [vmem:[%s753 + $0x3e0] sm:$0xff] %vm1605, %v2819
        %2948 = vst.msk [vmem:[%s753 + $0x3e8] sm:$0xff] %vm1605, %v2820
        %2949 = vst.msk [vmem:[%s753 + $0x3f0] sm:$0xff] %vm1605, %v2821
        %2950 = vst.msk [vmem:[%s753 + $0x3f8] sm:$0xff] %vm1605, %v2822
        %s2951 = sand.u32 %s128, 1
        %s2952 = sand.u32 %s128, 1
        %s2953 = smul.addr %s2952, 1024
        %s2954 = scalar_lea.vmem [#allocation4], %s2953
        // Predicated region
        $region82: #{gcn_ffn.1} parent=69 // pred_check
          %p2955 = pneg %p138
        $region83: #{gcn_ffn.1} parent=69 // pred_check_branch
          %2957 = sbr.rel (%p2955) target = $region85
        $region84: #{gcn_ffn.1} parent=69 // pred_region
          %s2958 = smul.u32 16, %s20
          %s2959 = smul.addr %s19, 256
          %s2960 = sadd.s32 %s2958, %s2959
          %s2961 = smul.addr %s2960, 8
          %s2962 = scalar_lea.vmem %s4, %s2961
          // Predicated region
          $region86: #{gcn_ffn.1} parent=84 // pred_check
            _
          $region87: #{gcn_ffn.1} parent=84 // pred_check_branch
            %2964 = sbr.rel (0) target = $region89
          $region88: #{gcn_ffn.1} parent=84 // pred_region
            // Predicated region
            $region90: #{gcn_ffn.1} parent=88 // pred_check
              _
            $region91: #{gcn_ffn.1} parent=88 // pred_check_branch
              %2966 = sbr.rel (0) target = $region93
            $region92: #{gcn_ffn.1} parent=88 // pred_region
              // Predicated region
              $region105: #{gcn_ffn.1} parent=92 // pred_check
                _
              $region106: #{gcn_ffn.1} parent=92 // pred_check_branch
                %3236 = sbr.rel (0) target = $region108
              $region107: #{gcn_ffn.1} parent=92 // pred_region
                loop: start=0, step=1, limit=1
                $region109: #{gcn_ffn.1} parent=107 // loop_pre_header
                  _
                $region110: #{gcn_ffn.1} parent=107 // loop_header
                  %s3238 = sphi 0, %s3242
                  %p3239 = scmp.ge.s32.totalorder %s3238, 1
                  %s3243 = sphi %s2954, %s2954
                  %s3244 = sphi %s2962, %s2962
                $region111: #{gcn_ffn.1} parent=107 // loop_header_branch
                  %3241 = sbr.rel (%p3239) target = $region115
                $region112: #{gcn_ffn.1} parent=107 // loop_body
                  %v3245 = vld [vmem:[%s3243] sm:$0xff]
                  %3246 = vst [vmem:[%s3244] sm:$0xff] %v3245
                  %v3247 = vld [vmem:[%s3243 + $0x8] sm:$0xff]
                  %3248 = vst [vmem:[%s3244 + $0x8] sm:$0xff] %v3247
                  %v3249 = vld [vmem:[%s3243 + $0x10] sm:$0xff]
                  %3250 = vst [vmem:[%s3244 + $0x10] sm:$0xff] %v3249
                  %v3251 = vld [vmem:[%s3243 + $0x18] sm:$0xff]
                  %3252 = vst [vmem:[%s3244 + $0x18] sm:$0xff] %v3251
                  %v3253 = vld [vmem:[%s3243 + $0x20] sm:$0xff]
                  %3254 = vst [vmem:[%s3244 + $0x20] sm:$0xff] %v3253
                  %v3255 = vld [vmem:[%s3243 + $0x28] sm:$0xff]
                  %3256 = vst [vmem:[%s3244 + $0x28] sm:$0xff] %v3255
                  %v3257 = vld [vmem:[%s3243 + $0x30] sm:$0xff]
                  %3258 = vst [vmem:[%s3244 + $0x30] sm:$0xff] %v3257
                  %v3259 = vld [vmem:[%s3243 + $0x38] sm:$0xff]
                  %3260 = vst [vmem:[%s3244 + $0x38] sm:$0xff] %v3259
                  %v3261 = vld [vmem:[%s3243 + $0x40] sm:$0xff]
                  %3262 = vst [vmem:[%s3244 + $0x40] sm:$0xff] %v3261
                  %v3263 = vld [vmem:[%s3243 + $0x48] sm:$0xff]
                  %3264 = vst [vmem:[%s3244 + $0x48] sm:$0xff] %v3263
                  %v3265 = vld [vmem:[%s3243 + $0x50] sm:$0xff]
                  %3266 = vst [vmem:[%s3244 + $0x50] sm:$0xff] %v3265
                  %v3267 = vld [vmem:[%s3243 + $0x58] sm:$0xff]
                  %3268 = vst [vmem:[%s3244 + $0x58] sm:$0xff] %v3267
                  %v3269 = vld [vmem:[%s3243 + $0x60] sm:$0xff]
                  %3270 = vst [vmem:[%s3244 + $0x60] sm:$0xff] %v3269
                  %v3271 = vld [vmem:[%s3243 + $0x68] sm:$0xff]
                  %3272 = vst [vmem:[%s3244 + $0x68] sm:$0xff] %v3271
                  %v3273 = vld [vmem:[%s3243 + $0x70] sm:$0xff]
                  %3274 = vst [vmem:[%s3244 + $0x70] sm:$0xff] %v3273
                  %v3275 = vld [vmem:[%s3243 + $0x78] sm:$0xff]
                  %3276 = vst [vmem:[%s3244 + $0x78] sm:$0xff] %v3275
                  %v3277 = vld [vmem:[%s3243 + $0x80] sm:$0xff]
                  %3278 = vst [vmem:[%s3244 + $0x100] sm:$0xff] %v3277
                  %v3279 = vld [vmem:[%s3243 + $0x88] sm:$0xff]
                  %3280 = vst [vmem:[%s3244 + $0x108] sm:$0xff] %v3279
                  %v3281 = vld [vmem:[%s3243 + $0x90] sm:$0xff]
                  %3282 = vst [vmem:[%s3244 + $0x110] sm:$0xff] %v3281
                  %v3283 = vld [vmem:[%s3243 + $0x98] sm:$0xff]
                  %3284 = vst [vmem:[%s3244 + $0x118] sm:$0xff] %v3283
                  %v3285 = vld [vmem:[%s3243 + $0xa0] sm:$0xff]
                  %3286 = vst [vmem:[%s3244 + $0x120] sm:$0xff] %v3285
                  %v3287 = vld [vmem:[%s3243 + $0xa8] sm:$0xff]
                  %3288 = vst [vmem:[%s3244 + $0x128] sm:$0xff] %v3287
                  %v3289 = vld [vmem:[%s3243 + $0xb0] sm:$0xff]
                  %3290 = vst [vmem:[%s3244 + $0x130] sm:$0xff] %v3289
                  %v3291 = vld [vmem:[%s3243 + $0xb8] sm:$0xff]
                  %3292 = vst [vmem:[%s3244 + $0x138] sm:$0xff] %v3291
                  %v3293 = vld [vmem:[%s3243 + $0xc0] sm:$0xff]
                  %3294 = vst [vmem:[%s3244 + $0x140] sm:$0xff] %v3293
                  %v3295 = vld [vmem:[%s3243 + $0xc8] sm:$0xff]
                  %3296 = vst [vmem:[%s3244 + $0x148] sm:$0xff] %v3295
                  %v3297 = vld [vmem:[%s3243 + $0xd0] sm:$0xff]
                  %3298 = vst [vmem:[%s3244 + $0x150] sm:$0xff] %v3297
                  %v3299 = vld [vmem:[%s3243 + $0xd8] sm:$0xff]
                  %3300 = vst [vmem:[%s3244 + $0x158] sm:$0xff] %v3299
                  %v3301 = vld [vmem:[%s3243 + $0xe0] sm:$0xff]
                  %3302 = vst [vmem:[%s3244 + $0x160] sm:$0xff] %v3301
                  %v3303 = vld [vmem:[%s3243 + $0xe8] sm:$0xff]
                  %3304 = vst [vmem:[%s3244 + $0x168] sm:$0xff] %v3303
                  %v3305 = vld [vmem:[%s3243 + $0xf0] sm:$0xff]
                  %3306 = vst [vmem:[%s3244 + $0x170] sm:$0xff] %v3305
                  %v3307 = vld [vmem:[%s3243 + $0xf8] sm:$0xff]
                  %3308 = vst [vmem:[%s3244 + $0x178] sm:$0xff] %v3307
                  %v3309 = vld [vmem:[%s3243 + $0x100] sm:$0xff]
                  %3310 = vst [vmem:[%s3244 + $0x200] sm:$0xff] %v3309
                  %v3311 = vld [vmem:[%s3243 + $0x108] sm:$0xff]
                  %3312 = vst [vmem:[%s3244 + $0x208] sm:$0xff] %v3311
                  %v3313 = vld [vmem:[%s3243 + $0x110] sm:$0xff]
                  %3314 = vst [vmem:[%s3244 + $0x210] sm:$0xff] %v3313
                  %v3315 = vld [vmem:[%s3243 + $0x118] sm:$0xff]
                  %3316 = vst [vmem:[%s3244 + $0x218] sm:$0xff] %v3315
                  %v3317 = vld [vmem:[%s3243 + $0x120] sm:$0xff]
                  %3318 = vst [vmem:[%s3244 + $0x220] sm:$0xff] %v3317
                  %v3319 = vld [vmem:[%s3243 + $0x128] sm:$0xff]
                  %3320 = vst [vmem:[%s3244 + $0x228] sm:$0xff] %v3319
                  %v3321 = vld [vmem:[%s3243 + $0x130] sm:$0xff]
                  %3322 = vst [vmem:[%s3244 + $0x230] sm:$0xff] %v3321
                  %v3323 = vld [vmem:[%s3243 + $0x138] sm:$0xff]
                  %3324 = vst [vmem:[%s3244 + $0x238] sm:$0xff] %v3323
                  %v3325 = vld [vmem:[%s3243 + $0x140] sm:$0xff]
                  %3326 = vst [vmem:[%s3244 + $0x240] sm:$0xff] %v3325
                  %v3327 = vld [vmem:[%s3243 + $0x148] sm:$0xff]
                  %3328 = vst [vmem:[%s3244 + $0x248] sm:$0xff] %v3327
                  %v3329 = vld [vmem:[%s3243 + $0x150] sm:$0xff]
                  %3330 = vst [vmem:[%s3244 + $0x250] sm:$0xff] %v3329
                  %v3331 = vld [vmem:[%s3243 + $0x158] sm:$0xff]
                  %3332 = vst [vmem:[%s3244 + $0x258] sm:$0xff] %v3331
                  %v3333 = vld [vmem:[%s3243 + $0x160] sm:$0xff]
                  %3334 = vst [vmem:[%s3244 + $0x260] sm:$0xff] %v3333
                  %v3335 = vld [vmem:[%s3243 + $0x168] sm:$0xff]
                  %3336 = vst [vmem:[%s3244 + $0x268] sm:$0xff] %v3335
                  %v3337 = vld [vmem:[%s3243 + $0x170] sm:$0xff]
                  %3338 = vst [vmem:[%s3244 + $0x270] sm:$0xff] %v3337
                  %v3339 = vld [vmem:[%s3243 + $0x178] sm:$0xff]
                  %3340 = vst [vmem:[%s3244 + $0x278] sm:$0xff] %v3339
                  %v3341 = vld [vmem:[%s3243 + $0x180] sm:$0xff]
                  %3342 = vst [vmem:[%s3244 + $0x300] sm:$0xff] %v3341
                  %v3343 = vld [vmem:[%s3243 + $0x188] sm:$0xff]
                  %3344 = vst [vmem:[%s3244 + $0x308] sm:$0xff] %v3343
                  %v3345 = vld [vmem:[%s3243 + $0x190] sm:$0xff]
                  %3346 = vst [vmem:[%s3244 + $0x310] sm:$0xff] %v3345
                  %v3347 = vld [vmem:[%s3243 + $0x198] sm:$0xff]
                  %3348 = vst [vmem:[%s3244 + $0x318] sm:$0xff] %v3347
                  %v3349 = vld [vmem:[%s3243 + $0x1a0] sm:$0xff]
                  %3350 = vst [vmem:[%s3244 + $0x320] sm:$0xff] %v3349
                  %v3351 = vld [vmem:[%s3243 + $0x1a8] sm:$0xff]
                  %3352 = vst [vmem:[%s3244 + $0x328] sm:$0xff] %v3351
                  %v3353 = vld [vmem:[%s3243 + $0x1b0] sm:$0xff]
                  %3354 = vst [vmem:[%s3244 + $0x330] sm:$0xff] %v3353
                  %v3355 = vld [vmem:[%s3243 + $0x1b8] sm:$0xff]
                  %3356 = vst [vmem:[%s3244 + $0x338] sm:$0xff] %v3355
                  %v3357 = vld [vmem:[%s3243 + $0x1c0] sm:$0xff]
                  %3358 = vst [vmem:[%s3244 + $0x340] sm:$0xff] %v3357
                  %v3359 = vld [vmem:[%s3243 + $0x1c8] sm:$0xff]
                  %3360 = vst [vmem:[%s3244 + $0x348] sm:$0xff] %v3359
                  %v3361 = vld [vmem:[%s3243 + $0x1d0] sm:$0xff]
                  %3362 = vst [vmem:[%s3244 + $0x350] sm:$0xff] %v3361
                  %v3363 = vld [vmem:[%s3243 + $0x1d8] sm:$0xff]
                  %3364 = vst [vmem:[%s3244 + $0x358] sm:$0xff] %v3363
                  %v3365 = vld [vmem:[%s3243 + $0x1e0] sm:$0xff]
                  %3366 = vst [vmem:[%s3244 + $0x360] sm:$0xff] %v3365
                  %v3367 = vld [vmem:[%s3243 + $0x1e8] sm:$0xff]
                  %3368 = vst [vmem:[%s3244 + $0x368] sm:$0xff] %v3367
                  %v3369 = vld [vmem:[%s3243 + $0x1f0] sm:$0xff]
                  %3370 = vst [vmem:[%s3244 + $0x370] sm:$0xff] %v3369
                  %v3371 = vld [vmem:[%s3243 + $0x1f8] sm:$0xff]
                  %3372 = vst [vmem:[%s3244 + $0x378] sm:$0xff] %v3371
                  %v3373 = vld [vmem:[%s3243 + $0x200] sm:$0xff]
                  %3374 = vst [vmem:[%s3244 + $0x400] sm:$0xff] %v3373
                  %v3375 = vld [vmem:[%s3243 + $0x208] sm:$0xff]
                  %3376 = vst [vmem:[%s3244 + $0x408] sm:$0xff] %v3375
                  %v3377 = vld [vmem:[%s3243 + $0x210] sm:$0xff]
                  %3378 = vst [vmem:[%s3244 + $0x410] sm:$0xff] %v3377
                  %v3379 = vld [vmem:[%s3243 + $0x218] sm:$0xff]
                  %3380 = vst [vmem:[%s3244 + $0x418] sm:$0xff] %v3379
                  %v3381 = vld [vmem:[%s3243 + $0x220] sm:$0xff]
                  %3382 = vst [vmem:[%s3244 + $0x420] sm:$0xff] %v3381
                  %v3383 = vld [vmem:[%s3243 + $0x228] sm:$0xff]
                  %3384 = vst [vmem:[%s3244 + $0x428] sm:$0xff] %v3383
                  %v3385 = vld [vmem:[%s3243 + $0x230] sm:$0xff]
                  %3386 = vst [vmem:[%s3244 + $0x430] sm:$0xff] %v3385
                  %v3387 = vld [vmem:[%s3243 + $0x238] sm:$0xff]
                  %3388 = vst [vmem:[%s3244 + $0x438] sm:$0xff] %v3387
                  %v3389 = vld [vmem:[%s3243 + $0x240] sm:$0xff]
                  %3390 = vst [vmem:[%s3244 + $0x440] sm:$0xff] %v3389
                  %v3391 = vld [vmem:[%s3243 + $0x248] sm:$0xff]
                  %3392 = vst [vmem:[%s3244 + $0x448] sm:$0xff] %v3391
                  %v3393 = vld [vmem:[%s3243 + $0x250] sm:$0xff]
                  %3394 = vst [vmem:[%s3244 + $0x450] sm:$0xff] %v3393
                  %v3395 = vld [vmem:[%s3243 + $0x258] sm:$0xff]
                  %3396 = vst [vmem:[%s3244 + $0x458] sm:$0xff] %v3395
                  %v3397 = vld [vmem:[%s3243 + $0x260] sm:$0xff]
                  %3398 = vst [vmem:[%s3244 + $0x460] sm:$0xff] %v3397
                  %v3399 = vld [vmem:[%s3243 + $0x268] sm:$0xff]
                  %3400 = vst [vmem:[%s3244 + $0x468] sm:$0xff] %v3399
                  %v3401 = vld [vmem:[%s3243 + $0x270] sm:$0xff]
                  %3402 = vst [vmem:[%s3244 + $0x470] sm:$0xff] %v3401
                  %v3403 = vld [vmem:[%s3243 + $0x278] sm:$0xff]
                  %3404 = vst [vmem:[%s3244 + $0x478] sm:$0xff] %v3403
                  %v3405 = vld [vmem:[%s3243 + $0x280] sm:$0xff]
                  %3406 = vst [vmem:[%s3244 + $0x500] sm:$0xff] %v3405
                  %v3407 = vld [vmem:[%s3243 + $0x288] sm:$0xff]
                  %3408 = vst [vmem:[%s3244 + $0x508] sm:$0xff] %v3407
                  %v3409 = vld [vmem:[%s3243 + $0x290] sm:$0xff]
                  %3410 = vst [vmem:[%s3244 + $0x510] sm:$0xff] %v3409
                  %v3411 = vld [vmem:[%s3243 + $0x298] sm:$0xff]
                  %3412 = vst [vmem:[%s3244 + $0x518] sm:$0xff] %v3411
                  %v3413 = vld [vmem:[%s3243 + $0x2a0] sm:$0xff]
                  %3414 = vst [vmem:[%s3244 + $0x520] sm:$0xff] %v3413
                  %v3415 = vld [vmem:[%s3243 + $0x2a8] sm:$0xff]
                  %3416 = vst [vmem:[%s3244 + $0x528] sm:$0xff] %v3415
                  %v3417 = vld [vmem:[%s3243 + $0x2b0] sm:$0xff]
                  %3418 = vst [vmem:[%s3244 + $0x530] sm:$0xff] %v3417
                  %v3419 = vld [vmem:[%s3243 + $0x2b8] sm:$0xff]
                  %3420 = vst [vmem:[%s3244 + $0x538] sm:$0xff] %v3419
                  %v3421 = vld [vmem:[%s3243 + $0x2c0] sm:$0xff]
                  %3422 = vst [vmem:[%s3244 + $0x540] sm:$0xff] %v3421
                  %v3423 = vld [vmem:[%s3243 + $0x2c8] sm:$0xff]
                  %3424 = vst [vmem:[%s3244 + $0x548] sm:$0xff] %v3423
                  %v3425 = vld [vmem:[%s3243 + $0x2d0] sm:$0xff]
                  %3426 = vst [vmem:[%s3244 + $0x550] sm:$0xff] %v3425
                  %v3427 = vld [vmem:[%s3243 + $0x2d8] sm:$0xff]
                  %3428 = vst [vmem:[%s3244 + $0x558] sm:$0xff] %v3427
                  %v3429 = vld [vmem:[%s3243 + $0x2e0] sm:$0xff]
                  %3430 = vst [vmem:[%s3244 + $0x560] sm:$0xff] %v3429
                  %v3431 = vld [vmem:[%s3243 + $0x2e8] sm:$0xff]
                  %3432 = vst [vmem:[%s3244 + $0x568] sm:$0xff] %v3431
                  %v3433 = vld [vmem:[%s3243 + $0x2f0] sm:$0xff]
                  %3434 = vst [vmem:[%s3244 + $0x570] sm:$0xff] %v3433
                  %v3435 = vld [vmem:[%s3243 + $0x2f8] sm:$0xff]
                  %3436 = vst [vmem:[%s3244 + $0x578] sm:$0xff] %v3435
                  %v3437 = vld [vmem:[%s3243 + $0x300] sm:$0xff]
                  %3438 = vst [vmem:[%s3244 + $0x600] sm:$0xff] %v3437
                  %v3439 = vld [vmem:[%s3243 + $0x308] sm:$0xff]
                  %3440 = vst [vmem:[%s3244 + $0x608] sm:$0xff] %v3439
                  %v3441 = vld [vmem:[%s3243 + $0x310] sm:$0xff]
                  %3442 = vst [vmem:[%s3244 + $0x610] sm:$0xff] %v3441
                  %v3443 = vld [vmem:[%s3243 + $0x318] sm:$0xff]
                  %3444 = vst [vmem:[%s3244 + $0x618] sm:$0xff] %v3443
                  %v3445 = vld [vmem:[%s3243 + $0x320] sm:$0xff]
                  %3446 = vst [vmem:[%s3244 + $0x620] sm:$0xff] %v3445
                  %v3447 = vld [vmem:[%s3243 + $0x328] sm:$0xff]
                  %3448 = vst [vmem:[%s3244 + $0x628] sm:$0xff] %v3447
                  %v3449 = vld [vmem:[%s3243 + $0x330] sm:$0xff]
                  %3450 = vst [vmem:[%s3244 + $0x630] sm:$0xff] %v3449
                  %v3451 = vld [vmem:[%s3243 + $0x338] sm:$0xff]
                  %3452 = vst [vmem:[%s3244 + $0x638] sm:$0xff] %v3451
                  %v3453 = vld [vmem:[%s3243 + $0x340] sm:$0xff]
                  %3454 = vst [vmem:[%s3244 + $0x640] sm:$0xff] %v3453
                  %v3455 = vld [vmem:[%s3243 + $0x348] sm:$0xff]
                  %3456 = vst [vmem:[%s3244 + $0x648] sm:$0xff] %v3455
                  %v3457 = vld [vmem:[%s3243 + $0x350] sm:$0xff]
                  %3458 = vst [vmem:[%s3244 + $0x650] sm:$0xff] %v3457
                  %v3459 = vld [vmem:[%s3243 + $0x358] sm:$0xff]
                  %3460 = vst [vmem:[%s3244 + $0x658] sm:$0xff] %v3459
                  %v3461 = vld [vmem:[%s3243 + $0x360] sm:$0xff]
                  %3462 = vst [vmem:[%s3244 + $0x660] sm:$0xff] %v3461
                  %v3463 = vld [vmem:[%s3243 + $0x368] sm:$0xff]
                  %3464 = vst [vmem:[%s3244 + $0x668] sm:$0xff] %v3463
                  %v3465 = vld [vmem:[%s3243 + $0x370] sm:$0xff]
                  %3466 = vst [vmem:[%s3244 + $0x670] sm:$0xff] %v3465
                  %v3467 = vld [vmem:[%s3243 + $0x378] sm:$0xff]
                  %3468 = vst [vmem:[%s3244 + $0x678] sm:$0xff] %v3467
                  %v3469 = vld [vmem:[%s3243 + $0x380] sm:$0xff]
                  %3470 = vst [vmem:[%s3244 + $0x700] sm:$0xff] %v3469
                  %v3471 = vld [vmem:[%s3243 + $0x388] sm:$0xff]
                  %3472 = vst [vmem:[%s3244 + $0x708] sm:$0xff] %v3471
                  %v3473 = vld [vmem:[%s3243 + $0x390] sm:$0xff]
                  %3474 = vst [vmem:[%s3244 + $0x710] sm:$0xff] %v3473
                  %v3475 = vld [vmem:[%s3243 + $0x398] sm:$0xff]
                  %3476 = vst [vmem:[%s3244 + $0x718] sm:$0xff] %v3475
                  %v3477 = vld [vmem:[%s3243 + $0x3a0] sm:$0xff]
                  %3478 = vst [vmem:[%s3244 + $0x720] sm:$0xff] %v3477
                  %v3479 = vld [vmem:[%s3243 + $0x3a8] sm:$0xff]
                  %3480 = vst [vmem:[%s3244 + $0x728] sm:$0xff] %v3479
                  %v3481 = vld [vmem:[%s3243 + $0x3b0] sm:$0xff]
                  %3482 = vst [vmem:[%s3244 + $0x730] sm:$0xff] %v3481
                  %v3483 = vld [vmem:[%s3243 + $0x3b8] sm:$0xff]
                  %3484 = vst [vmem:[%s3244 + $0x738] sm:$0xff] %v3483
                  %v3485 = vld [vmem:[%s3243 + $0x3c0] sm:$0xff]
                  %3486 = vst [vmem:[%s3244 + $0x740] sm:$0xff] %v3485
                  %v3487 = vld [vmem:[%s3243 + $0x3c8] sm:$0xff]
                  %3488 = vst [vmem:[%s3244 + $0x748] sm:$0xff] %v3487
                  %v3489 = vld [vmem:[%s3243 + $0x3d0] sm:$0xff]
                  %3490 = vst [vmem:[%s3244 + $0x750] sm:$0xff] %v3489
                  %v3491 = vld [vmem:[%s3243 + $0x3d8] sm:$0xff]
                  %3492 = vst [vmem:[%s3244 + $0x758] sm:$0xff] %v3491
                  %v3493 = vld [vmem:[%s3243 + $0x3e0] sm:$0xff]
                  %3494 = vst [vmem:[%s3244 + $0x760] sm:$0xff] %v3493
                  %v3495 = vld [vmem:[%s3243 + $0x3e8] sm:$0xff]
                  %3496 = vst [vmem:[%s3244 + $0x768] sm:$0xff] %v3495
                  %v3497 = vld [vmem:[%s3243 + $0x3f0] sm:$0xff]
                  %3498 = vst [vmem:[%s3244 + $0x770] sm:$0xff] %v3497
                  %v3499 = vld [vmem:[%s3243 + $0x3f8] sm:$0xff]
                  %3500 = vst [vmem:[%s3244 + $0x778] sm:$0xff] %v3499
                $region113: #{gcn_ffn.1} parent=107 // loop_footer
                  %s3242 = sadd.s32 1, %s3238
                $region114: #{gcn_ffn.1} parent=107 // loop_footer_branch
                  %3237 = sbr.rel target = $region110
                $region115: #{gcn_ffn.1} parent=107 // loop_exit
                  _
              $region108: #{gcn_ffn.1} parent=92 // pred_fallthru
                _
              // Predicated region
              $region116: #{gcn_ffn.1} parent=92 // pred_check
                _
              $region117: #{gcn_ffn.1} parent=92 // pred_check_branch
                %3502 = sbr.rel target = $region119
              $region118: #{gcn_ffn.1} parent=92 // pred_region
                _
              $region119: #{gcn_ffn.1} parent=92 // pred_fallthru
                _
            $region93: #{gcn_ffn.1} parent=88 // pred_fallthru
              _
            // Predicated region
            $region94: #{gcn_ffn.1} parent=88 // pred_check
              _
            $region95: #{gcn_ffn.1} parent=88 // pred_check_branch
              %2968 = sbr.rel target = $region97
            $region96: #{gcn_ffn.1} parent=88 // pred_region
              %s2970 = ssub.s32 256, 1
              loop: start=0, step=1, limit=1
              $region98: #{gcn_ffn.1} parent=96 // loop_pre_header
                _
              $region99: #{gcn_ffn.1} parent=96 // loop_header
                %s2972 = sphi 0, %s2976
                %p2973 = scmp.ge.s32.totalorder %s2972, 1
                %s2977 = sphi %s2954, %s2954
                %s2978 = sphi %s2962, %s2962
              $region100: #{gcn_ffn.1} parent=96 // loop_header_branch
                %2975 = sbr.rel (%p2973) target = $region104
              $region101: #{gcn_ffn.1} parent=96 // loop_body
                %v2979 = vld [vmem:[%s2977] sm:%s2970]
                %2980 = vst [vmem:[%s2978] sm:%s2970] %v2979
                %v2981 = vld [vmem:[%s2977 + $0x8] sm:%s2970]
                %2982 = vst [vmem:[%s2978 + $0x8] sm:%s2970] %v2981
                %v2983 = vld [vmem:[%s2977 + $0x10] sm:%s2970]
                %2984 = vst [vmem:[%s2978 + $0x10] sm:%s2970] %v2983
                %v2985 = vld [vmem:[%s2977 + $0x18] sm:%s2970]
                %2986 = vst [vmem:[%s2978 + $0x18] sm:%s2970] %v2985
                %v2987 = vld [vmem:[%s2977 + $0x20] sm:%s2970]
                %2988 = vst [vmem:[%s2978 + $0x20] sm:%s2970] %v2987
                %v2989 = vld [vmem:[%s2977 + $0x28] sm:%s2970]
                %2990 = vst [vmem:[%s2978 + $0x28] sm:%s2970] %v2989
                %v2991 = vld [vmem:[%s2977 + $0x30] sm:%s2970]
                %2992 = vst [vmem:[%s2978 + $0x30] sm:%s2970] %v2991
                %v2993 = vld [vmem:[%s2977 + $0x38] sm:%s2970]
                %2994 = vst [vmem:[%s2978 + $0x38] sm:%s2970] %v2993
                %v2995 = vld [vmem:[%s2977 + $0x40] sm:%s2970]
                %2996 = vst [vmem:[%s2978 + $0x40] sm:%s2970] %v2995
                %v2997 = vld [vmem:[%s2977 + $0x48] sm:%s2970]
                %2998 = vst [vmem:[%s2978 + $0x48] sm:%s2970] %v2997
                %v2999 = vld [vmem:[%s2977 + $0x50] sm:%s2970]
                %3000 = vst [vmem:[%s2978 + $0x50] sm:%s2970] %v2999
                %v3001 = vld [vmem:[%s2977 + $0x58] sm:%s2970]
                %3002 = vst [vmem:[%s2978 + $0x58] sm:%s2970] %v3001
                %v3003 = vld [vmem:[%s2977 + $0x60] sm:%s2970]
                %3004 = vst [vmem:[%s2978 + $0x60] sm:%s2970] %v3003
                %v3005 = vld [vmem:[%s2977 + $0x68] sm:%s2970]
                %3006 = vst [vmem:[%s2978 + $0x68] sm:%s2970] %v3005
                %v3007 = vld [vmem:[%s2977 + $0x70] sm:%s2970]
                %3008 = vst [vmem:[%s2978 + $0x70] sm:%s2970] %v3007
                %v3009 = vld [vmem:[%s2977 + $0x78] sm:%s2970]
                %3010 = vst [vmem:[%s2978 + $0x78] sm:%s2970] %v3009
                %v3011 = vld [vmem:[%s2977 + $0x80] sm:%s2970]
                %3012 = vst [vmem:[%s2978 + $0x100] sm:%s2970] %v3011
                %v3013 = vld [vmem:[%s2977 + $0x88] sm:%s2970]
                %3014 = vst [vmem:[%s2978 + $0x108] sm:%s2970] %v3013
                %v3015 = vld [vmem:[%s2977 + $0x90] sm:%s2970]
                %3016 = vst [vmem:[%s2978 + $0x110] sm:%s2970] %v3015
                %v3017 = vld [vmem:[%s2977 + $0x98] sm:%s2970]
                %3018 = vst [vmem:[%s2978 + $0x118] sm:%s2970] %v3017
                %v3019 = vld [vmem:[%s2977 + $0xa0] sm:%s2970]
                %3020 = vst [vmem:[%s2978 + $0x120] sm:%s2970] %v3019
                %v3021 = vld [vmem:[%s2977 + $0xa8] sm:%s2970]
                %3022 = vst [vmem:[%s2978 + $0x128] sm:%s2970] %v3021
                %v3023 = vld [vmem:[%s2977 + $0xb0] sm:%s2970]
                %3024 = vst [vmem:[%s2978 + $0x130] sm:%s2970] %v3023
                %v3025 = vld [vmem:[%s2977 + $0xb8] sm:%s2970]
                %3026 = vst [vmem:[%s2978 + $0x138] sm:%s2970] %v3025
                %v3027 = vld [vmem:[%s2977 + $0xc0] sm:%s2970]
                %3028 = vst [vmem:[%s2978 + $0x140] sm:%s2970] %v3027
                %v3029 = vld [vmem:[%s2977 + $0xc8] sm:%s2970]
                %3030 = vst [vmem:[%s2978 + $0x148] sm:%s2970] %v3029
                %v3031 = vld [vmem:[%s2977 + $0xd0] sm:%s2970]
                %3032 = vst [vmem:[%s2978 + $0x150] sm:%s2970] %v3031
                %v3033 = vld [vmem:[%s2977 + $0xd8] sm:%s2970]
                %3034 = vst [vmem:[%s2978 + $0x158] sm:%s2970] %v3033
                %v3035 = vld [vmem:[%s2977 + $0xe0] sm:%s2970]
                %3036 = vst [vmem:[%s2978 + $0x160] sm:%s2970] %v3035
                %v3037 = vld [vmem:[%s2977 + $0xe8] sm:%s2970]
                %3038 = vst [vmem:[%s2978 + $0x168] sm:%s2970] %v3037
                %v3039 = vld [vmem:[%s2977 + $0xf0] sm:%s2970]
                %3040 = vst [vmem:[%s2978 + $0x170] sm:%s2970] %v3039
                %v3041 = vld [vmem:[%s2977 + $0xf8] sm:%s2970]
                %3042 = vst [vmem:[%s2978 + $0x178] sm:%s2970] %v3041
                %v3043 = vld [vmem:[%s2977 + $0x100] sm:%s2970]
                %3044 = vst [vmem:[%s2978 + $0x200] sm:%s2970] %v3043
                %v3045 = vld [vmem:[%s2977 + $0x108] sm:%s2970]
                %3046 = vst [vmem:[%s2978 + $0x208] sm:%s2970] %v3045
                %v3047 = vld [vmem:[%s2977 + $0x110] sm:%s2970]
                %3048 = vst [vmem:[%s2978 + $0x210] sm:%s2970] %v3047
                %v3049 = vld [vmem:[%s2977 + $0x118] sm:%s2970]
                %3050 = vst [vmem:[%s2978 + $0x218] sm:%s2970] %v3049
                %v3051 = vld [vmem:[%s2977 + $0x120] sm:%s2970]
                %3052 = vst [vmem:[%s2978 + $0x220] sm:%s2970] %v3051
                %v3053 = vld [vmem:[%s2977 + $0x128] sm:%s2970]
                %3054 = vst [vmem:[%s2978 + $0x228] sm:%s2970] %v3053
                %v3055 = vld [vmem:[%s2977 + $0x130] sm:%s2970]
                %3056 = vst [vmem:[%s2978 + $0x230] sm:%s2970] %v3055
                %v3057 = vld [vmem:[%s2977 + $0x138] sm:%s2970]
                %3058 = vst [vmem:[%s2978 + $0x238] sm:%s2970] %v3057
                %v3059 = vld [vmem:[%s2977 + $0x140] sm:%s2970]
                %3060 = vst [vmem:[%s2978 + $0x240] sm:%s2970] %v3059
                %v3061 = vld [vmem:[%s2977 + $0x148] sm:%s2970]
                %3062 = vst [vmem:[%s2978 + $0x248] sm:%s2970] %v3061
                %v3063 = vld [vmem:[%s2977 + $0x150] sm:%s2970]
                %3064 = vst [vmem:[%s2978 + $0x250] sm:%s2970] %v3063
                %v3065 = vld [vmem:[%s2977 + $0x158] sm:%s2970]
                %3066 = vst [vmem:[%s2978 + $0x258] sm:%s2970] %v3065
                %v3067 = vld [vmem:[%s2977 + $0x160] sm:%s2970]
                %3068 = vst [vmem:[%s2978 + $0x260] sm:%s2970] %v3067
                %v3069 = vld [vmem:[%s2977 + $0x168] sm:%s2970]
                %3070 = vst [vmem:[%s2978 + $0x268] sm:%s2970] %v3069
                %v3071 = vld [vmem:[%s2977 + $0x170] sm:%s2970]
                %3072 = vst [vmem:[%s2978 + $0x270] sm:%s2970] %v3071
                %v3073 = vld [vmem:[%s2977 + $0x178] sm:%s2970]
                %3074 = vst [vmem:[%s2978 + $0x278] sm:%s2970] %v3073
                %v3075 = vld [vmem:[%s2977 + $0x180] sm:%s2970]
                %3076 = vst [vmem:[%s2978 + $0x300] sm:%s2970] %v3075
                %v3077 = vld [vmem:[%s2977 + $0x188] sm:%s2970]
                %3078 = vst [vmem:[%s2978 + $0x308] sm:%s2970] %v3077
                %v3079 = vld [vmem:[%s2977 + $0x190] sm:%s2970]
                %3080 = vst [vmem:[%s2978 + $0x310] sm:%s2970] %v3079
                %v3081 = vld [vmem:[%s2977 + $0x198] sm:%s2970]
                %3082 = vst [vmem:[%s2978 + $0x318] sm:%s2970] %v3081
                %v3083 = vld [vmem:[%s2977 + $0x1a0] sm:%s2970]
                %3084 = vst [vmem:[%s2978 + $0x320] sm:%s2970] %v3083
                %v3085 = vld [vmem:[%s2977 + $0x1a8] sm:%s2970]
                %3086 = vst [vmem:[%s2978 + $0x328] sm:%s2970] %v3085
                %v3087 = vld [vmem:[%s2977 + $0x1b0] sm:%s2970]
                %3088 = vst [vmem:[%s2978 + $0x330] sm:%s2970] %v3087
                %v3089 = vld [vmem:[%s2977 + $0x1b8] sm:%s2970]
                %3090 = vst [vmem:[%s2978 + $0x338] sm:%s2970] %v3089
                %v3091 = vld [vmem:[%s2977 + $0x1c0] sm:%s2970]
                %3092 = vst [vmem:[%s2978 + $0x340] sm:%s2970] %v3091
                %v3093 = vld [vmem:[%s2977 + $0x1c8] sm:%s2970]
                %3094 = vst [vmem:[%s2978 + $0x348] sm:%s2970] %v3093
                %v3095 = vld [vmem:[%s2977 + $0x1d0] sm:%s2970]
                %3096 = vst [vmem:[%s2978 + $0x350] sm:%s2970] %v3095
                %v3097 = vld [vmem:[%s2977 + $0x1d8] sm:%s2970]
                %3098 = vst [vmem:[%s2978 + $0x358] sm:%s2970] %v3097
                %v3099 = vld [vmem:[%s2977 + $0x1e0] sm:%s2970]
                %3100 = vst [vmem:[%s2978 + $0x360] sm:%s2970] %v3099
                %v3101 = vld [vmem:[%s2977 + $0x1e8] sm:%s2970]
                %3102 = vst [vmem:[%s2978 + $0x368] sm:%s2970] %v3101
                %v3103 = vld [vmem:[%s2977 + $0x1f0] sm:%s2970]
                %3104 = vst [vmem:[%s2978 + $0x370] sm:%s2970] %v3103
                %v3105 = vld [vmem:[%s2977 + $0x1f8] sm:%s2970]
                %3106 = vst [vmem:[%s2978 + $0x378] sm:%s2970] %v3105
                %v3107 = vld [vmem:[%s2977 + $0x200] sm:%s2970]
                %3108 = vst [vmem:[%s2978 + $0x400] sm:%s2970] %v3107
                %v3109 = vld [vmem:[%s2977 + $0x208] sm:%s2970]
                %3110 = vst [vmem:[%s2978 + $0x408] sm:%s2970] %v3109
                %v3111 = vld [vmem:[%s2977 + $0x210] sm:%s2970]
                %3112 = vst [vmem:[%s2978 + $0x410] sm:%s2970] %v3111
                %v3113 = vld [vmem:[%s2977 + $0x218] sm:%s2970]
                %3114 = vst [vmem:[%s2978 + $0x418] sm:%s2970] %v3113
                %v3115 = vld [vmem:[%s2977 + $0x220] sm:%s2970]
                %3116 = vst [vmem:[%s2978 + $0x420] sm:%s2970] %v3115
                %v3117 = vld [vmem:[%s2977 + $0x228] sm:%s2970]
                %3118 = vst [vmem:[%s2978 + $0x428] sm:%s2970] %v3117
                %v3119 = vld [vmem:[%s2977 + $0x230] sm:%s2970]
                %3120 = vst [vmem:[%s2978 + $0x430] sm:%s2970] %v3119
                %v3121 = vld [vmem:[%s2977 + $0x238] sm:%s2970]
                %3122 = vst [vmem:[%s2978 + $0x438] sm:%s2970] %v3121
                %v3123 = vld [vmem:[%s2977 + $0x240] sm:%s2970]
                %3124 = vst [vmem:[%s2978 + $0x440] sm:%s2970] %v3123
                %v3125 = vld [vmem:[%s2977 + $0x248] sm:%s2970]
                %3126 = vst [vmem:[%s2978 + $0x448] sm:%s2970] %v3125
                %v3127 = vld [vmem:[%s2977 + $0x250] sm:%s2970]
                %3128 = vst [vmem:[%s2978 + $0x450] sm:%s2970] %v3127
                %v3129 = vld [vmem:[%s2977 + $0x258] sm:%s2970]
                %3130 = vst [vmem:[%s2978 + $0x458] sm:%s2970] %v3129
                %v3131 = vld [vmem:[%s2977 + $0x260] sm:%s2970]
                %3132 = vst [vmem:[%s2978 + $0x460] sm:%s2970] %v3131
                %v3133 = vld [vmem:[%s2977 + $0x268] sm:%s2970]
                %3134 = vst [vmem:[%s2978 + $0x468] sm:%s2970] %v3133
                %v3135 = vld [vmem:[%s2977 + $0x270] sm:%s2970]
                %3136 = vst [vmem:[%s2978 + $0x470] sm:%s2970] %v3135
                %v3137 = vld [vmem:[%s2977 + $0x278] sm:%s2970]
                %3138 = vst [vmem:[%s2978 + $0x478] sm:%s2970] %v3137
                %v3139 = vld [vmem:[%s2977 + $0x280] sm:%s2970]
                %3140 = vst [vmem:[%s2978 + $0x500] sm:%s2970] %v3139
                %v3141 = vld [vmem:[%s2977 + $0x288] sm:%s2970]
                %3142 = vst [vmem:[%s2978 + $0x508] sm:%s2970] %v3141
                %v3143 = vld [vmem:[%s2977 + $0x290] sm:%s2970]
                %3144 = vst [vmem:[%s2978 + $0x510] sm:%s2970] %v3143
                %v3145 = vld [vmem:[%s2977 + $0x298] sm:%s2970]
                %3146 = vst [vmem:[%s2978 + $0x518] sm:%s2970] %v3145
                %v3147 = vld [vmem:[%s2977 + $0x2a0] sm:%s2970]
                %3148 = vst [vmem:[%s2978 + $0x520] sm:%s2970] %v3147
                %v3149 = vld [vmem:[%s2977 + $0x2a8] sm:%s2970]
                %3150 = vst [vmem:[%s2978 + $0x528] sm:%s2970] %v3149
                %v3151 = vld [vmem:[%s2977 + $0x2b0] sm:%s2970]
                %3152 = vst [vmem:[%s2978 + $0x530] sm:%s2970] %v3151
                %v3153 = vld [vmem:[%s2977 + $0x2b8] sm:%s2970]
                %3154 = vst [vmem:[%s2978 + $0x538] sm:%s2970] %v3153
                %v3155 = vld [vmem:[%s2977 + $0x2c0] sm:%s2970]
                %3156 = vst [vmem:[%s2978 + $0x540] sm:%s2970] %v3155
                %v3157 = vld [vmem:[%s2977 + $0x2c8] sm:%s2970]
                %3158 = vst [vmem:[%s2978 + $0x548] sm:%s2970] %v3157
                %v3159 = vld [vmem:[%s2977 + $0x2d0] sm:%s2970]
                %3160 = vst [vmem:[%s2978 + $0x550] sm:%s2970] %v3159
                %v3161 = vld [vmem:[%s2977 + $0x2d8] sm:%s2970]
                %3162 = vst [vmem:[%s2978 + $0x558] sm:%s2970] %v3161
                %v3163 = vld [vmem:[%s2977 + $0x2e0] sm:%s2970]
                %3164 = vst [vmem:[%s2978 + $0x560] sm:%s2970] %v3163
                %v3165 = vld [vmem:[%s2977 + $0x2e8] sm:%s2970]
                %3166 = vst [vmem:[%s2978 + $0x568] sm:%s2970] %v3165
                %v3167 = vld [vmem:[%s2977 + $0x2f0] sm:%s2970]
                %3168 = vst [vmem:[%s2978 + $0x570] sm:%s2970] %v3167
                %v3169 = vld [vmem:[%s2977 + $0x2f8] sm:%s2970]
                %3170 = vst [vmem:[%s2978 + $0x578] sm:%s2970] %v3169
                %v3171 = vld [vmem:[%s2977 + $0x300] sm:%s2970]
                %3172 = vst [vmem:[%s2978 + $0x600] sm:%s2970] %v3171
                %v3173 = vld [vmem:[%s2977 + $0x308] sm:%s2970]
                %3174 = vst [vmem:[%s2978 + $0x608] sm:%s2970] %v3173
                %v3175 = vld [vmem:[%s2977 + $0x310] sm:%s2970]
                %3176 = vst [vmem:[%s2978 + $0x610] sm:%s2970] %v3175
                %v3177 = vld [vmem:[%s2977 + $0x318] sm:%s2970]
                %3178 = vst [vmem:[%s2978 + $0x618] sm:%s2970] %v3177
                %v3179 = vld [vmem:[%s2977 + $0x320] sm:%s2970]
                %3180 = vst [vmem:[%s2978 + $0x620] sm:%s2970] %v3179
                %v3181 = vld [vmem:[%s2977 + $0x328] sm:%s2970]
                %3182 = vst [vmem:[%s2978 + $0x628] sm:%s2970] %v3181
                %v3183 = vld [vmem:[%s2977 + $0x330] sm:%s2970]
                %3184 = vst [vmem:[%s2978 + $0x630] sm:%s2970] %v3183
                %v3185 = vld [vmem:[%s2977 + $0x338] sm:%s2970]
                %3186 = vst [vmem:[%s2978 + $0x638] sm:%s2970] %v3185
                %v3187 = vld [vmem:[%s2977 + $0x340] sm:%s2970]
                %3188 = vst [vmem:[%s2978 + $0x640] sm:%s2970] %v3187
                %v3189 = vld [vmem:[%s2977 + $0x348] sm:%s2970]
                %3190 = vst [vmem:[%s2978 + $0x648] sm:%s2970] %v3189
                %v3191 = vld [vmem:[%s2977 + $0x350] sm:%s2970]
                %3192 = vst [vmem:[%s2978 + $0x650] sm:%s2970] %v3191
                %v3193 = vld [vmem:[%s2977 + $0x358] sm:%s2970]
                %3194 = vst [vmem:[%s2978 + $0x658] sm:%s2970] %v3193
                %v3195 = vld [vmem:[%s2977 + $0x360] sm:%s2970]
                %3196 = vst [vmem:[%s2978 + $0x660] sm:%s2970] %v3195
                %v3197 = vld [vmem:[%s2977 + $0x368] sm:%s2970]
                %3198 = vst [vmem:[%s2978 + $0x668] sm:%s2970] %v3197
                %v3199 = vld [vmem:[%s2977 + $0x370] sm:%s2970]
                %3200 = vst [vmem:[%s2978 + $0x670] sm:%s2970] %v3199
                %v3201 = vld [vmem:[%s2977 + $0x378] sm:%s2970]
                %3202 = vst [vmem:[%s2978 + $0x678] sm:%s2970] %v3201
                %v3203 = vld [vmem:[%s2977 + $0x380] sm:%s2970]
                %3204 = vst [vmem:[%s2978 + $0x700] sm:%s2970] %v3203
                %v3205 = vld [vmem:[%s2977 + $0x388] sm:%s2970]
                %3206 = vst [vmem:[%s2978 + $0x708] sm:%s2970] %v3205
                %v3207 = vld [vmem:[%s2977 + $0x390] sm:%s2970]
                %3208 = vst [vmem:[%s2978 + $0x710] sm:%s2970] %v3207
                %v3209 = vld [vmem:[%s2977 + $0x398] sm:%s2970]
                %3210 = vst [vmem:[%s2978 + $0x718] sm:%s2970] %v3209
                %v3211 = vld [vmem:[%s2977 + $0x3a0] sm:%s2970]
                %3212 = vst [vmem:[%s2978 + $0x720] sm:%s2970] %v3211
                %v3213 = vld [vmem:[%s2977 + $0x3a8] sm:%s2970]
                %3214 = vst [vmem:[%s2978 + $0x728] sm:%s2970] %v3213
                %v3215 = vld [vmem:[%s2977 + $0x3b0] sm:%s2970]
                %3216 = vst [vmem:[%s2978 + $0x730] sm:%s2970] %v3215
                %v3217 = vld [vmem:[%s2977 + $0x3b8] sm:%s2970]
                %3218 = vst [vmem:[%s2978 + $0x738] sm:%s2970] %v3217
                %v3219 = vld [vmem:[%s2977 + $0x3c0] sm:%s2970]
                %3220 = vst [vmem:[%s2978 + $0x740] sm:%s2970] %v3219
                %v3221 = vld [vmem:[%s2977 + $0x3c8] sm:%s2970]
                %3222 = vst [vmem:[%s2978 + $0x748] sm:%s2970] %v3221
                %v3223 = vld [vmem:[%s2977 + $0x3d0] sm:%s2970]
                %3224 = vst [vmem:[%s2978 + $0x750] sm:%s2970] %v3223
                %v3225 = vld [vmem:[%s2977 + $0x3d8] sm:%s2970]
                %3226 = vst [vmem:[%s2978 + $0x758] sm:%s2970] %v3225
                %v3227 = vld [vmem:[%s2977 + $0x3e0] sm:%s2970]
                %3228 = vst [vmem:[%s2978 + $0x760] sm:%s2970] %v3227
                %v3229 = vld [vmem:[%s2977 + $0x3e8] sm:%s2970]
                %3230 = vst [vmem:[%s2978 + $0x768] sm:%s2970] %v3229
                %v3231 = vld [vmem:[%s2977 + $0x3f0] sm:%s2970]
                %3232 = vst [vmem:[%s2978 + $0x770] sm:%s2970] %v3231
                %v3233 = vld [vmem:[%s2977 + $0x3f8] sm:%s2970]
                %3234 = vst [vmem:[%s2978 + $0x778] sm:%s2970] %v3233
              $region102: #{gcn_ffn.1} parent=96 // loop_footer
                %s2976 = sadd.s32 1, %s2972
              $region103: #{gcn_ffn.1} parent=96 // loop_footer_branch
                %2971 = sbr.rel target = $region99
              $region104: #{gcn_ffn.1} parent=96 // loop_exit
                _
            $region97: #{gcn_ffn.1} parent=88 // pred_fallthru
              _
          $region89: #{gcn_ffn.1} parent=84 // pred_fallthru
            _
          %3503 = vnop
        $region85: #{gcn_ffn.1} parent=69 // pred_fallthru
          _
      $region70: #{gcn_ffn.1} parent=5 // pred_fallthru
        _
      %p3504 = scmp.le.s32.totalorder 2, %s10
      // Predicated region
      $region120: #{gcn_ffn.1} parent=5 // pred_check
        %p3505 = pneg %p3504
      $region121: #{gcn_ffn.1} parent=5 // pred_check_branch
        %3507 = sbr.rel (%p3505) target = $region123
      $region122: #{gcn_ffn.1} parent=5 // pred_region
        %s3508 = ssub.s32 %s10, 2
        // Predicated region
        $region124: #{gcn_ffn.1} parent=122 // pred_check
          %p3509 = pneg %p144
        $region125: #{gcn_ffn.1} parent=122 // pred_check_branch
          %3511 = sbr.rel (%p3509) target = $region127
        $region126: #{gcn_ffn.1} parent=122 // pred_region
          %s3512 = sand.u32 %s129, 1
          %s3513 = sand.u32 %s129, 1
          %s3514 = smul.addr %s3513, 1024
          %s3515 = scalar_lea.vmem [#allocation4], %s3514
        $region127: #{gcn_ffn.1} parent=122 // pred_fallthru
          _
      $region123: #{gcn_ffn.1} parent=5 // pred_fallthru
        _
    $region6: #{gcn_ffn.1} parent=1 // loop_footer
      %s14 = sadd.s32 1, %s10
    $region7: #{gcn_ffn.1} parent=1 // loop_footer_branch
      %9 = sbr.rel target = $region3
    $region8: #{gcn_ffn.1} parent=1 // loop_exit
      _

</llo_original>
